<compile_context>
chip_gen: v5e
topology: v5e:2x2
jax: 0.10.0
libtpu: 0.0.40
codegen_flags: <defaults>
</compile_context>

<pallas_src>
import jax
import jax.numpy as jnp
from jax import lax
from jax.experimental import pallas as pl
from jax.experimental.pallas import tpu as pltpu


# ----------------------------------------------------------------------------
# EEGNet-ish hyper-parameters (synthetic stand-in, see TODO above)
# ----------------------------------------------------------------------------
E = 19            # EEG electrodes
F1 = 8            # temporal filters
DEPTH = 2         # depth multiplier
F2 = F1 * DEPTH   # = 16 channels after the depthwise stage
K1 = 31           # temporal kernel length
K2 = 15           # separable (temporal) kernel length
NUM_CLASSES = 3


def _round_up(x, m):
    return (x + m - 1) // m * m


# ----------------------------------------------------------------------------
# Pallas kernel 1: fused EEGNet feature extractor + FC head.
# One grid step processes a block of `b` samples; all activations are
# (rows, time*b) with lane index = t*b + sample  (time-major lanes).
# ----------------------------------------------------------------------------
def _make_feature_kernel(e_pad, t, b, k1, k2, f2, t4, t32, nclass):
    p2 = k2 // 2
    tb = t * b
    t4b = t4 * b

    def elu(v):
        # safe ELU: exp only sees non-positive arguments
        return jnp.where(v > 0.0, v, jnp.exp(jnp.minimum(v, 0.0)) - 1.0)

    def kernel(x_ref, wsp_ref, w1c_ref, p4_ref, wd3_ref, w4_ref, p8_ref,
               wfc_ref, fcb_ref, feat_ref, logit_ref):
        # ---- stage 1: depthwise spatial mix (rank-1 factor of conv1 x conv2,
        #      BN folded), one lane-dense MXU matmul (RHS has (t+k1-1)*b lanes).
        x = x_ref[0]                                         # (e_pad, (t+k1-1)*b) bf16
        u = jnp.dot(wsp_ref[...], x,
                    preferred_element_type=jnp.float32)      # (f2, (t+k1-1)*b) f32

        # ---- stage 2: depthwise temporal conv (k1 taps) on the VPU.
        #      A shift by k taps is a uniform lane shift of k*b (static slices
        #      of a small in-register value; no im2col materialization).
        w1c = w1c_ref[...]                                   # (f2, k1) f32
        y = jnp.zeros((f2, tb), jnp.float32)
        for k in range(k1):
            y = y + w1c[:, k:k + 1] * u[:, k * b:k * b + tb]
        y = elu(y)

        # ---- stage 3: avg-pool /4 over time (pooling-matrix matmul on MXU)
        z = jnp.dot(y.astype(jnp.bfloat16), p4_ref[...],
                    preferred_element_type=jnp.float32)      # (f2, t4*b)

        # ---- stage 4: separable conv = depthwise temporal (k2 VPU taps,
        #      "same" padding) + pointwise channel mix (MXU), BN folded.
        zpad = jnp.concatenate(
            [jnp.zeros((f2, p2 * b), jnp.float32), z,
             jnp.zeros((f2, p2 * b), jnp.float32)], axis=1)  # (f2, (t4+k2-1)*b)
        wd3 = wd3_ref[...]                                   # (f2, k2) f32
        d = jnp.zeros((f2, t4b), jnp.float32)
        for k in range(k2):
            d = d + wd3[:, k:k + 1] * zpad[:, k * b:k * b + t4b]
        zc = jnp.dot(w4_ref[...], d.astype(jnp.bfloat16),
                     preferred_element_type=jnp.float32)     # (f2, t4*b)
        zc = elu(zc)

        # ---- stage 5: avg-pool /8 over time
        f = jnp.dot(zc.astype(jnp.bfloat16), p8_ref[...],
                    preferred_element_type=jnp.float32)      # (f2, t32*b)

        # ---- stage 6: flatten (t32-major rows) + ONE FC matmul for the block
        fcol = jnp.concatenate(
            [f[:, j * b:(j + 1) * b] for j in range(t32)], axis=0)  # (t32*f2, b)
        feat_ref[0] = fcol.astype(feat_ref.dtype)
        logits = jnp.dot(wfc_ref[...], fcol,
                         preferred_element_type=jnp.float32) + fcb_ref[...]
        logit_ref[0] = logits.astype(logit_ref.dtype)

    return kernel


def eegnet_classifier(params, x):
    """x: (N, 1, E, T) NCHW -> (features (N, 32), logits (N, num_classes))."""
    n = x.shape[0]
    t = x.shape[3]
    assert t % 32 == 0
    t4, t32 = t // 4, t // 32
    assert F2 * t32 == 32, "classifier head expects 32-d features (T == 64)"
    e_pad = _round_up(E, 8)
    p1 = K1 // 2
    tp = t + K1 - 1

    num_blocks = 2 if n % 2 == 0 else 1      # 2-way parallel grid (v7x: 2 TCs)
    b = n // num_blocks

    # Pad + relayout ONCE in XLA: (n,1,E,T) -> (blocks, e_pad, tp*b) bf16,
    # time-major lanes (lane = t'*b + local_sample).  Cast to bf16 here so the
    # kernel never repacks the large input.
    xp = jnp.pad(x[:, 0].astype(jnp.float32),
                 ((0, 0), (0, e_pad - E), (p1, p1)))         # (n, e_pad, tp)
    xb = xp.reshape(num_blocks, b, e_pad, tp)
    xb = jnp.transpose(xb, (0, 2, 3, 1)).reshape(num_blocks, e_pad, tp * b)
    xb = xb.astype(jnp.bfloat16)

    # Pooling matrices in the (time, sample) lane layout: kron(P, I_b).
    # Values (0.25, 0.125) are exact in bf16.
    eye_b = jnp.eye(b, dtype=jnp.float32)
    p4 = (jnp.arange(t)[:, None] // 4 ==
          jnp.arange(t4)[None, :]).astype(jnp.float32) / 4.0
    p8 = (jnp.arange(t4)[:, None] // 8 ==
          jnp.arange(t32)[None, :]).astype(jnp.float32) / 8.0
    p4b = jnp.kron(p4, eye_b).astype(jnp.bfloat16)           # (t*b, t4*b)
    p8b = jnp.kron(p8, eye_b).astype(jnp.bfloat16)           # (t4*b, t32*b)

    kernel = _make_feature_kernel(e_pad, t, b, K1, K2, F2, t4, t32, NUM_CLASSES)
    feat3, logit3 = pl.pallas_call(
        kernel,
        out_shape=(
            jax.ShapeDtypeStruct((num_blocks, F2 * t32, b), jnp.float32),
            jax.ShapeDtypeStruct((num_blocks, NUM_CLASSES, b), jnp.float32),
        ),
        grid=(num_blocks,),
        in_specs=[
            pl.BlockSpec((1, e_pad, tp * b), lambda g: (g, 0, 0)),   # input block
            pl.BlockSpec((F2, e_pad), lambda g: (0, 0)),             # spatial mix
            pl.BlockSpec((F2, K1), lambda g: (0, 0)),                # temporal taps
            pl.BlockSpec((t * b, t4 * b), lambda g: (0, 0)),         # pool /4
            pl.BlockSpec((F2, K2), lambda g: (0, 0)),                # sep. taps
            pl.BlockSpec((F2, F2), lambda g: (0, 0)),                # pointwise
            pl.BlockSpec((t4 * b, t32 * b), lambda g: (0, 0)),       # pool /8
            pl.BlockSpec((NUM_CLASSES, F2 * t32), lambda g: (0, 0)), # FC weight
            pl.BlockSpec((NUM_CLASSES, 1), lambda g: (0, 0)),        # FC bias
        ],
        out_specs=(
            pl.BlockSpec((1, F2 * t32, b), lambda g: (g, 0, 0)),
            pl.BlockSpec((1, NUM_CLASSES, b), lambda g: (g, 0, 0)),
        ),
        compiler_params=pltpu.CompilerParams(
            dimension_semantics=("parallel",)),
    )(xb, params["wsp"], params["w1c"], p4b, params["wd3"], params["w4"],
      p8b, params["wfc"], params["fcb"])

    # (blocks, 32, b) with rows t32-major  ->  (n, 32) channel-major flatten
    feat = jnp.transpose(feat3.reshape(num_blocks, t32, F2, b),
                         (0, 3, 2, 1)).reshape(n, F2 * t32)
    logits = jnp.transpose(logit3, (0, 2, 1)).reshape(n, NUM_CLASSES)
    return feat, logits


# ----------------------------------------------------------------------------
# Pallas kernel 2: LMMD loss (Gram matrix on the MXU, row norms precomputed,
# signed weight matrix, multi-bandwidth Gaussian via repeated squaring).
# ----------------------------------------------------------------------------
def _make_lmmd_kernel(kernel_mul, kernel_num, n):
    def kernel(total_ref, rcol_ref, rrow_ref, w_ref, loss_ref):
        total = total_ref[...]                                   # (n, d) f32
        gram = lax.dot_general(total, total, (((1,), (1,)), ((), ())),
                               preferred_element_type=jnp.float32)  # (n, n)
        l2 = jnp.maximum(rcol_ref[...] + rrow_ref[...] - 2.0 * gram, 0.0)

        bandwidth = jnp.sum(l2) / float(n * n - n)
        bandwidth = bandwidth / (kernel_mul ** (kernel_num // 2))

        if kernel_mul == 2.0:
            # one exp at the widest bandwidth, the rest via repeated squaring
            e = jnp.exp(-l2 / (bandwidth * (2.0 ** (kernel_num - 1))))
            kmat = e
            cur = e
            for _ in range(kernel_num - 1):
                cur = cur * cur
                kmat = kmat + cur
        else:
            kmat = jnp.zeros_like(l2)
            for i in range(kernel_num):
                kmat = kmat + jnp.exp(-l2 / (bandwidth * (kernel_mul ** i)))

        loss = jnp.sum(w_ref[...] * kmat)
        loss = jnp.where(jnp.isnan(loss), 0.0, loss)  # zero-bandwidth guard
        loss_ref[...] = jnp.reshape(loss, (1, 1))

    return kernel


def pallas_lmmd(source_feat, target_feat, w_ss, w_tt, w_st,
                kernel_mul=2.0, kernel_num=5):
    total = jnp.concatenate([source_feat, target_feat],
                            axis=0).astype(jnp.float32)
    n2, d = total.shape
    rown = jnp.sum(total * total, axis=1)
    rcol = rown[:, None]
    rrow = rown[None, :]
    # signed weights: sum(W*K) == sum(wss*Kss) + sum(wtt*Ktt) - 2*sum(wst*Kst)
    w_signed = jnp.concatenate(
        [jnp.concatenate([w_ss, -w_st], axis=1),
         jnp.concatenate([-w_st.T, w_tt], axis=1)], axis=0).astype(jnp.float32)

    loss = pl.pallas_call(
        _make_lmmd_kernel(kernel_mul, kernel_num, n2),
        out_shape=jax.ShapeDtypeStruct((1, 1), jnp.float32),
        grid=(1,),
        in_specs=[
            pl.BlockSpec((n2, d), lambda i: (0, 0)),
            pl.BlockSpec((n2, 1), lambda i: (0, 0)),
            pl.BlockSpec((1, n2), lambda i: (0, 0)),
            pl.BlockSpec((n2, n2), lambda i: (0, 0)),
        ],
        out_specs=pl.BlockSpec((1, 1), lambda i: (0, 0)),
        cost_estimate=pl.CostEstimate(
            flops=2 * n2 * n2 * d + 10 * n2 * n2,
            transcendentals=n2 * n2,
            bytes_accessed=4 * (n2 * d + 2 * n2 * n2)),
    )(total, rcol, rrow, w_signed)
    return loss[0, 0]


# ----------------------------------------------------------------------------
# LMMD class-weight bookkeeping (tiny (B, C) shapes, plain JAX like the
# original numpy code).
# ----------------------------------------------------------------------------
def cal_weight(s_label, t_probs, class_num):
    s_vec = jax.nn.one_hot(s_label, class_num, dtype=jnp.float32)   # (B, C)
    s_sum = jnp.sum(s_vec, axis=0, keepdims=True)
    s_sum = jnp.where(s_sum == 0, 100.0, s_sum)
    s_vec = s_vec / s_sum

    t_sca = jnp.argmax(t_probs, axis=1)
    t_vec = t_probs.astype(jnp.float32)
    t_sum = jnp.sum(t_vec, axis=0, keepdims=True)
    t_sum = jnp.where(t_sum == 0, 100.0, t_sum)
    t_vec = t_vec / t_sum

    s_present = jnp.sum(jax.nn.one_hot(s_label, class_num), axis=0) > 0
    t_present = jnp.sum(jax.nn.one_hot(t_sca, class_num), axis=0) > 0
    common = jnp.logical_and(s_present, t_present)
    mask = common.astype(jnp.float32)[None, :]
    s_vec = s_vec * mask
    t_vec = t_vec * mask

    w_ss = s_vec @ s_vec.T
    w_tt = t_vec @ t_vec.T
    w_st = s_vec @ t_vec.T

    length = jnp.sum(common.astype(jnp.float32))
    scale = jnp.where(length > 0, 1.0 / jnp.maximum(length, 1.0), 0.0)
    return w_ss * scale, w_tt * scale, w_st * scale


# ----------------------------------------------------------------------------
# Parameter init (deterministic, synthetic EEGNet; BatchNorm(mean=0, var=1)
# folded as a scale).  conv1(x)conv2 is stored as its rank-1 factors
# (per-channel spatial mix + per-channel temporal taps).
# ----------------------------------------------------------------------------
def init_params(key, t, e=E, f1=F1, depth=DEPTH, k1=K1, k2=K2,
                num_classes=NUM_CLASSES):
    f2 = f1 * depth
    t32 = t // 32
    e_pad = _round_up(e, 8)
    keys = jax.random.split(key, 6)
    bn = 1.0 / jnp.sqrt(1.0 + 1e-5)

    w1 = jax.random.normal(keys[0], (k1, f1), jnp.float32) * 0.1       # temporal
    wdw = jax.random.normal(keys[1], (f1, e, depth), jnp.float32) * 0.1  # depthwise spatial
    wd3 = jax.random.normal(keys[2], (f2, k2), jnp.float32) * 0.1      # depthwise temporal
    w4 = jax.random.normal(keys[3], (f2, f2), jnp.float32) * 0.1       # pointwise
    fc_w = jax.random.normal(keys[4], (f2 * t32, num_classes), jnp.float32) * 0.1
    fc_b = jnp.zeros((num_classes,), jnp.float32)

    f_of_c = jnp.arange(f2) // depth
    d_of_c = jnp.arange(f2) % depth
    # rank-1 factors of conv1(x)conv2 with BN1 folded into the spatial factor
    wsp = wdw[f_of_c, :, d_of_c] * bn                       # (f2, e)
    wsp = jnp.pad(wsp, ((0, 0), (0, e_pad - e)))
    w1c = w1[:, f_of_c].T                                   # (f2, k1)

    w4f = w4 * bn                                           # BN2 folded

    # classifier weight, columns permuted to the kernel's t32-major flatten:
    # kernel row j*f2 + c  <->  torch flatten index c*t32 + j
    fc2 = fc_w.reshape(f2, t32, num_classes)                # [c, j, class]
    wfc = jnp.transpose(fc2, (2, 1, 0)).reshape(num_classes, t32 * f2)

    return dict(
        wsp=wsp.astype(jnp.bfloat16),
        w1c=w1c.astype(jnp.float32),
        wd3=wd3.astype(jnp.float32),
        w4=w4f.astype(jnp.bfloat16),
        wfc=wfc.astype(jnp.float32),
        fcb=fc_b.reshape(num_classes, 1).astype(jnp.float32),
    )


# ----------------------------------------------------------------------------
# DSAN forward: (s_pred, loss_lmmd)
# ----------------------------------------------------------------------------
def dsan_forward(params, source, target, s_label, num_classes=NUM_CLASSES):
    n = source.shape[0]
    # one fused pallas_call: grid step 0 = source batch, step 1 = target batch
    x = jnp.concatenate([source, target], axis=0)
    feat, logits = eegnet_classifier(params, x)

    f_s, f_t = feat[:n], feat[n:]
    s_pred = logits[:n]
    t_probs = jax.nn.softmax(logits[n:], axis=1)

    w_ss, w_tt, w_st = cal_weight(s_label, t_probs, num_classes)
    loss_lmmd = pallas_lmmd(f_s, f_t, w_ss, w_tt, w_st)
    return s_pred, loss_lmmd


if __name__ == "__main__":
    key = jax.random.PRNGKey(0)
    k_src, k_tgt, k_lab = jax.random.split(key, 3)

    N, T = 8, 64                                  # batch, time samples
    source = jax.random.normal(k_src, (N, 1, E, T), jnp.float32)
    target = jax.random.normal(k_tgt, (N, 1, E, T), jnp.float32)
    s_label = jax.random.randint(k_lab, (N,), 0, NUM_CLASSES)

    params = init_params(jax.random.PRNGKey(42), t=T)

    fwd = jax.jit(dsan_forward)
    s_pred, loss_lmmd = fwd(params, source, target, s_label)
    jax.block_until_ready((s_pred, loss_lmmd))

    assert s_pred.shape == (N, NUM_CLASSES)
    assert loss_lmmd.shape == ()
    assert bool(jnp.all(jnp.isfinite(s_pred)))
    assert bool(jnp.isfinite(loss_lmmd))
    print("KERNEL_OK")
</pallas_src>

<mosaic_0001>
module attributes {stable_mosaic.version = 11 : i64} {
  func.func @kernel(%arg0: i32, %arg1: memref<1x24x752xbf16, #tpu.memory_space<vmem>>, %arg2: memref<16x24xbf16, #tpu.memory_space<vmem>>, %arg3: memref<16x31xf32, #tpu.memory_space<vmem>>, %arg4: memref<512x128xbf16, #tpu.memory_space<vmem>>, %arg5: memref<16x15xf32, #tpu.memory_space<vmem>>, %arg6: memref<16x16xbf16, #tpu.memory_space<vmem>>, %arg7: memref<128x16xbf16, #tpu.memory_space<vmem>>, %arg8: memref<3x32xf32, #tpu.memory_space<vmem>>, %arg9: memref<3x1xf32, #tpu.memory_space<vmem>>, %arg10: memref<1x32x8xf32, #tpu.memory_space<vmem>>, %arg11: memref<1x3x8xf32, #tpu.memory_space<vmem>>) attributes {dimension_semantics = [#tpu.dimension_semantics<parallel>], iteration_bounds = array<i64: 2>, scalar_prefetch = 0 : i64, scratch_operands = 0 : i64, tpu.core_type = #tpu.core_type<tc>, window_params = [{transform_indices = @transform_0, window_bounds = array<i64: 1, 24, 752>}, {pipeline_mode = #tpu.pipeline_mode<synchronous>, transform_indices = @transform_1, window_bounds = array<i64: 16, 24>}, {pipeline_mode = #tpu.pipeline_mode<synchronous>, transform_indices = @transform_2, window_bounds = array<i64: 16, 31>}, {pipeline_mode = #tpu.pipeline_mode<synchronous>, transform_indices = @transform_3, window_bounds = array<i64: 512, 128>}, {pipeline_mode = #tpu.pipeline_mode<synchronous>, transform_indices = @transform_4, window_bounds = array<i64: 16, 15>}, {pipeline_mode = #tpu.pipeline_mode<synchronous>, transform_indices = @transform_5, window_bounds = array<i64: 16, 16>}, {pipeline_mode = #tpu.pipeline_mode<synchronous>, transform_indices = @transform_6, window_bounds = array<i64: 128, 16>}, {pipeline_mode = #tpu.pipeline_mode<synchronous>, transform_indices = @transform_7, window_bounds = array<i64: 3, 32>}, {pipeline_mode = #tpu.pipeline_mode<synchronous>, transform_indices = @transform_8, window_bounds = array<i64: 3, 1>}, {transform_indices = @transform_9, window_bounds = array<i64: 1, 32, 8>}, {transform_indices = @transform_10, window_bounds = array<i64: 1, 3, 8>}]} {
    %c0 = arith.constant 0 : index
    %c0_0 = arith.constant 0 : index
    %c0_1 = arith.constant 0 : index
    %0 = vector.load %arg1[%c0, %c0_0, %c0_1] : memref<1x24x752xbf16, #tpu.memory_space<vmem>>, vector<1x24x752xbf16>
    %1 = vector.shape_cast %0 : vector<1x24x752xbf16> to vector<24x752xbf16>
    %c0_2 = arith.constant 0 : index
    %c0_3 = arith.constant 0 : index
    %2 = vector.load %arg2[%c0_2, %c0_3] : memref<16x24xbf16, #tpu.memory_space<vmem>>, vector<16x24xbf16>
    %cst = arith.constant dense<0.000000e+00> : vector<16x752xf32>
    %3 = tpu.matmul %2, %1, %cst {dimension_numbers = #tpu.dot_dimension_numbers<[1], [0], [0], [1], [0, 0, 1, 1], [], []>} : vector<16x24xbf16>, vector<24x752xbf16>, vector<16x752xf32> -> vector<16x752xf32>
    %c0_4 = arith.constant 0 : index
    %c0_5 = arith.constant 0 : index
    %4 = vector.load %arg3[%c0_4, %c0_5] : memref<16x31xf32, #tpu.memory_space<vmem>>, vector<16x31xf32>
    %cst_6 = arith.constant 0.000000e+00 : f32
    %5 = vector.broadcast %cst_6 : f32 to vector<16x512xf32>
    %6 = vector.extract_strided_slice %4 {offsets = [0, 0], sizes = [16, 1], strides = [1, 1]} : vector<16x31xf32> to vector<16x1xf32>
    %7 = vector.extract_strided_slice %3 {offsets = [0, 0], sizes = [16, 512], strides = [1, 1]} : vector<16x752xf32> to vector<16x512xf32>
    %8 = vector.broadcast %6 : vector<16x1xf32> to vector<16x512xf32>
    %9 = arith.mulf %8, %7 : vector<16x512xf32>
    %10 = arith.addf %5, %9 : vector<16x512xf32>
    %11 = vector.extract_strided_slice %4 {offsets = [0, 1], sizes = [16, 1], strides = [1, 1]} : vector<16x31xf32> to vector<16x1xf32>
    %12 = vector.extract_strided_slice %3 {offsets = [0, 8], sizes = [16, 512], strides = [1, 1]} : vector<16x752xf32> to vector<16x512xf32>
    %13 = vector.broadcast %11 : vector<16x1xf32> to vector<16x512xf32>
    %14 = arith.mulf %13, %12 : vector<16x512xf32>
    %15 = arith.addf %10, %14 : vector<16x512xf32>
    %16 = vector.extract_strided_slice %4 {offsets = [0, 2], sizes = [16, 1], strides = [1, 1]} : vector<16x31xf32> to vector<16x1xf32>
    %17 = vector.extract_strided_slice %3 {offsets = [0, 16], sizes = [16, 512], strides = [1, 1]} : vector<16x752xf32> to vector<16x512xf32>
    %18 = vector.broadcast %16 : vector<16x1xf32> to vector<16x512xf32>
    %19 = arith.mulf %18, %17 : vector<16x512xf32>
    %20 = arith.addf %15, %19 : vector<16x512xf32>
    %21 = vector.extract_strided_slice %4 {offsets = [0, 3], sizes = [16, 1], strides = [1, 1]} : vector<16x31xf32> to vector<16x1xf32>
    %22 = vector.extract_strided_slice %3 {offsets = [0, 24], sizes = [16, 512], strides = [1, 1]} : vector<16x752xf32> to vector<16x512xf32>
    %23 = vector.broadcast %21 : vector<16x1xf32> to vector<16x512xf32>
    %24 = arith.mulf %23, %22 : vector<16x512xf32>
    %25 = arith.addf %20, %24 : vector<16x512xf32>
    %26 = vector.extract_strided_slice %4 {offsets = [0, 4], sizes = [16, 1], strides = [1, 1]} : vector<16x31xf32> to vector<16x1xf32>
    %27 = vector.extract_strided_slice %3 {offsets = [0, 32], sizes = [16, 512], strides = [1, 1]} : vector<16x752xf32> to vector<16x512xf32>
    %28 = vector.broadcast %26 : vector<16x1xf32> to vector<16x512xf32>
    %29 = arith.mulf %28, %27 : vector<16x512xf32>
    %30 = arith.addf %25, %29 : vector<16x512xf32>
    %31 = vector.extract_strided_slice %4 {offsets = [0, 5], sizes = [16, 1], strides = [1, 1]} : vector<16x31xf32> to vector<16x1xf32>
    %32 = vector.extract_strided_slice %3 {offsets = [0, 40], sizes = [16, 512], strides = [1, 1]} : vector<16x752xf32> to vector<16x512xf32>
    %33 = vector.broadcast %31 : vector<16x1xf32> to vector<16x512xf32>
    %34 = arith.mulf %33, %32 : vector<16x512xf32>
    %35 = arith.addf %30, %34 : vector<16x512xf32>
    %36 = vector.extract_strided_slice %4 {offsets = [0, 6], sizes = [16, 1], strides = [1, 1]} : vector<16x31xf32> to vector<16x1xf32>
    %37 = vector.extract_strided_slice %3 {offsets = [0, 48], sizes = [16, 512], strides = [1, 1]} : vector<16x752xf32> to vector<16x512xf32>
    %38 = vector.broadcast %36 : vector<16x1xf32> to vector<16x512xf32>
    %39 = arith.mulf %38, %37 : vector<16x512xf32>
    %40 = arith.addf %35, %39 : vector<16x512xf32>
    %41 = vector.extract_strided_slice %4 {offsets = [0, 7], sizes = [16, 1], strides = [1, 1]} : vector<16x31xf32> to vector<16x1xf32>
    %42 = vector.extract_strided_slice %3 {offsets = [0, 56], sizes = [16, 512], strides = [1, 1]} : vector<16x752xf32> to vector<16x512xf32>
    %43 = vector.broadcast %41 : vector<16x1xf32> to vector<16x512xf32>
    %44 = arith.mulf %43, %42 : vector<16x512xf32>
    %45 = arith.addf %40, %44 : vector<16x512xf32>
    %46 = vector.extract_strided_slice %4 {offsets = [0, 8], sizes = [16, 1], strides = [1, 1]} : vector<16x31xf32> to vector<16x1xf32>
    %47 = vector.extract_strided_slice %3 {offsets = [0, 64], sizes = [16, 512], strides = [1, 1]} : vector<16x752xf32> to vector<16x512xf32>
    %48 = vector.broadcast %46 : vector<16x1xf32> to vector<16x512xf32>
    %49 = arith.mulf %48, %47 : vector<16x512xf32>
    %50 = arith.addf %45, %49 : vector<16x512xf32>
    %51 = vector.extract_strided_slice %4 {offsets = [0, 9], sizes = [16, 1], strides = [1, 1]} : vector<16x31xf32> to vector<16x1xf32>
    %52 = vector.extract_strided_slice %3 {offsets = [0, 72], sizes = [16, 512], strides = [1, 1]} : vector<16x752xf32> to vector<16x512xf32>
    %53 = vector.broadcast %51 : vector<16x1xf32> to vector<16x512xf32>
    %54 = arith.mulf %53, %52 : vector<16x512xf32>
    %55 = arith.addf %50, %54 : vector<16x512xf32>
    %56 = vector.extract_strided_slice %4 {offsets = [0, 10], sizes = [16, 1], strides = [1, 1]} : vector<16x31xf32> to vector<16x1xf32>
    %57 = vector.extract_strided_slice %3 {offsets = [0, 80], sizes = [16, 512], strides = [1, 1]} : vector<16x752xf32> to vector<16x512xf32>
    %58 = vector.broadcast %56 : vector<16x1xf32> to vector<16x512xf32>
    %59 = arith.mulf %58, %57 : vector<16x512xf32>
    %60 = arith.addf %55, %59 : vector<16x512xf32>
    %61 = vector.extract_strided_slice %4 {offsets = [0, 11], sizes = [16, 1], strides = [1, 1]} : vector<16x31xf32> to vector<16x1xf32>
    %62 = vector.extract_strided_slice %3 {offsets = [0, 88], sizes = [16, 512], strides = [1, 1]} : vector<16x752xf32> to vector<16x512xf32>
    %63 = vector.broadcast %61 : vector<16x1xf32> to vector<16x512xf32>
    %64 = arith.mulf %63, %62 : vector<16x512xf32>
    %65 = arith.addf %60, %64 : vector<16x512xf32>
    %66 = vector.extract_strided_slice %4 {offsets = [0, 12], sizes = [16, 1], strides = [1, 1]} : vector<16x31xf32> to vector<16x1xf32>
    %67 = vector.extract_strided_slice %3 {offsets = [0, 96], sizes = [16, 512], strides = [1, 1]} : vector<16x752xf32> to vector<16x512xf32>
    %68 = vector.broadcast %66 : vector<16x1xf32> to vector<16x512xf32>
    %69 = arith.mulf %68, %67 : vector<16x512xf32>
    %70 = arith.addf %65, %69 : vector<16x512xf32>
    %71 = vector.extract_strided_slice %4 {offsets = [0, 13], sizes = [16, 1], strides = [1, 1]} : vector<16x31xf32> to vector<16x1xf32>
    %72 = vector.extract_strided_slice %3 {offsets = [0, 104], sizes = [16, 512], strides = [1, 1]} : vector<16x752xf32> to vector<16x512xf32>
    %73 = vector.broadcast %71 : vector<16x1xf32> to vector<16x512xf32>
    %74 = arith.mulf %73, %72 : vector<16x512xf32>
    %75 = arith.addf %70, %74 : vector<16x512xf32>
    %76 = vector.extract_strided_slice %4 {offsets = [0, 14], sizes = [16, 1], strides = [1, 1]} : vector<16x31xf32> to vector<16x1xf32>
    %77 = vector.extract_strided_slice %3 {offsets = [0, 112], sizes = [16, 512], strides = [1, 1]} : vector<16x752xf32> to vector<16x512xf32>
    %78 = vector.broadcast %76 : vector<16x1xf32> to vector<16x512xf32>
    %79 = arith.mulf %78, %77 : vector<16x512xf32>
    %80 = arith.addf %75, %79 : vector<16x512xf32>
    %81 = vector.extract_strided_slice %4 {offsets = [0, 15], sizes = [16, 1], strides = [1, 1]} : vector<16x31xf32> to vector<16x1xf32>
    %82 = vector.extract_strided_slice %3 {offsets = [0, 120], sizes = [16, 512], strides = [1, 1]} : vector<16x752xf32> to vector<16x512xf32>
    %83 = vector.broadcast %81 : vector<16x1xf32> to vector<16x512xf32>
    %84 = arith.mulf %83, %82 : vector<16x512xf32>
    %85 = arith.addf %80, %84 : vector<16x512xf32>
    %86 = vector.extract_strided_slice %4 {offsets = [0, 16], sizes = [16, 1], strides = [1, 1]} : vector<16x31xf32> to vector<16x1xf32>
    %87 = vector.extract_strided_slice %3 {offsets = [0, 128], sizes = [16, 512], strides = [1, 1]} : vector<16x752xf32> to vector<16x512xf32>
    %88 = vector.broadcast %86 : vector<16x1xf32> to vector<16x512xf32>
    %89 = arith.mulf %88, %87 : vector<16x512xf32>
    %90 = arith.addf %85, %89 : vector<16x512xf32>
    %91 = vector.extract_strided_slice %4 {offsets = [0, 17], sizes = [16, 1], strides = [1, 1]} : vector<16x31xf32> to vector<16x1xf32>
    %92 = vector.extract_strided_slice %3 {offsets = [0, 136], sizes = [16, 512], strides = [1, 1]} : vector<16x752xf32> to vector<16x512xf32>
    %93 = vector.broadcast %91 : vector<16x1xf32> to vector<16x512xf32>
    %94 = arith.mulf %93, %92 : vector<16x512xf32>
    %95 = arith.addf %90, %94 : vector<16x512xf32>
    %96 = vector.extract_strided_slice %4 {offsets = [0, 18], sizes = [16, 1], strides = [1, 1]} : vector<16x31xf32> to vector<16x1xf32>
    %97 = vector.extract_strided_slice %3 {offsets = [0, 144], sizes = [16, 512], strides = [1, 1]} : vector<16x752xf32> to vector<16x512xf32>
    %98 = vector.broadcast %96 : vector<16x1xf32> to vector<16x512xf32>
    %99 = arith.mulf %98, %97 : vector<16x512xf32>
    %100 = arith.addf %95, %99 : vector<16x512xf32>
    %101 = vector.extract_strided_slice %4 {offsets = [0, 19], sizes = [16, 1], strides = [1, 1]} : vector<16x31xf32> to vector<16x1xf32>
    %102 = vector.extract_strided_slice %3 {offsets = [0, 152], sizes = [16, 512], strides = [1, 1]} : vector<16x752xf32> to vector<16x512xf32>
    %103 = vector.broadcast %101 : vector<16x1xf32> to vector<16x512xf32>
    %104 = arith.mulf %103, %102 : vector<16x512xf32>
    %105 = arith.addf %100, %104 : vector<16x512xf32>
    %106 = vector.extract_strided_slice %4 {offsets = [0, 20], sizes = [16, 1], strides = [1, 1]} : vector<16x31xf32> to vector<16x1xf32>
    %107 = vector.extract_strided_slice %3 {offsets = [0, 160], sizes = [16, 512], strides = [1, 1]} : vector<16x752xf32> to vector<16x512xf32>
    %108 = vector.broadcast %106 : vector<16x1xf32> to vector<16x512xf32>
    %109 = arith.mulf %108, %107 : vector<16x512xf32>
    %110 = arith.addf %105, %109 : vector<16x512xf32>
    %111 = vector.extract_strided_slice %4 {offsets = [0, 21], sizes = [16, 1], strides = [1, 1]} : vector<16x31xf32> to vector<16x1xf32>
    %112 = vector.extract_strided_slice %3 {offsets = [0, 168], sizes = [16, 512], strides = [1, 1]} : vector<16x752xf32> to vector<16x512xf32>
    %113 = vector.broadcast %111 : vector<16x1xf32> to vector<16x512xf32>
    %114 = arith.mulf %113, %112 : vector<16x512xf32>
    %115 = arith.addf %110, %114 : vector<16x512xf32>
    %116 = vector.extract_strided_slice %4 {offsets = [0, 22], sizes = [16, 1], strides = [1, 1]} : vector<16x31xf32> to vector<16x1xf32>
    %117 = vector.extract_strided_slice %3 {offsets = [0, 176], sizes = [16, 512], strides = [1, 1]} : vector<16x752xf32> to vector<16x512xf32>
    %118 = vector.broadcast %116 : vector<16x1xf32> to vector<16x512xf32>
    %119 = arith.mulf %118, %117 : vector<16x512xf32>
    %120 = arith.addf %115, %119 : vector<16x512xf32>
    %121 = vector.extract_strided_slice %4 {offsets = [0, 23], sizes = [16, 1], strides = [1, 1]} : vector<16x31xf32> to vector<16x1xf32>
    %122 = vector.extract_strided_slice %3 {offsets = [0, 184], sizes = [16, 512], strides = [1, 1]} : vector<16x752xf32> to vector<16x512xf32>
    %123 = vector.broadcast %121 : vector<16x1xf32> to vector<16x512xf32>
    %124 = arith.mulf %123, %122 : vector<16x512xf32>
    %125 = arith.addf %120, %124 : vector<16x512xf32>
    %126 = vector.extract_strided_slice %4 {offsets = [0, 24], sizes = [16, 1], strides = [1, 1]} : vector<16x31xf32> to vector<16x1xf32>
    %127 = vector.extract_strided_slice %3 {offsets = [0, 192], sizes = [16, 512], strides = [1, 1]} : vector<16x752xf32> to vector<16x512xf32>
    %128 = vector.broadcast %126 : vector<16x1xf32> to vector<16x512xf32>
    %129 = arith.mulf %128, %127 : vector<16x512xf32>
    %130 = arith.addf %125, %129 : vector<16x512xf32>
    %131 = vector.extract_strided_slice %4 {offsets = [0, 25], sizes = [16, 1], strides = [1, 1]} : vector<16x31xf32> to vector<16x1xf32>
    %132 = vector.extract_strided_slice %3 {offsets = [0, 200], sizes = [16, 512], strides = [1, 1]} : vector<16x752xf32> to vector<16x512xf32>
    %133 = vector.broadcast %131 : vector<16x1xf32> to vector<16x512xf32>
    %134 = arith.mulf %133, %132 : vector<16x512xf32>
    %135 = arith.addf %130, %134 : vector<16x512xf32>
    %136 = vector.extract_strided_slice %4 {offsets = [0, 26], sizes = [16, 1], strides = [1, 1]} : vector<16x31xf32> to vector<16x1xf32>
    %137 = vector.extract_strided_slice %3 {offsets = [0, 208], sizes = [16, 512], strides = [1, 1]} : vector<16x752xf32> to vector<16x512xf32>
    %138 = vector.broadcast %136 : vector<16x1xf32> to vector<16x512xf32>
    %139 = arith.mulf %138, %137 : vector<16x512xf32>
    %140 = arith.addf %135, %139 : vector<16x512xf32>
    %141 = vector.extract_strided_slice %4 {offsets = [0, 27], sizes = [16, 1], strides = [1, 1]} : vector<16x31xf32> to vector<16x1xf32>
    %142 = vector.extract_strided_slice %3 {offsets = [0, 216], sizes = [16, 512], strides = [1, 1]} : vector<16x752xf32> to vector<16x512xf32>
    %143 = vector.broadcast %141 : vector<16x1xf32> to vector<16x512xf32>
    %144 = arith.mulf %143, %142 : vector<16x512xf32>
    %145 = arith.addf %140, %144 : vector<16x512xf32>
    %146 = vector.extract_strided_slice %4 {offsets = [0, 28], sizes = [16, 1], strides = [1, 1]} : vector<16x31xf32> to vector<16x1xf32>
    %147 = vector.extract_strided_slice %3 {offsets = [0, 224], sizes = [16, 512], strides = [1, 1]} : vector<16x752xf32> to vector<16x512xf32>
    %148 = vector.broadcast %146 : vector<16x1xf32> to vector<16x512xf32>
    %149 = arith.mulf %148, %147 : vector<16x512xf32>
    %150 = arith.addf %145, %149 : vector<16x512xf32>
    %151 = vector.extract_strided_slice %4 {offsets = [0, 29], sizes = [16, 1], strides = [1, 1]} : vector<16x31xf32> to vector<16x1xf32>
    %152 = vector.extract_strided_slice %3 {offsets = [0, 232], sizes = [16, 512], strides = [1, 1]} : vector<16x752xf32> to vector<16x512xf32>
    %153 = vector.broadcast %151 : vector<16x1xf32> to vector<16x512xf32>
    %154 = arith.mulf %153, %152 : vector<16x512xf32>
    %155 = arith.addf %150, %154 : vector<16x512xf32>
    %156 = vector.extract_strided_slice %4 {offsets = [0, 30], sizes = [16, 1], strides = [1, 1]} : vector<16x31xf32> to vector<16x1xf32>
    %157 = vector.extract_strided_slice %3 {offsets = [0, 240], sizes = [16, 512], strides = [1, 1]} : vector<16x752xf32> to vector<16x512xf32>
    %158 = vector.broadcast %156 : vector<16x1xf32> to vector<16x512xf32>
    %159 = arith.mulf %158, %157 : vector<16x512xf32>
    %160 = arith.addf %155, %159 : vector<16x512xf32>
    %cst_7 = arith.constant 0.000000e+00 : f32
    %161 = vector.broadcast %cst_7 : f32 to vector<16x512xf32>
    %162 = arith.cmpf ogt, %160, %161 : vector<16x512xf32>
    %cst_8 = arith.constant 0.000000e+00 : f32
    %163 = vector.broadcast %cst_8 : f32 to vector<16x512xf32>
    %164 = arith.minimumf %160, %163 : vector<16x512xf32>
    %165 = math.exp %164 : vector<16x512xf32>
    %cst_9 = arith.constant 1.000000e+00 : f32
    %166 = vector.broadcast %cst_9 : f32 to vector<16x512xf32>
    %167 = arith.subf %165, %166 : vector<16x512xf32>
    %168 = arith.select %162, %160, %167 : vector<16x512xi1>, vector<16x512xf32>
    %169 = arith.truncf %168 : vector<16x512xf32> to vector<16x512xbf16>
    %c0_10 = arith.constant 0 : index
    %c0_11 = arith.constant 0 : index
    %170 = vector.load %arg4[%c0_10, %c0_11] : memref<512x128xbf16, #tpu.memory_space<vmem>>, vector<512x128xbf16>
    %cst_12 = arith.constant dense<0.000000e+00> : vector<16x128xf32>
    %171 = tpu.matmul %169, %170, %cst_12 {dimension_numbers = #tpu.dot_dimension_numbers<[1], [0], [0], [1], [0, 0, 1, 1], [], []>} : vector<16x512xbf16>, vector<512x128xbf16>, vector<16x128xf32> -> vector<16x128xf32>
    %cst_13 = arith.constant 0.000000e+00 : f32
    %172 = vector.broadcast %cst_13 : f32 to vector<16x56xf32>
    %cst_14 = arith.constant 0.000000e+00 : f32
    %173 = vector.broadcast %cst_14 : f32 to vector<16x56xf32>
    %174 = tpu.concatenate %172, %171, %173 in 1 : vector<16x56xf32>, vector<16x128xf32>, vector<16x56xf32> -> vector<16x240xf32>
    %c0_15 = arith.constant 0 : index
    %c0_16 = arith.constant 0 : index
    %175 = vector.load %arg5[%c0_15, %c0_16] : memref<16x15xf32, #tpu.memory_space<vmem>>, vector<16x15xf32>
    %cst_17 = arith.constant 0.000000e+00 : f32
    %176 = vector.broadcast %cst_17 : f32 to vector<16x128xf32>
    %177 = vector.extract_strided_slice %175 {offsets = [0, 0], sizes = [16, 1], strides = [1, 1]} : vector<16x15xf32> to vector<16x1xf32>
    %178 = vector.extract_strided_slice %174 {offsets = [0, 0], sizes = [16, 128], strides = [1, 1]} : vector<16x240xf32> to vector<16x128xf32>
    %179 = vector.broadcast %177 : vector<16x1xf32> to vector<16x128xf32>
    %180 = arith.mulf %179, %178 : vector<16x128xf32>
    %181 = arith.addf %176, %180 : vector<16x128xf32>
    %182 = vector.extract_strided_slice %175 {offsets = [0, 1], sizes = [16, 1], strides = [1, 1]} : vector<16x15xf32> to vector<16x1xf32>
    %183 = vector.extract_strided_slice %174 {offsets = [0, 8], sizes = [16, 128], strides = [1, 1]} : vector<16x240xf32> to vector<16x128xf32>
    %184 = vector.broadcast %182 : vector<16x1xf32> to vector<16x128xf32>
    %185 = arith.mulf %184, %183 : vector<16x128xf32>
    %186 = arith.addf %181, %185 : vector<16x128xf32>
    %187 = vector.extract_strided_slice %175 {offsets = [0, 2], sizes = [16, 1], strides = [1, 1]} : vector<16x15xf32> to vector<16x1xf32>
    %188 = vector.extract_strided_slice %174 {offsets = [0, 16], sizes = [16, 128], strides = [1, 1]} : vector<16x240xf32> to vector<16x128xf32>
    %189 = vector.broadcast %187 : vector<16x1xf32> to vector<16x128xf32>
    %190 = arith.mulf %189, %188 : vector<16x128xf32>
    %191 = arith.addf %186, %190 : vector<16x128xf32>
    %192 = vector.extract_strided_slice %175 {offsets = [0, 3], sizes = [16, 1], strides = [1, 1]} : vector<16x15xf32> to vector<16x1xf32>
    %193 = vector.extract_strided_slice %174 {offsets = [0, 24], sizes = [16, 128], strides = [1, 1]} : vector<16x240xf32> to vector<16x128xf32>
    %194 = vector.broadcast %192 : vector<16x1xf32> to vector<16x128xf32>
    %195 = arith.mulf %194, %193 : vector<16x128xf32>
    %196 = arith.addf %191, %195 : vector<16x128xf32>
    %197 = vector.extract_strided_slice %175 {offsets = [0, 4], sizes = [16, 1], strides = [1, 1]} : vector<16x15xf32> to vector<16x1xf32>
    %198 = vector.extract_strided_slice %174 {offsets = [0, 32], sizes = [16, 128], strides = [1, 1]} : vector<16x240xf32> to vector<16x128xf32>
    %199 = vector.broadcast %197 : vector<16x1xf32> to vector<16x128xf32>
    %200 = arith.mulf %199, %198 : vector<16x128xf32>
    %201 = arith.addf %196, %200 : vector<16x128xf32>
    %202 = vector.extract_strided_slice %175 {offsets = [0, 5], sizes = [16, 1], strides = [1, 1]} : vector<16x15xf32> to vector<16x1xf32>
    %203 = vector.extract_strided_slice %174 {offsets = [0, 40], sizes = [16, 128], strides = [1, 1]} : vector<16x240xf32> to vector<16x128xf32>
    %204 = vector.broadcast %202 : vector<16x1xf32> to vector<16x128xf32>
    %205 = arith.mulf %204, %203 : vector<16x128xf32>
    %206 = arith.addf %201, %205 : vector<16x128xf32>
    %207 = vector.extract_strided_slice %175 {offsets = [0, 6], sizes = [16, 1], strides = [1, 1]} : vector<16x15xf32> to vector<16x1xf32>
    %208 = vector.extract_strided_slice %174 {offsets = [0, 48], sizes = [16, 128], strides = [1, 1]} : vector<16x240xf32> to vector<16x128xf32>
    %209 = vector.broadcast %207 : vector<16x1xf32> to vector<16x128xf32>
    %210 = arith.mulf %209, %208 : vector<16x128xf32>
    %211 = arith.addf %206, %210 : vector<16x128xf32>
    %212 = vector.extract_strided_slice %175 {offsets = [0, 7], sizes = [16, 1], strides = [1, 1]} : vector<16x15xf32> to vector<16x1xf32>
    %213 = vector.extract_strided_slice %174 {offsets = [0, 56], sizes = [16, 128], strides = [1, 1]} : vector<16x240xf32> to vector<16x128xf32>
    %214 = vector.broadcast %212 : vector<16x1xf32> to vector<16x128xf32>
    %215 = arith.mulf %214, %213 : vector<16x128xf32>
    %216 = arith.addf %211, %215 : vector<16x128xf32>
    %217 = vector.extract_strided_slice %175 {offsets = [0, 8], sizes = [16, 1], strides = [1, 1]} : vector<16x15xf32> to vector<16x1xf32>
    %218 = vector.extract_strided_slice %174 {offsets = [0, 64], sizes = [16, 128], strides = [1, 1]} : vector<16x240xf32> to vector<16x128xf32>
    %219 = vector.broadcast %217 : vector<16x1xf32> to vector<16x128xf32>
    %220 = arith.mulf %219, %218 : vector<16x128xf32>
    %221 = arith.addf %216, %220 : vector<16x128xf32>
    %222 = vector.extract_strided_slice %175 {offsets = [0, 9], sizes = [16, 1], strides = [1, 1]} : vector<16x15xf32> to vector<16x1xf32>
    %223 = vector.extract_strided_slice %174 {offsets = [0, 72], sizes = [16, 128], strides = [1, 1]} : vector<16x240xf32> to vector<16x128xf32>
    %224 = vector.broadcast %222 : vector<16x1xf32> to vector<16x128xf32>
    %225 = arith.mulf %224, %223 : vector<16x128xf32>
    %226 = arith.addf %221, %225 : vector<16x128xf32>
    %227 = vector.extract_strided_slice %175 {offsets = [0, 10], sizes = [16, 1], strides = [1, 1]} : vector<16x15xf32> to vector<16x1xf32>
    %228 = vector.extract_strided_slice %174 {offsets = [0, 80], sizes = [16, 128], strides = [1, 1]} : vector<16x240xf32> to vector<16x128xf32>
    %229 = vector.broadcast %227 : vector<16x1xf32> to vector<16x128xf32>
    %230 = arith.mulf %229, %228 : vector<16x128xf32>
    %231 = arith.addf %226, %230 : vector<16x128xf32>
    %232 = vector.extract_strided_slice %175 {offsets = [0, 11], sizes = [16, 1], strides = [1, 1]} : vector<16x15xf32> to vector<16x1xf32>
    %233 = vector.extract_strided_slice %174 {offsets = [0, 88], sizes = [16, 128], strides = [1, 1]} : vector<16x240xf32> to vector<16x128xf32>
    %234 = vector.broadcast %232 : vector<16x1xf32> to vector<16x128xf32>
    %235 = arith.mulf %234, %233 : vector<16x128xf32>
    %236 = arith.addf %231, %235 : vector<16x128xf32>
    %237 = vector.extract_strided_slice %175 {offsets = [0, 12], sizes = [16, 1], strides = [1, 1]} : vector<16x15xf32> to vector<16x1xf32>
    %238 = vector.extract_strided_slice %174 {offsets = [0, 96], sizes = [16, 128], strides = [1, 1]} : vector<16x240xf32> to vector<16x128xf32>
    %239 = vector.broadcast %237 : vector<16x1xf32> to vector<16x128xf32>
    %240 = arith.mulf %239, %238 : vector<16x128xf32>
    %241 = arith.addf %236, %240 : vector<16x128xf32>
    %242 = vector.extract_strided_slice %175 {offsets = [0, 13], sizes = [16, 1], strides = [1, 1]} : vector<16x15xf32> to vector<16x1xf32>
    %243 = vector.extract_strided_slice %174 {offsets = [0, 104], sizes = [16, 128], strides = [1, 1]} : vector<16x240xf32> to vector<16x128xf32>
    %244 = vector.broadcast %242 : vector<16x1xf32> to vector<16x128xf32>
    %245 = arith.mulf %244, %243 : vector<16x128xf32>
    %246 = arith.addf %241, %245 : vector<16x128xf32>
    %247 = vector.extract_strided_slice %175 {offsets = [0, 14], sizes = [16, 1], strides = [1, 1]} : vector<16x15xf32> to vector<16x1xf32>
    %248 = vector.extract_strided_slice %174 {offsets = [0, 112], sizes = [16, 128], strides = [1, 1]} : vector<16x240xf32> to vector<16x128xf32>
    %249 = vector.broadcast %247 : vector<16x1xf32> to vector<16x128xf32>
    %250 = arith.mulf %249, %248 : vector<16x128xf32>
    %251 = arith.addf %246, %250 : vector<16x128xf32>
    %c0_18 = arith.constant 0 : index
    %c0_19 = arith.constant 0 : index
    %252 = vector.load %arg6[%c0_18, %c0_19] : memref<16x16xbf16, #tpu.memory_space<vmem>>, vector<16x16xbf16>
    %253 = arith.truncf %251 : vector<16x128xf32> to vector<16x128xbf16>
    %cst_20 = arith.constant dense<0.000000e+00> : vector<16x128xf32>
    %254 = tpu.matmul %252, %253, %cst_20 {dimension_numbers = #tpu.dot_dimension_numbers<[1], [0], [0], [1], [0, 0, 1, 1], [], []>} : vector<16x16xbf16>, vector<16x128xbf16>, vector<16x128xf32> -> vector<16x128xf32>
    %cst_21 = arith.constant 0.000000e+00 : f32
    %255 = vector.broadcast %cst_21 : f32 to vector<16x128xf32>
    %256 = arith.cmpf ogt, %254, %255 : vector<16x128xf32>
    %cst_22 = arith.constant 0.000000e+00 : f32
    %257 = vector.broadcast %cst_22 : f32 to vector<16x128xf32>
    %258 = arith.minimumf %254, %257 : vector<16x128xf32>
    %259 = math.exp %258 : vector<16x128xf32>
    %cst_23 = arith.constant 1.000000e+00 : f32
    %260 = vector.broadcast %cst_23 : f32 to vector<16x128xf32>
    %261 = arith.subf %259, %260 : vector<16x128xf32>
    %262 = arith.select %256, %254, %261 : vector<16x128xi1>, vector<16x128xf32>
    %263 = arith.truncf %262 : vector<16x128xf32> to vector<16x128xbf16>
    %c0_24 = arith.constant 0 : index
    %c0_25 = arith.constant 0 : index
    %264 = vector.load %arg7[%c0_24, %c0_25] : memref<128x16xbf16, #tpu.memory_space<vmem>>, vector<128x16xbf16>
    %cst_26 = arith.constant dense<0.000000e+00> : vector<16x16xf32>
    %265 = tpu.matmul %263, %264, %cst_26 {dimension_numbers = #tpu.dot_dimension_numbers<[1], [0], [0], [1], [0, 0, 1, 1], [], []>} : vector<16x128xbf16>, vector<128x16xbf16>, vector<16x16xf32> -> vector<16x16xf32>
    %266 = vector.extract_strided_slice %265 {offsets = [0, 0], sizes = [16, 8], strides = [1, 1]} : vector<16x16xf32> to vector<16x8xf32>
    %267 = vector.extract_strided_slice %265 {offsets = [0, 8], sizes = [16, 8], strides = [1, 1]} : vector<16x16xf32> to vector<16x8xf32>
    %268 = tpu.concatenate %266, %267 in 0 : vector<16x8xf32>, vector<16x8xf32> -> vector<32x8xf32>
    %c0_27 = arith.constant 0 : index
    %c0_28 = arith.constant 0 : index
    %c0_29 = arith.constant 0 : index
    %269 = vector.load %arg10[%c0_27, %c0_28, %c0_29] : memref<1x32x8xf32, #tpu.memory_space<vmem>>, vector<1x32x8xf32>
    %270 = vector.shape_cast %269 : vector<1x32x8xf32> to vector<32x8xf32>
    %271 = vector.shape_cast %268 : vector<32x8xf32> to vector<1x32x8xf32>
    tpu.vector_store %arg10[%c0_27, %c0_28, %c0_29], %271 {strides = array<i32>} : memref<1x32x8xf32, #tpu.memory_space<vmem>>, vector<1x32x8xf32>,
    %c0_30 = arith.constant 0 : index
    %c0_31 = arith.constant 0 : index
    %272 = vector.load %arg8[%c0_30, %c0_31] : memref<3x32xf32, #tpu.memory_space<vmem>>, vector<3x32xf32>
    %cst_32 = arith.constant dense<0.000000e+00> : vector<3x8xf32>
    %273 = tpu.matmul %272, %268, %cst_32 {dimension_numbers = #tpu.dot_dimension_numbers<[1], [0], [0], [1], [0, 0, 1, 1], [], []>} : vector<3x32xf32>, vector<32x8xf32>, vector<3x8xf32> -> vector<3x8xf32>
    %c0_33 = arith.constant 0 : index
    %c0_34 = arith.constant 0 : index
    %274 = vector.load %arg9[%c0_33, %c0_34] : memref<3x1xf32, #tpu.memory_space<vmem>>, vector<3x1xf32>
    %275 = vector.broadcast %274 : vector<3x1xf32> to vector<3x8xf32>
    %276 = arith.addf %273, %275 : vector<3x8xf32>
    %c0_35 = arith.constant 0 : index
    %c0_36 = arith.constant 0 : index
    %c0_37 = arith.constant 0 : index
    %277 = vector.load %arg11[%c0_35, %c0_36, %c0_37] : memref<1x3x8xf32, #tpu.memory_space<vmem>>, vector<1x3x8xf32>
    %278 = vector.shape_cast %277 : vector<1x3x8xf32> to vector<3x8xf32>
    %279 = vector.shape_cast %276 : vector<3x8xf32> to vector<1x3x8xf32>
    tpu.vector_store %arg11[%c0_35, %c0_36, %c0_37], %279 {strides = array<i32>} : memref<1x3x8xf32, #tpu.memory_space<vmem>>, vector<1x3x8xf32>,
    return
  }
  func.func @transform_0(%arg0: i32) -> (i32, i32, i32) {
    %c0_i32 = arith.constant 0 : i32
    %c0_i32_0 = arith.constant 0 : i32
    %c0_i32_1 = arith.constant 0 : i32
    return %arg0, %c0_i32, %c0_i32_0 : i32, i32, i32
  }
  func.func @transform_1(%arg0: i32) -> (i32, i32) {
    %c0_i32 = arith.constant 0 : i32
    %c0_i32_0 = arith.constant 0 : i32
    %c0_i32_1 = arith.constant 0 : i32
    return %c0_i32, %c0_i32_0 : i32, i32
  }
  func.func @transform_2(%arg0: i32) -> (i32, i32) {
    %c0_i32 = arith.constant 0 : i32
    %c0_i32_0 = arith.constant 0 : i32
    %c0_i32_1 = arith.constant 0 : i32
    return %c0_i32, %c0_i32_0 : i32, i32
  }
  func.func @transform_3(%arg0: i32) -> (i32, i32) {
    %c0_i32 = arith.constant 0 : i32
    %c0_i32_0 = arith.constant 0 : i32
    %c0_i32_1 = arith.constant 0 : i32
    return %c0_i32, %c0_i32_0 : i32, i32
  }
  func.func @transform_4(%arg0: i32) -> (i32, i32) {
    %c0_i32 = arith.constant 0 : i32
    %c0_i32_0 = arith.constant 0 : i32
    %c0_i32_1 = arith.constant 0 : i32
    return %c0_i32, %c0_i32_0 : i32, i32
  }
  func.func @transform_5(%arg0: i32) -> (i32, i32) {
    %c0_i32 = arith.constant 0 : i32
    %c0_i32_0 = arith.constant 0 : i32
    %c0_i32_1 = arith.constant 0 : i32
    return %c0_i32, %c0_i32_0 : i32, i32
  }
  func.func @transform_6(%arg0: i32) -> (i32, i32) {
    %c0_i32 = arith.constant 0 : i32
    %c0_i32_0 = arith.constant 0 : i32
    %c0_i32_1 = arith.constant 0 : i32
    return %c0_i32, %c0_i32_0 : i32, i32
  }
  func.func @transform_7(%arg0: i32) -> (i32, i32) {
    %c0_i32 = arith.constant 0 : i32
    %c0_i32_0 = arith.constant 0 : i32
    %c0_i32_1 = arith.constant 0 : i32
    return %c0_i32, %c0_i32_0 : i32, i32
  }
  func.func @transform_8(%arg0: i32) -> (i32, i32) {
    %c0_i32 = arith.constant 0 : i32
    %c0_i32_0 = arith.constant 0 : i32
    %c0_i32_1 = arith.constant 0 : i32
    return %c0_i32, %c0_i32_0 : i32, i32
  }
  func.func @transform_9(%arg0: i32) -> (i32, i32, i32) {
    %c0_i32 = arith.constant 0 : i32
    %c0_i32_0 = arith.constant 0 : i32
    %c0_i32_1 = arith.constant 0 : i32
    return %arg0, %c0_i32, %c0_i32_0 : i32, i32, i32
  }
  func.func @transform_10(%arg0: i32) -> (i32, i32, i32) {
    %c0_i32 = arith.constant 0 : i32
    %c0_i32_0 = arith.constant 0 : i32
    %c0_i32_1 = arith.constant 0 : i32
    return %arg0, %c0_i32, %c0_i32_0 : i32, i32, i32
  }
}

module attributes {stable_mosaic.version = 11 : i64} {
  func.func @kernel(%arg0: i32, %arg1: memref<16x32xf32, #tpu.memory_space<vmem>>, %arg2: memref<16x1xf32, #tpu.memory_space<vmem>>, %arg3: memref<1x16xf32, #tpu.memory_space<vmem>>, %arg4: memref<16x16xf32, #tpu.memory_space<vmem>>, %arg5: memref<1x1xf32, #tpu.memory_space<vmem>>) attributes {dimension_semantics = [#tpu.dimension_semantics<arbitrary>], iteration_bounds = array<i64: 1>, scalar_prefetch = 0 : i64, scratch_operands = 0 : i64, tpu.core_type = #tpu.core_type<tc>, window_params = [{pipeline_mode = #tpu.pipeline_mode<synchronous>, transform_indices = @transform_0, window_bounds = array<i64: 16, 32>}, {pipeline_mode = #tpu.pipeline_mode<synchronous>, transform_indices = @transform_1, window_bounds = array<i64: 16, 1>}, {pipeline_mode = #tpu.pipeline_mode<synchronous>, transform_indices = @transform_2, window_bounds = array<i64: 1, 16>}, {pipeline_mode = #tpu.pipeline_mode<synchronous>, transform_indices = @transform_3, window_bounds = array<i64: 16, 16>}, {pipeline_mode = #tpu.pipeline_mode<synchronous>, transform_indices = @transform_4, window_bounds = array<i64: 1, 1>}]} {
    %c0 = arith.constant 0 : index
    %c0_0 = arith.constant 0 : index
    %0 = vector.load %arg1[%c0, %c0_0] : memref<16x32xf32, #tpu.memory_space<vmem>>, vector<16x32xf32>
    %cst = arith.constant dense<0.000000e+00> : vector<16x16xf32>
    %1 = tpu.matmul %0, %0, %cst {dimension_numbers = #tpu.dot_dimension_numbers<[1], [1], [0], [0], [0, 0, 1, 0], [], []>} : vector<16x32xf32>, vector<16x32xf32>, vector<16x16xf32> -> vector<16x16xf32>
    %c0_1 = arith.constant 0 : index
    %c0_2 = arith.constant 0 : index
    %2 = vector.load %arg2[%c0_1, %c0_2] : memref<16x1xf32, #tpu.memory_space<vmem>>, vector<16x1xf32>
    %c0_3 = arith.constant 0 : index
    %c0_4 = arith.constant 0 : index
    %3 = vector.load %arg3[%c0_3, %c0_4] : memref<1x16xf32, #tpu.memory_space<vmem>>, vector<1x16xf32>
    %4 = vector.broadcast %2 : vector<16x1xf32> to vector<16x16xf32>
    %5 = vector.broadcast %3 : vector<1x16xf32> to vector<16x16xf32>
    %6 = arith.addf %4, %5 : vector<16x16xf32>
    %cst_5 = arith.constant 2.000000e+00 : f32
    %7 = vector.broadcast %cst_5 : f32 to vector<16x16xf32>
    %8 = arith.mulf %7, %1 : vector<16x16xf32>
    %9 = arith.subf %6, %8 : vector<16x16xf32>
    %cst_6 = arith.constant 0.000000e+00 : f32
    %10 = vector.broadcast %cst_6 : f32 to vector<16x16xf32>
    %11 = arith.maximumf %9, %10 : vector<16x16xf32>
    %12 = vector.shape_cast %11 : vector<16x16xf32> to vector<1x16x16xf32>
    %cst_7 = arith.constant dense<0.000000e+00> : vector<1xf32>
    %13 = vector.multi_reduction <add>, %12, %cst_7 [1, 2] : vector<1x16x16xf32> to vector<1xf32>
    %14 = vector.shape_cast %13 : vector<1xf32> to vector<1x1x1xf32>
    %15 = vector.extract %14[0, 0, 0] : f32 from vector<1x1x1xf32>
    %cst_8 = arith.constant 2.400000e+02 : f32
    %16 = arith.divf %15, %cst_8 : f32
    %cst_9 = arith.constant 4.000000e+00 : f32
    %17 = arith.divf %16, %cst_9 : f32
    %cst_10 = arith.constant 0.000000e+00 : f32
    %18 = vector.broadcast %cst_10 : f32 to vector<16x16xf32>
    %19 = arith.subf %18, %11 : vector<16x16xf32>
    %cst_11 = arith.constant 1.600000e+01 : f32
    %20 = arith.mulf %17, %cst_11 : f32
    %21 = vector.broadcast %20 : f32 to vector<16x16xf32>
    %22 = arith.divf %19, %21 : vector<16x16xf32>
    %23 = math.exp %22 : vector<16x16xf32>
    %24 = arith.mulf %23, %23 : vector<16x16xf32>
    %25 = arith.addf %23, %24 : vector<16x16xf32>
    %26 = arith.mulf %24, %24 : vector<16x16xf32>
    %27 = arith.addf %25, %26 : vector<16x16xf32>
    %28 = arith.mulf %26, %26 : vector<16x16xf32>
    %29 = arith.addf %27, %28 : vector<16x16xf32>
    %30 = arith.mulf %28, %28 : vector<16x16xf32>
    %31 = arith.addf %29, %30 : vector<16x16xf32>
    %c0_12 = arith.constant 0 : index
    %c0_13 = arith.constant 0 : index
    %32 = vector.load %arg4[%c0_12, %c0_13] : memref<16x16xf32, #tpu.memory_space<vmem>>, vector<16x16xf32>
    %33 = arith.mulf %32, %31 : vector<16x16xf32>
    %34 = vector.shape_cast %33 : vector<16x16xf32> to vector<1x16x16xf32>
    %cst_14 = arith.constant dense<0.000000e+00> : vector<1xf32>
    %35 = vector.multi_reduction <add>, %34, %cst_14 [1, 2] : vector<1x16x16xf32> to vector<1xf32>
    %36 = vector.shape_cast %35 : vector<1xf32> to vector<1x1x1xf32>
    %37 = vector.extract %36[0, 0, 0] : f32 from vector<1x1x1xf32>
    %38 = arith.cmpf one, %37, %37 : f32
    %cst_15 = arith.constant 0.000000e+00 : f32
    %39 = arith.select %38, %cst_15, %37 : f32
    %40 = vector.broadcast %39 : f32 to vector<1x1xf32>
    %c0_16 = arith.constant 0 : index
    %c0_17 = arith.constant 0 : index
    %41 = vector.load %arg5[%c0_16, %c0_17] : memref<1x1xf32, #tpu.memory_space<vmem>>, vector<1x1xf32>
    tpu.vector_store %arg5[%c0_16, %c0_17], %40 {strides = array<i32>} : memref<1x1xf32, #tpu.memory_space<vmem>>, vector<1x1xf32>,
    return
  }
  func.func @transform_0(%arg0: i32) -> (i32, i32) {
    %c0_i32 = arith.constant 0 : i32
    %c0_i32_0 = arith.constant 0 : i32
    %c0_i32_1 = arith.constant 0 : i32
    return %c0_i32, %c0_i32_0 : i32, i32
  }
  func.func @transform_1(%arg0: i32) -> (i32, i32) {
    %c0_i32 = arith.constant 0 : i32
    %c0_i32_0 = arith.constant 0 : i32
    %c0_i32_1 = arith.constant 0 : i32
    return %c0_i32, %c0_i32_0 : i32, i32
  }
  func.func @transform_2(%arg0: i32) -> (i32, i32) {
    %c0_i32 = arith.constant 0 : i32
    %c0_i32_0 = arith.constant 0 : i32
    %c0_i32_1 = arith.constant 0 : i32
    return %c0_i32, %c0_i32_0 : i32, i32
  }
  func.func @transform_3(%arg0: i32) -> (i32, i32) {
    %c0_i32 = arith.constant 0 : i32
    %c0_i32_0 = arith.constant 0 : i32
    %c0_i32_1 = arith.constant 0 : i32
    return %c0_i32, %c0_i32_0 : i32, i32
  }
  func.func @transform_4(%arg0: i32) -> (i32, i32) {
    %c0_i32 = arith.constant 0 : i32
    %c0_i32_0 = arith.constant 0 : i32
    %c0_i32_1 = arith.constant 0 : i32
    return %c0_i32, %c0_i32_0 : i32, i32
  }
}

</mosaic_0001>

<llo_original>
// kernel: dsan_forward.3
$region0: #{dsan_forward.3}
  #allocation0 [shape = 'u32[]', space=smem, size = 0x4, offset = 0x4, fixed_abs, tag = 'smem constant byte address 0x4 - core index']
  #allocation1 [shape = 'u32[72,128]{1,0:T(1,128)}', space=vmem, size = 0x9000, scoped, tag = 'internal scratch']
  %s0 = inlined_call_operand.vmem [shape: f32[16,32], index: 0, kind: input, shape index: {}]
  %s1 = inlined_call_operand.vmem [shape: f32[16,1], index: 1, kind: input, shape index: {}]
  %s2 = inlined_call_operand.vmem [shape: f32[1,16], index: 2, kind: input, shape index: {}]
  %s3 = inlined_call_operand.vmem [shape: f32[16,16], index: 3, kind: input, shape index: {}]
  %s4 = inlined_call_operand.hbm [shape: f32[1,1], index: 4, kind: output, shape index: {}]
  %s5 = sld [smem:[#allocation0]]
  $region26: #{dsan_forward.3} parent=0
    _
  %s7 = ssub.s32 1, %s5
  %s8 = scalar_select 0, %s7, %s5
  $region1: #{dsan_forward.3} parent=0
    #allocation2 [shape = 'u8[512]{0}', space=vmem, size = 0x400, scoped, tag = 'output window, operand 0, single buffered']
    #allocation3 [shape = 's32[1]{0}', space=sflag, size = 0x4, scoped, tag = 'scoped memory for dsan_forward.3']
    %9 = vsyncpa [#allocation3], 0
    // Predicated region
    $region2: #{dsan_forward.3} parent=1 // pred_check
      _
    $region3: #{dsan_forward.3} parent=1 // pred_check_branch
      %11 = sbr.rel (0) target = $region5
    $region4: #{dsan_forward.3} parent=1 // pred_region
      _
    $region5: #{dsan_forward.3} parent=1 // pred_fallthru
      _
    // Predicated region
    $region6: #{dsan_forward.3} parent=1 // pred_check
      _
    $region7: #{dsan_forward.3} parent=1 // pred_check_branch
      %13 = sbr.rel (0) target = $region9
    $region8: #{dsan_forward.3} parent=1 // pred_region
      _
    $region9: #{dsan_forward.3} parent=1 // pred_fallthru
      _
    // Predicated region
    $region10: #{dsan_forward.3} parent=1 // pred_check
      _
    $region11: #{dsan_forward.3} parent=1 // pred_check_branch
      %15 = sbr.rel (0) target = $region13
    $region12: #{dsan_forward.3} parent=1 // pred_region
      _
    $region13: #{dsan_forward.3} parent=1 // pred_fallthru
      _
    // Predicated region
    $region14: #{dsan_forward.3} parent=1 // pred_check
      _
    $region15: #{dsan_forward.3} parent=1 // pred_check_branch
      %17 = sbr.rel (0) target = $region17
    $region16: #{dsan_forward.3} parent=1 // pred_region
      _
    $region17: #{dsan_forward.3} parent=1 // pred_fallthru
      _
    %v18 = vld [vmem:[%s0] sm:$0xff]
    %v19 = vld [vmem:[%s0 + $0x8] sm:$0xff]
    %vm20 = vcmask 261120
    %v22 = vsel %vm20, %v18, 0
    %v25 = vsel %vm20, %v19, 0
    %27 = vmatpush.xpose.msra.mxu0 0.0
    %28 = vmatpush.xpose.msra.mxu0 0.0
    %29 = vmatpush.xpose.msra.mxu0 0.0
    %30 = vmatpush.xpose.msra.mxu0 0.0
    %31 = vmatpush.xpose.msra.mxu0 0.0
    %32 = vmatpush.xpose.msra.mxu0 0.0
    %33 = vmatpush.xpose.msra.mxu0 0.0
    %34 = vmatpush.xpose.msra.mxu0 0.0
    %35 = vmatpush.xpose.msra.mxu0 0.0
    %36 = vmatpush.xpose.msra.mxu0 0.0
    %37 = vmatpush.xpose.msra.mxu0 0.0
    %38 = vmatpush.xpose.msra.mxu0 0.0
    %39 = vmatpush.xpose.msra.mxu0 0.0
    %40 = vmatpush.xpose.msra.mxu0 0.0
    %41 = vmatpush.xpose.msra.mxu0 %v25
    %42 = vmatpush.xpose.msra.mxu0 %v22
    %43 = vmatmul.f32.gmra.mxu0 %v22
    %v44 = vpop.f32.mrf.mxu0
    %v45 = vadd.f32 0.0, %v44
    %46 = vmatmul.f32.gmra.mxu0 %v25
    %v47 = vpop.f32.mrf.mxu0
    %v48 = vadd.f32 0.0, %v47
    %49 = vdwg.mxu0
    %v50 = vld [vmem:[%s1] sm:$0xff]
    %v51 = vld [vmem:[%s1 + $0x8] sm:$0xff]
    %v52 = vld [vmem:[%s2] sm:$0x1]
    %54 = vset.pattern.permute.xlu0 0
    %55 = vperm.xlu0 %54, %v50
    %v56 = vpop.permute.xlu0 %55
    %59 = vset.pattern.permute.xlu0 0
    %60 = vperm.xlu0 %59, %v51
    %v61 = vpop.permute.xlu0 %60
    %v64 = vperm.slane %v52, 0
    %v66 = vadd.f32 %v56, %v64
    %v67 = vadd.f32 %v61, %v64
    %v68 = vmul.f32 %v45, 2.0
    %v69 = vmul.f32 %v48, 2.0
    %v70 = vsub.f32 %v66, %v68
    %v71 = vsub.f32 %v67, %v69
    %v72 = vmax.f32 %v70, 0.0
    %v73 = vmax.f32 %v71, 0.0
    %vm74 = vcmask 130048
    %v75 = vsel %vm74, %v72, 0.0
    %v76 = vsel %vm74, %v73, 0.0
    %v77 = vadd.f32 %v75, %v76
    %78 = vadd.xlane.f32.xlu0 %v77
    %v79 = vpop.xlane.xlu0 %78
    %v80 = vrot.slane %v79, 4
    %v81 = vadd.f32 %v79, %v80
    %v82 = vrot.slane %v81, 2
    %v83 = vadd.f32 %v81, %v82
    %v84 = vrot.slane %v83, 1
    %v85 = vadd.f32 %v83, %v84
    %s86 = vtos %v85
    %v87 = vrcp.pop 240.0
    %v88 = vmul.f32 240.0, %v87
    %v89 = vsub.f32 1.0, %v88
    %v90 = vmul.f32 %v87, %v89
    %v91 = vadd.f32 %v87, %v90
    %vm92 = vweird.f32 %v87
    %v93 = vsel %vm92, %v87, %v91
    %s94 = vtos %v93
    %s95 = smul.f32 %s86, %s94
    %v96 = vrcp.pop 4.0
    %v97 = vmul.f32 4.0, %v96
    %v98 = vsub.f32 1.0, %v97
    %v99 = vmul.f32 %v96, %v98
    %v100 = vadd.f32 %v96, %v99
    %vm101 = vweird.f32 %v96
    %v102 = vsel %vm101, %v96, %v100
    %s103 = vtos %v102
    %s104 = smul.f32 %s95, %s103
    %v105 = vsub.f32 0.0, %v72
    %v106 = vsub.f32 0.0, %v73
    %s107 = smul.f32 %s104, 16.0
    %v108 = vstv %s107
    %v109 = vrcp.pop %v108
    %v110 = vmul.f32 %v108, %v109
    %v111 = vsub.f32 1.0, %v110
    %v112 = vmul.f32 %v109, %v111
    %v113 = vadd.f32 %v109, %v112
    %vm114 = vweird.f32 %v108
    %vm115 = vweird.f32 %v109
    %vm116 = vmor %vm114, %vm115
    %v117 = vsel %vm116, %v109, %v113
    %v118 = vand.u32 2147483647, %v108
    %vm119 = vcmp.eq.f32.partialorder %v118, 8.507059e+37
    %v120 = vand.u32 %v108, 2147483648
    %v121 = vor.u32 1.1754944e-38, %v120
    %v122 = vsel %vm119, %v121, %v117
    %v123 = vmul.f32 %v105, %v122
    %v124 = vmul.f32 %v106, %v122
    %v125 = vmul.f32 %v123, 1.442695
    %v126 = vpow.pop %v125
    %v127 = vmul.f32 %v124, 1.442695
    %v128 = vpow.pop %v127
    %v129 = vmul.f32 %v126, %v126
    %v130 = vmul.f32 %v128, %v128
    %v131 = vadd.f32 %v126, %v129
    %v132 = vadd.f32 %v128, %v130
    %v133 = vmul.f32 %v129, %v129
    %v134 = vmul.f32 %v130, %v130
    %v135 = vadd.f32 %v131, %v133
    %v136 = vadd.f32 %v132, %v134
    %v137 = vmul.f32 %v133, %v133
    %v138 = vmul.f32 %v134, %v134
    %v139 = vadd.f32 %v135, %v137
    %v140 = vadd.f32 %v136, %v138
    %v141 = vmul.f32 %v137, %v137
    %v142 = vmul.f32 %v138, %v138
    %v143 = vadd.f32 %v139, %v141
    %v144 = vadd.f32 %v140, %v142
    %v145 = vld [vmem:[%s3] sm:$0xff]
    %v146 = vld [vmem:[%s3 + $0x8] sm:$0xff]
    %v147 = vmul.f32 %v145, %v143
    %v148 = vmul.f32 %v146, %v144
    %v149 = vsel %vm74, %v147, 0.0
    %v150 = vsel %vm74, %v148, 0.0
    %v151 = vadd.f32 %v149, %v150
    %152 = vadd.xlane.f32.xlu0 %v151
    %v153 = vpop.xlane.xlu0 %152
    %v154 = vrot.slane %v153, 4
    %v155 = vadd.f32 %v153, %v154
    %v156 = vrot.slane %v155, 2
    %v157 = vadd.f32 %v155, %v156
    %v158 = vrot.slane %v157, 1
    %v159 = vadd.f32 %v157, %v158
    %s160 = vtos %v159
    %p161 = scmp.ne.f32.partialorder %s160, %s160
    %s162 = scalar_select %p161, 0.0, %s160
    %v163 = vstv %s162
    %vm164 = vcmask 0
    %165 = vst.msk [vmem:[#allocation2] sm:$0x1] %vm164, %v163
    // Predicated region
    $region18: #{dsan_forward.3} parent=1 // pred_check
      _
    $region19: #{dsan_forward.3} parent=1 // pred_check_branch
      %167 = sbr.rel (0) target = $region21
    $region20: #{dsan_forward.3} parent=1 // pred_region
      %169 = vsyncadd [#allocation3], 0
      %s171 = sshll.u32 [#allocation2], 4
      %s172 = int_to_ptr.vmem [resolvable:$true] %s171
      %s173 = sshll.u32 %s4, 4
      %s174 = int_to_ptr.hbm [resolvable:$true] %s173
      %176 = dma.vmem_to_hbm [thread:$0]  %s172, 16, %s174, [#allocation3]
    $region21: #{dsan_forward.3} parent=1 // pred_fallthru
      _
    // Predicated region
    $region22: #{dsan_forward.3} parent=1 // pred_check
      _
    $region23: #{dsan_forward.3} parent=1 // pred_check_branch
      %178 = sbr.rel (0) target = $region25
    $region24: #{dsan_forward.3} parent=1 // pred_region
      %180 = dma.done [#allocation3], 16
    $region25: #{dsan_forward.3} parent=1 // pred_fallthru
      _
    %181 = vsyncpa [#allocation3], 1

// kernel: dsan_forward.2
$region0: #{dsan_forward.2}
  #allocation0 [shape = 'u32[]', space=smem, size = 0x4, offset = 0x4, fixed_abs, tag = 'smem constant byte address 0x4 - core index']
  #allocation1 [shape = 'u32[72,128]{1,0:T(1,128)}', space=vmem, size = 0x9000, scoped, tag = 'internal scratch']
  %s0 = inlined_call_operand.vmem [shape: bf16[2,24,752], index: 0, kind: input, shape index: {}]
  %s1 = inlined_call_operand.vmem [shape: bf16[16,24], index: 1, kind: input, shape index: {}]
  %s2 = inlined_call_operand.vmem [shape: f32[16,31], index: 2, kind: input, shape index: {}]
  %s3 = inlined_call_operand.vmem [shape: bf16[512,128], index: 3, kind: input, shape index: {}]
  %s4 = inlined_call_operand.vmem [shape: f32[16,15], index: 4, kind: input, shape index: {}]
  %s5 = inlined_call_operand.vmem [shape: bf16[16,16], index: 5, kind: input, shape index: {}]
  %s6 = inlined_call_operand.vmem [shape: bf16[128,16], index: 6, kind: input, shape index: {}]
  %s7 = inlined_call_operand.vmem [shape: f32[3,32], index: 7, kind: input, shape index: {}]
  %s8 = inlined_call_operand.vmem [shape: f32[3,1], index: 8, kind: input, shape index: {}]
  %s9 = inlined_call_operand.vmem [shape: f32[2,32,8], index: 9, kind: output, shape index: {0}]
  %s10 = inlined_call_operand.vmem [shape: f32[2,3,8], index: 10, kind: output, shape index: {1}]
  %11 = xla_tuple %s9, %s10
  %s12 = sld [smem:[#allocation0]]
  $region77: #{dsan_forward.2} parent=0
    _
  %s14 = ssub.s32 1, %s12
  %s15 = scalar_select 0, %s14, %s12
  loop: start=0, step=1, limit=4
  $region2: #{dsan_forward.2} parent=0 // loop_pre_header
    _
  $region3: #{dsan_forward.2} parent=0 // loop_header
    %s17 = sphi 0, %s21
    %p18 = scmp.ge.s32.totalorder %s17, 4
    %s27 = sphi 0, %s29
    %s30 = sphi 0, %s27
    %s31 = sphi 0, %s30
    %s47 = sphi 0, %s31
    %s51 = sphi 0, %s51
    %s53 = sphi 0, %s51
    %s54 = sphi 0, %s53
    %s68 = sphi 0, %s54
    %s72 = sphi 0, %s72
    %s74 = sphi 0, %s72
    %s75 = sphi 0, %s74
    %s89 = sphi 0, %s75
    %s93 = sphi 0, %s93
    %s95 = sphi 0, %s93
    %s96 = sphi 0, %s95
    %s110 = sphi 0, %s96
    %s114 = sphi 0, %s114
    %s116 = sphi 0, %s114
    %s117 = sphi 0, %s116
    %s131 = sphi 0, %s117
    %s135 = sphi 0, %s135
    %s137 = sphi 0, %s135
    %s138 = sphi 0, %s137
    %s152 = sphi 0, %s138
    %s156 = sphi 0, %s156
    %s158 = sphi 0, %s156
    %s159 = sphi 0, %s158
    %s173 = sphi 0, %s159
    %s177 = sphi 0, %s177
    %s179 = sphi 0, %s177
    %s180 = sphi 0, %s179
    %s194 = sphi 0, %s180
    %s198 = sphi 0, %s198
    %s200 = sphi 0, %s198
    %s201 = sphi 0, %s200
    %s215 = sphi 0, %s201
    %s221 = sphi 0, %s223
    %s224 = sphi 0, %s221
    %s225 = sphi 0, %s224
    %s241 = sphi 0, %s225
    %s247 = sphi 0, %s249
    %s250 = sphi 0, %s247
    %s251 = sphi 0, %s250
    %s267 = sphi 0, %s251
  $region4: #{dsan_forward.2} parent=0 // loop_header_branch
    %20 = sbr.rel (%p18) target = $region8
  $region5: #{dsan_forward.2} parent=0 // loop_body
    %s22 = ssub.s32 %s17, 1
    %s23 = ssub.s32 %s17, 2
    %s24 = sadd.s32 %s17, 1
    %s25 = ssub.s32 %s17, %s24
    %p26 = scmp.eq.s32.totalorder %s25, 0
    %s28 = sadd.s32 %s27, 1
    %s29 = scalar_select %p26, %s27, %s28
    %p32 = pneg %p26
    %p33 = scmp.eq.s32.totalorder %s17, 1
    %p34 = por %p32, %p33
    %p35 = scmp.ne.s32.totalorder %s27, %s30
    %p36 = scmp.eq.s32.totalorder %s17, 0
    %p37 = por %p35, %p36
    %p38 = scmp.ne.s32.totalorder %s27, %s30
    %p39 = scmp.eq.s32.totalorder %s22, 1
    %p40 = por %p38, %p39
    %p41 = scmp.ne.s32.totalorder %s30, %s31
    %p42 = scmp.eq.s32.totalorder %s22, 0
    %p43 = por %p41, %p42
    %p44 = scmp.ne.s32.totalorder %s30, %s31
    %p45 = scmp.eq.s32.totalorder %s23, 1
    %p46 = por %p44, %p45
    %p48 = scmp.ne.s32.totalorder %s31, %s47
    %p49 = scmp.eq.s32.totalorder %s23, 0
    %p50 = por %p48, %p49
    %s52 = sadd.s32 %s51, 1
    %p55 = scmp.eq.s32.totalorder %s17, 1
    %p56 = scmp.ne.s32.totalorder %s51, %s53
    %p57 = scmp.eq.s32.totalorder %s17, 0
    %p58 = por %p56, %p57
    %p59 = scmp.ne.s32.totalorder %s51, %s53
    %p60 = scmp.eq.s32.totalorder %s22, 1
    %p61 = por %p59, %p60
    %p62 = scmp.ne.s32.totalorder %s53, %s54
    %p63 = scmp.eq.s32.totalorder %s22, 0
    %p64 = por %p62, %p63
    %p65 = scmp.ne.s32.totalorder %s53, %s54
    %p66 = scmp.eq.s32.totalorder %s23, 1
    %p67 = por %p65, %p66
    %p69 = scmp.ne.s32.totalorder %s54, %s68
    %p70 = scmp.eq.s32.totalorder %s23, 0
    %p71 = por %p69, %p70
    %s73 = sadd.s32 %s72, 1
    %p76 = scmp.eq.s32.totalorder %s17, 1
    %p77 = scmp.ne.s32.totalorder %s72, %s74
    %p78 = scmp.eq.s32.totalorder %s17, 0
    %p79 = por %p77, %p78
    %p80 = scmp.ne.s32.totalorder %s72, %s74
    %p81 = scmp.eq.s32.totalorder %s22, 1
    %p82 = por %p80, %p81
    %p83 = scmp.ne.s32.totalorder %s74, %s75
    %p84 = scmp.eq.s32.totalorder %s22, 0
    %p85 = por %p83, %p84
    %p86 = scmp.ne.s32.totalorder %s74, %s75
    %p87 = scmp.eq.s32.totalorder %s23, 1
    %p88 = por %p86, %p87
    %p90 = scmp.ne.s32.totalorder %s75, %s89
    %p91 = scmp.eq.s32.totalorder %s23, 0
    %p92 = por %p90, %p91
    %s94 = sadd.s32 %s93, 1
    %p97 = scmp.eq.s32.totalorder %s17, 1
    %p98 = scmp.ne.s32.totalorder %s93, %s95
    %p99 = scmp.eq.s32.totalorder %s17, 0
    %p100 = por %p98, %p99
    %p101 = scmp.ne.s32.totalorder %s93, %s95
    %p102 = scmp.eq.s32.totalorder %s22, 1
    %p103 = por %p101, %p102
    %p104 = scmp.ne.s32.totalorder %s95, %s96
    %p105 = scmp.eq.s32.totalorder %s22, 0
    %p106 = por %p104, %p105
    %p107 = scmp.ne.s32.totalorder %s95, %s96
    %p108 = scmp.eq.s32.totalorder %s23, 1
    %p109 = por %p107, %p108
    %p111 = scmp.ne.s32.totalorder %s96, %s110
    %p112 = scmp.eq.s32.totalorder %s23, 0
    %p113 = por %p111, %p112
    %s115 = sadd.s32 %s114, 1
    %p118 = scmp.eq.s32.totalorder %s17, 1
    %p119 = scmp.ne.s32.totalorder %s114, %s116
    %p120 = scmp.eq.s32.totalorder %s17, 0
    %p121 = por %p119, %p120
    %p122 = scmp.ne.s32.totalorder %s114, %s116
    %p123 = scmp.eq.s32.totalorder %s22, 1
    %p124 = por %p122, %p123
    %p125 = scmp.ne.s32.totalorder %s116, %s117
    %p126 = scmp.eq.s32.totalorder %s22, 0
    %p127 = por %p125, %p126
    %p128 = scmp.ne.s32.totalorder %s116, %s117
    %p129 = scmp.eq.s32.totalorder %s23, 1
    %p130 = por %p128, %p129
    %p132 = scmp.ne.s32.totalorder %s117, %s131
    %p133 = scmp.eq.s32.totalorder %s23, 0
    %p134 = por %p132, %p133
    %s136 = sadd.s32 %s135, 1
    %p139 = scmp.eq.s32.totalorder %s17, 1
    %p140 = scmp.ne.s32.totalorder %s135, %s137
    %p141 = scmp.eq.s32.totalorder %s17, 0
    %p142 = por %p140, %p141
    %p143 = scmp.ne.s32.totalorder %s135, %s137
    %p144 = scmp.eq.s32.totalorder %s22, 1
    %p145 = por %p143, %p144
    %p146 = scmp.ne.s32.totalorder %s137, %s138
    %p147 = scmp.eq.s32.totalorder %s22, 0
    %p148 = por %p146, %p147
    %p149 = scmp.ne.s32.totalorder %s137, %s138
    %p150 = scmp.eq.s32.totalorder %s23, 1
    %p151 = por %p149, %p150
    %p153 = scmp.ne.s32.totalorder %s138, %s152
    %p154 = scmp.eq.s32.totalorder %s23, 0
    %p155 = por %p153, %p154
    %s157 = sadd.s32 %s156, 1
    %p160 = scmp.eq.s32.totalorder %s17, 1
    %p161 = scmp.ne.s32.totalorder %s156, %s158
    %p162 = scmp.eq.s32.totalorder %s17, 0
    %p163 = por %p161, %p162
    %p164 = scmp.ne.s32.totalorder %s156, %s158
    %p165 = scmp.eq.s32.totalorder %s22, 1
    %p166 = por %p164, %p165
    %p167 = scmp.ne.s32.totalorder %s158, %s159
    %p168 = scmp.eq.s32.totalorder %s22, 0
    %p169 = por %p167, %p168
    %p170 = scmp.ne.s32.totalorder %s158, %s159
    %p171 = scmp.eq.s32.totalorder %s23, 1
    %p172 = por %p170, %p171
    %p174 = scmp.ne.s32.totalorder %s159, %s173
    %p175 = scmp.eq.s32.totalorder %s23, 0
    %p176 = por %p174, %p175
    %s178 = sadd.s32 %s177, 1
    %p181 = scmp.eq.s32.totalorder %s17, 1
    %p182 = scmp.ne.s32.totalorder %s177, %s179
    %p183 = scmp.eq.s32.totalorder %s17, 0
    %p184 = por %p182, %p183
    %p185 = scmp.ne.s32.totalorder %s177, %s179
    %p186 = scmp.eq.s32.totalorder %s22, 1
    %p187 = por %p185, %p186
    %p188 = scmp.ne.s32.totalorder %s179, %s180
    %p189 = scmp.eq.s32.totalorder %s22, 0
    %p190 = por %p188, %p189
    %p191 = scmp.ne.s32.totalorder %s179, %s180
    %p192 = scmp.eq.s32.totalorder %s23, 1
    %p193 = por %p191, %p192
    %p195 = scmp.ne.s32.totalorder %s180, %s194
    %p196 = scmp.eq.s32.totalorder %s23, 0
    %p197 = por %p195, %p196
    %s199 = sadd.s32 %s198, 1
    %p202 = scmp.eq.s32.totalorder %s17, 1
    %p203 = scmp.ne.s32.totalorder %s198, %s200
    %p204 = scmp.eq.s32.totalorder %s17, 0
    %p205 = por %p203, %p204
    %p206 = scmp.ne.s32.totalorder %s198, %s200
    %p207 = scmp.eq.s32.totalorder %s22, 1
    %p208 = por %p206, %p207
    %p209 = scmp.ne.s32.totalorder %s200, %s201
    %p210 = scmp.eq.s32.totalorder %s22, 0
    %p211 = por %p209, %p210
    %p212 = scmp.ne.s32.totalorder %s200, %s201
    %p213 = scmp.eq.s32.totalorder %s23, 1
    %p214 = por %p212, %p213
    %p216 = scmp.ne.s32.totalorder %s201, %s215
    %p217 = scmp.eq.s32.totalorder %s23, 0
    %p218 = por %p216, %p217
    %s219 = ssub.s32 %s17, %s24
    %p220 = scmp.eq.s32.totalorder %s219, 0
    %s222 = sadd.s32 %s221, 1
    %s223 = scalar_select %p220, %s221, %s222
    %p226 = pneg %p220
    %p227 = scmp.eq.s32.totalorder %s17, 1
    %p228 = por %p226, %p227
    %p229 = scmp.ne.s32.totalorder %s221, %s224
    %p230 = scmp.eq.s32.totalorder %s17, 0
    %p231 = por %p229, %p230
    %p232 = scmp.ne.s32.totalorder %s221, %s224
    %p233 = scmp.eq.s32.totalorder %s22, 1
    %p234 = por %p232, %p233
    %p235 = scmp.ne.s32.totalorder %s224, %s225
    %p236 = scmp.eq.s32.totalorder %s22, 0
    %p237 = por %p235, %p236
    %p238 = scmp.ne.s32.totalorder %s224, %s225
    %p239 = scmp.eq.s32.totalorder %s23, 1
    %p240 = por %p238, %p239
    %p242 = scmp.ne.s32.totalorder %s225, %s241
    %p243 = scmp.eq.s32.totalorder %s23, 0
    %p244 = por %p242, %p243
    %s245 = ssub.s32 %s17, %s24
    %p246 = scmp.eq.s32.totalorder %s245, 0
    %s248 = sadd.s32 %s247, 1
    %s249 = scalar_select %p246, %s247, %s248
    %p252 = pneg %p246
    %p253 = scmp.eq.s32.totalorder %s17, 1
    %p254 = por %p252, %p253
    %p255 = scmp.ne.s32.totalorder %s247, %s250
    %p256 = scmp.eq.s32.totalorder %s17, 0
    %p257 = por %p255, %p256
    %p258 = scmp.ne.s32.totalorder %s247, %s250
    %p259 = scmp.eq.s32.totalorder %s22, 1
    %p260 = por %p258, %p259
    %p261 = scmp.ne.s32.totalorder %s250, %s251
    %p262 = scmp.eq.s32.totalorder %s22, 0
    %p263 = por %p261, %p262
    %p264 = scmp.ne.s32.totalorder %s250, %s251
    %p265 = scmp.eq.s32.totalorder %s23, 1
    %p266 = por %p264, %p265
    %p268 = scmp.ne.s32.totalorder %s251, %s267
    %p269 = scmp.eq.s32.totalorder %s23, 0
    %p270 = por %p268, %p269
    %p271 = scmp.le.s32.totalorder 1, %s17
    %p272 = scmp.lt.s32.totalorder %s17, 3
    %p273 = pnand %p271, %p272
    %p274 = pneg %p273
    // Predicated region
    $region9: #{dsan_forward.2} parent=5 // pred_check
      _
    $region10: #{dsan_forward.2} parent=5 // pred_check_branch
      %276 = sbr.rel (%p273) target = $region12
    $region11: #{dsan_forward.2} parent=5 // pred_region
      %s277 = ssub.s32 %s17, 1
      // Predicated region
      $region13: #{dsan_forward.2} parent=11 // pred_check
        %p278 = pneg %p64
      $region14: #{dsan_forward.2} parent=11 // pred_check_branch
        %280 = sbr.rel (%p278) target = $region16
      $region15: #{dsan_forward.2} parent=11 // pred_region
        _
      $region16: #{dsan_forward.2} parent=11 // pred_fallthru
        _
      // Predicated region
      $region17: #{dsan_forward.2} parent=11 // pred_check
        %p281 = pneg %p85
      $region18: #{dsan_forward.2} parent=11 // pred_check_branch
        %283 = sbr.rel (%p281) target = $region20
      $region19: #{dsan_forward.2} parent=11 // pred_region
        _
      $region20: #{dsan_forward.2} parent=11 // pred_fallthru
        _
      // Predicated region
      $region21: #{dsan_forward.2} parent=11 // pred_check
        %p284 = pneg %p106
      $region22: #{dsan_forward.2} parent=11 // pred_check_branch
        %286 = sbr.rel (%p284) target = $region24
      $region23: #{dsan_forward.2} parent=11 // pred_region
        _
      $region24: #{dsan_forward.2} parent=11 // pred_fallthru
        _
      // Predicated region
      $region25: #{dsan_forward.2} parent=11 // pred_check
        %p287 = pneg %p127
      $region26: #{dsan_forward.2} parent=11 // pred_check_branch
        %289 = sbr.rel (%p287) target = $region28
      $region27: #{dsan_forward.2} parent=11 // pred_region
        _
      $region28: #{dsan_forward.2} parent=11 // pred_fallthru
        _
      // Predicated region
      $region29: #{dsan_forward.2} parent=11 // pred_check
        %p290 = pneg %p148
      $region30: #{dsan_forward.2} parent=11 // pred_check_branch
        %292 = sbr.rel (%p290) target = $region32
      $region31: #{dsan_forward.2} parent=11 // pred_region
        _
      $region32: #{dsan_forward.2} parent=11 // pred_fallthru
        _
      // Predicated region
      $region33: #{dsan_forward.2} parent=11 // pred_check
        %p293 = pneg %p169
      $region34: #{dsan_forward.2} parent=11 // pred_check_branch
        %295 = sbr.rel (%p293) target = $region36
      $region35: #{dsan_forward.2} parent=11 // pred_region
        _
      $region36: #{dsan_forward.2} parent=11 // pred_fallthru
        _
      // Predicated region
      $region37: #{dsan_forward.2} parent=11 // pred_check
        %p296 = pneg %p190
      $region38: #{dsan_forward.2} parent=11 // pred_check_branch
        %298 = sbr.rel (%p296) target = $region40
      $region39: #{dsan_forward.2} parent=11 // pred_region
        _
      $region40: #{dsan_forward.2} parent=11 // pred_fallthru
        _
      // Predicated region
      $region41: #{dsan_forward.2} parent=11 // pred_check
        %p299 = pneg %p211
      $region42: #{dsan_forward.2} parent=11 // pred_check_branch
        %301 = sbr.rel (%p299) target = $region44
      $region43: #{dsan_forward.2} parent=11 // pred_region
        _
      $region44: #{dsan_forward.2} parent=11 // pred_fallthru
        _
    $region12: #{dsan_forward.2} parent=5 // pred_fallthru
      _
    %p302 = scmp.lt.s32.totalorder %s17, 2
    // Predicated region
    $region45: #{dsan_forward.2} parent=5 // pred_check
      %p303 = pneg %p302
    $region46: #{dsan_forward.2} parent=5 // pred_check_branch
      %305 = sbr.rel (%p303) target = $region48
    $region47: #{dsan_forward.2} parent=5 // pred_region
      // Predicated region
      $region49: #{dsan_forward.2} parent=47 // pred_check
        %p306 = pneg %p37
      $region50: #{dsan_forward.2} parent=47 // pred_check_branch
        %308 = sbr.rel (%p306) target = $region52
      $region51: #{dsan_forward.2} parent=47 // pred_region
        %p309 = scmp.lt.s32.totalorder %s17, 1
        %s310 = scalar_select %p309, %s17, 1
        %s311 = smul.addr %s310, 18
        %s312 = smul.addr %s311, 4
        %s313 = scalar_lea.vmem %s0, %s312
      $region52: #{dsan_forward.2} parent=47 // pred_fallthru
        _
    $region48: #{dsan_forward.2} parent=5 // pred_fallthru
      _
    %p314 = scmp.le.s32.totalorder 1, %s17
    %p315 = scmp.lt.s32.totalorder %s17, 3
    %p316 = pnand %p314, %p315
    %p317 = pneg %p316
    // Predicated region
    $region53: #{dsan_forward.2} parent=5 // pred_check
      _
    $region54: #{dsan_forward.2} parent=5 // pred_check_branch
      %319 = sbr.rel (%p316) target = $region56
    $region55: #{dsan_forward.2} parent=5 // pred_region
      %s320 = ssub.s32 %s17, 1
      %p321 = scmp.lt.s32.totalorder %s22, 1
      %s322 = scalar_select %p321, %s22, 1
      %s323 = smul.addr %s322, 18
      %s324 = smul.addr %s323, 4
      %s325 = scalar_lea.vmem %s0, %s324
      %p326 = pneg %p43
      %p327 = pneg %p40
      %p328 = pneg %p64
      %p329 = pneg %p61
      %p330 = pneg %p85
      %p331 = pneg %p82
      %p332 = pneg %p106
      %p333 = pneg %p103
      %p334 = pneg %p127
      %p335 = pneg %p124
      %p336 = pneg %p148
      %p337 = pneg %p145
      %p338 = pneg %p169
      %p339 = pneg %p166
      %p340 = pneg %p190
      %p341 = pneg %p187
      %p342 = pneg %p211
      %p343 = pneg %p208
      %p344 = pneg %p237
      %p345 = pneg %p234
      %p346 = scmp.lt.s32.totalorder %s22, 1
      %s347 = scalar_select %p346, %s22, 1
      %s348 = smul.addr %s347, 4
      %s349 = smul.addr %s348, 8
      %s350 = scalar_lea.vmem %s9, %s349
      %p351 = pneg %p263
      %p352 = pneg %p260
      %p353 = scmp.lt.s32.totalorder %s22, 1
      %s354 = scalar_select %p353, %s22, 1
      %s355 = smul.addr %s354, 4
      %s356 = scalar_lea.vmem %s10, %s355
      %p357 = scmp.lt.s32.totalorder %s22, 1
      %s358 = scalar_select %p357, %s22, 1
      %s359 = smul.addr %s358, 18
      %s360 = smul.addr %s359, 4
      %s361 = scalar_lea.vmem %s0, %s360
      %p362 = scmp.lt.s32.totalorder %s22, 1
      %s363 = scalar_select %p362, %s22, 1
      %s364 = smul.addr %s363, 4
      %s365 = smul.addr %s364, 8
      %s366 = scalar_lea.vmem %s9, %s365
      %p367 = scmp.lt.s32.totalorder %s22, 1
      %s368 = scalar_select %p367, %s22, 1
      %s369 = smul.addr %s368, 4
      %s370 = scalar_lea.vmem %s10, %s369
      %v372 = vld [vmem:[%s361] sm:$0xff]
      %v373 = vld [vmem:[%s361 + $0x8] sm:$0xff]
      %v374 = vld [vmem:[%s361 + $0x10] sm:$0xff]
      %v375 = vld [vmem:[%s361 + $0x18] sm:$0xff]
      %v376 = vld [vmem:[%s361 + $0x20] sm:$0xff]
      %v377 = vld [vmem:[%s361 + $0x28] sm:$0xff]
      %v378 = vld [vmem:[%s361 + $0x30] sm:$0xff]
      %v379 = vld [vmem:[%s361 + $0x38] sm:$0xff]
      %v380 = vld [vmem:[%s361 + $0x40] sm:$0xff]
      %v381 = vld [vmem:[%s1] sm:$0xf]
      %v382 = vld [vmem:[%s1 + $0x4] sm:$0xf]
      %v385 = vunpack.c.l.b16 %v381
      %v386 = vunpack.c.l.b16 %v382
      %v387 = vpack.c.b16 %v386, %v385
      %v397 = vunpack.c.l.b16 %v372
      %v398 = vunpack.c.h.b16 %v372
      %v399 = vunpack.c.l.b16 %v373
      %v400 = vunpack.c.h.b16 %v373
      %v401 = vunpack.c.l.b16 %v374
      %v402 = vunpack.c.h.b16 %v374
      %v403 = vunpack.c.l.b16 %v375
      %v404 = vunpack.c.h.b16 %v375
      %v405 = vunpack.c.l.b16 %v376
      %v406 = vunpack.c.h.b16 %v376
      %v407 = vunpack.c.l.b16 %v377
      %v408 = vunpack.c.h.b16 %v377
      %v409 = vunpack.c.l.b16 %v378
      %v410 = vunpack.c.h.b16 %v378
      %v411 = vunpack.c.l.b16 %v379
      %v412 = vunpack.c.h.b16 %v379
      %v413 = vunpack.c.l.b16 %v380
      %v414 = vunpack.c.h.b16 %v380
      %v415 = vpack.c.b16 %v403, %v397
      %v416 = vpack.c.b16 %v404, %v398
      %v417 = vpack.c.b16 %v405, %v399
      %v418 = vpack.c.b16 %v406, %v400
      %v419 = vpack.c.b16 %v407, %v401
      %v420 = vpack.c.b16 %v408, %v402
      %v421 = vpack.c.b16 %v409, %v409
      %v422 = vpack.c.b16 %v410, %v410
      %v423 = vpack.c.b16 %v411, %v411
      %v424 = vpack.c.b16 %v412, %v412
      %v425 = vpack.c.b16 %v413, %v413
      %v426 = vpack.c.b16 %v414, %v414
      %vm433 = vcmask 195584
      %v435 = vsel %vm433, %v387, 0
      %vm437 = vcmask 1043456
      %v439 = vsel %vm437, %v421, 0
      %v442 = vsel %vm437, %v422, 0
      %v445 = vsel %vm437, %v423, 0
      %v448 = vsel %vm437, %v424, 0
      %v451 = vsel %vm437, %v425, 0
      %v454 = vsel %vm437, %v426, 0
      %456 = vmatpush.bf16.msra.mxu0 0
      %457 = vmatpush.bf16.msra.mxu0 0
      %458 = vmatpush.bf16.msra.mxu0 0
      %459 = vmatpush.bf16.msra.mxu0 0
      %460 = vmatpush.bf16.msra.mxu0 0
      %461 = vmatpush.bf16.msra.mxu0 0
      %462 = vmatpush.bf16.msra.mxu0 %v439
      %463 = vmatpush.bf16.msra.mxu0 %v415
      %464 = vmatmul.bf16.gmra.mxu0 %v435
      %v465 = vpop.f32.mrf.mxu0
      %v466 = vadd.f32 0.0, %v465
      %v467 = vpop.f32.mrf.mxu0
      %v468 = vadd.f32 0.0, %v467
      %469 = vdwg.mxu0
      %470 = vmatpush.bf16.msra.mxu0 0
      %471 = vmatpush.bf16.msra.mxu0 0
      %472 = vmatpush.bf16.msra.mxu0 0
      %473 = vmatpush.bf16.msra.mxu0 0
      %474 = vmatpush.bf16.msra.mxu0 0
      %475 = vmatpush.bf16.msra.mxu0 0
      %476 = vmatpush.bf16.msra.mxu0 %v442
      %477 = vmatpush.bf16.msra.mxu0 %v416
      %478 = vmatmul.bf16.gmra.mxu0 %v435
      %v479 = vpop.f32.mrf.mxu0
      %v480 = vadd.f32 0.0, %v479
      %v481 = vpop.f32.mrf.mxu0
      %v482 = vadd.f32 0.0, %v481
      %483 = vdwg.mxu0
      %484 = vmatpush.bf16.msra.mxu0 0
      %485 = vmatpush.bf16.msra.mxu0 0
      %486 = vmatpush.bf16.msra.mxu0 0
      %487 = vmatpush.bf16.msra.mxu0 0
      %488 = vmatpush.bf16.msra.mxu0 0
      %489 = vmatpush.bf16.msra.mxu0 0
      %490 = vmatpush.bf16.msra.mxu0 %v445
      %491 = vmatpush.bf16.msra.mxu0 %v417
      %492 = vmatmul.bf16.gmra.mxu0 %v435
      %v493 = vpop.f32.mrf.mxu0
      %v494 = vadd.f32 0.0, %v493
      %v495 = vpop.f32.mrf.mxu0
      %v496 = vadd.f32 0.0, %v495
      %497 = vdwg.mxu0
      %498 = vmatpush.bf16.msra.mxu0 0
      %499 = vmatpush.bf16.msra.mxu0 0
      %500 = vmatpush.bf16.msra.mxu0 0
      %501 = vmatpush.bf16.msra.mxu0 0
      %502 = vmatpush.bf16.msra.mxu0 0
      %503 = vmatpush.bf16.msra.mxu0 0
      %504 = vmatpush.bf16.msra.mxu0 %v448
      %505 = vmatpush.bf16.msra.mxu0 %v418
      %506 = vmatmul.bf16.gmra.mxu0 %v435
      %v507 = vpop.f32.mrf.mxu0
      %v508 = vadd.f32 0.0, %v507
      %v509 = vpop.f32.mrf.mxu0
      %v510 = vadd.f32 0.0, %v509
      %511 = vdwg.mxu0
      %512 = vmatpush.bf16.msra.mxu0 0
      %513 = vmatpush.bf16.msra.mxu0 0
      %514 = vmatpush.bf16.msra.mxu0 0
      %515 = vmatpush.bf16.msra.mxu0 0
      %516 = vmatpush.bf16.msra.mxu0 0
      %517 = vmatpush.bf16.msra.mxu0 0
      %518 = vmatpush.bf16.msra.mxu0 %v451
      %519 = vmatpush.bf16.msra.mxu0 %v419
      %520 = vmatmul.bf16.gmra.mxu0 %v435
      %v521 = vpop.f32.mrf.mxu0
      %v522 = vadd.f32 0.0, %v521
      %v523 = vpop.f32.mrf.mxu0
      %v524 = vadd.f32 0.0, %v523
      %525 = vdwg.mxu0
      %526 = vmatpush.bf16.msra.mxu0 0
      %527 = vmatpush.bf16.msra.mxu0 0
      %528 = vmatpush.bf16.msra.mxu0 0
      %529 = vmatpush.bf16.msra.mxu0 0
      %530 = vmatpush.bf16.msra.mxu0 0
      %531 = vmatpush.bf16.msra.mxu0 0
      %532 = vmatpush.bf16.msra.mxu0 %v454
      %533 = vmatpush.bf16.msra.mxu0 %v420
      %534 = vmatmul.bf16.gmra.mxu0 %v435
      %v535 = vpop.f32.mrf.mxu0
      %v536 = vadd.f32 0.0, %v535
      %v537 = vpop.f32.mrf.mxu0
      %v538 = vadd.f32 0.0, %v537
      %539 = vdwg.mxu0
      %v540 = vld [vmem:[%s2] sm:$0xff]
      %v541 = vld [vmem:[%s2 + $0x8] sm:$0xff]
      %543 = vset.pattern.permute.xlu0 0
      %544 = vperm.xlu0 %543, %v540
      %v545 = vpop.permute.xlu0 %544
      %548 = vset.pattern.permute.xlu0 0
      %549 = vperm.xlu0 %548, %v541
      %v550 = vpop.permute.xlu0 %549
      %v552 = vmul.f32 %v545, %v466
      %v553 = vmul.f32 %v545, %v480
      %v554 = vmul.f32 %v545, %v494
      %v555 = vmul.f32 %v545, %v508
      %v556 = vmul.f32 %v550, %v468
      %v557 = vmul.f32 %v550, %v482
      %v558 = vmul.f32 %v550, %v496
      %v559 = vmul.f32 %v550, %v510
      %v560 = vadd.f32 %v552, 0.0
      %v561 = vadd.f32 %v553, 0.0
      %v562 = vadd.f32 %v554, 0.0
      %v563 = vadd.f32 %v555, 0.0
      %v564 = vadd.f32 %v556, 0.0
      %v565 = vadd.f32 %v557, 0.0
      %v566 = vadd.f32 %v558, 0.0
      %v567 = vadd.f32 %v559, 0.0
      %568 = vset.pattern.permute.xlu0 1
      %569 = vperm.xlu0 %568, %v540
      %v570 = vpop.permute.xlu0 %569
      %572 = vset.pattern.permute.xlu0 1
      %573 = vperm.xlu0 %572, %v541
      %v574 = vpop.permute.xlu0 %573
      %v576 = vmul.f32 %v570, %v466
      %v577 = vmul.f32 %v570, %v480
      %v578 = vmul.f32 %v570, %v494
      %v579 = vmul.f32 %v570, %v508
      %v580 = vmul.f32 %v570, %v522
      %v581 = vmul.f32 %v574, %v468
      %v582 = vmul.f32 %v574, %v482
      %v583 = vmul.f32 %v574, %v496
      %v584 = vmul.f32 %v574, %v510
      %v585 = vmul.f32 %v574, %v524
      %596 = vrot.lane.b32.xlu0 %v576, 120
      %v597 = vpop.permute.xlu0 %596
      %598 = vrot.lane.b32.xlu0 %v577, 120
      %v599 = vpop.permute.xlu0 %598
      %600 = vrot.lane.b32.xlu0 %v578, 120
      %v601 = vpop.permute.xlu0 %600
      %602 = vrot.lane.b32.xlu0 %v579, 120
      %v603 = vpop.permute.xlu0 %602
      %604 = vrot.lane.b32.xlu0 %v580, 120
      %v605 = vpop.permute.xlu0 %604
      %606 = vrot.lane.b32.xlu0 %v581, 120
      %v607 = vpop.permute.xlu0 %606
      %608 = vrot.lane.b32.xlu0 %v582, 120
      %v609 = vpop.permute.xlu0 %608
      %610 = vrot.lane.b32.xlu0 %v583, 120
      %v611 = vpop.permute.xlu0 %610
      %612 = vrot.lane.b32.xlu0 %v584, 120
      %v613 = vpop.permute.xlu0 %612
      %614 = vrot.lane.b32.xlu0 %v585, 120
      %v615 = vpop.permute.xlu0 %614
      %vm616 = vcmask 982016
      %v617 = vsel %vm616, %v597, %v599
      %v618 = vsel %vm616, %v599, %v601
      %v619 = vsel %vm616, %v601, %v603
      %v620 = vsel %vm616, %v603, %v605
      %v621 = vsel %vm616, %v607, %v609
      %v622 = vsel %vm616, %v609, %v611
      %v623 = vsel %vm616, %v611, %v613
      %v624 = vsel %vm616, %v613, %v615
      %v633 = vadd.f32 %v560, %v617
      %v634 = vadd.f32 %v561, %v618
      %v635 = vadd.f32 %v562, %v619
      %v636 = vadd.f32 %v563, %v620
      %v637 = vadd.f32 %v564, %v621
      %v638 = vadd.f32 %v565, %v622
      %v639 = vadd.f32 %v566, %v623
      %v640 = vadd.f32 %v567, %v624
      %641 = vset.pattern.permute.xlu0 2
      %642 = vperm.xlu0 %641, %v540
      %v643 = vpop.permute.xlu0 %642
      %645 = vset.pattern.permute.xlu0 2
      %646 = vperm.xlu0 %645, %v541
      %v647 = vpop.permute.xlu0 %646
      %v649 = vmul.f32 %v643, %v466
      %v650 = vmul.f32 %v643, %v480
      %v651 = vmul.f32 %v643, %v494
      %v652 = vmul.f32 %v643, %v508
      %v653 = vmul.f32 %v643, %v522
      %v654 = vmul.f32 %v647, %v468
      %v655 = vmul.f32 %v647, %v482
      %v656 = vmul.f32 %v647, %v496
      %v657 = vmul.f32 %v647, %v510
      %v658 = vmul.f32 %v647, %v524
      %669 = vrot.lane.b32.xlu0 %v649, 112
      %v670 = vpop.permute.xlu0 %669
      %671 = vrot.lane.b32.xlu0 %v650, 112
      %v672 = vpop.permute.xlu0 %671
      %673 = vrot.lane.b32.xlu0 %v651, 112
      %v674 = vpop.permute.xlu0 %673
      %675 = vrot.lane.b32.xlu0 %v652, 112
      %v676 = vpop.permute.xlu0 %675
      %677 = vrot.lane.b32.xlu0 %v653, 112
      %v678 = vpop.permute.xlu0 %677
      %679 = vrot.lane.b32.xlu0 %v654, 112
      %v680 = vpop.permute.xlu0 %679
      %681 = vrot.lane.b32.xlu0 %v655, 112
      %v682 = vpop.permute.xlu0 %681
      %683 = vrot.lane.b32.xlu0 %v656, 112
      %v684 = vpop.permute.xlu0 %683
      %685 = vrot.lane.b32.xlu0 %v657, 112
      %v686 = vpop.permute.xlu0 %685
      %687 = vrot.lane.b32.xlu0 %v658, 112
      %v688 = vpop.permute.xlu0 %687
      %vm689 = vcmask 916480
      %v690 = vsel %vm689, %v670, %v672
      %v691 = vsel %vm689, %v672, %v674
      %v692 = vsel %vm689, %v674, %v676
      %v693 = vsel %vm689, %v676, %v678
      %v694 = vsel %vm689, %v680, %v682
      %v695 = vsel %vm689, %v682, %v684
      %v696 = vsel %vm689, %v684, %v686
      %v697 = vsel %vm689, %v686, %v688
      %v706 = vadd.f32 %v633, %v690
      %v707 = vadd.f32 %v634, %v691
      %v708 = vadd.f32 %v635, %v692
      %v709 = vadd.f32 %v636, %v693
      %v710 = vadd.f32 %v637, %v694
      %v711 = vadd.f32 %v638, %v695
      %v712 = vadd.f32 %v639, %v696
      %v713 = vadd.f32 %v640, %v697
      %714 = vset.pattern.permute.xlu0 3
      %715 = vperm.xlu0 %714, %v540
      %v716 = vpop.permute.xlu0 %715
      %718 = vset.pattern.permute.xlu0 3
      %719 = vperm.xlu0 %718, %v541
      %v720 = vpop.permute.xlu0 %719
      %v722 = vmul.f32 %v716, %v466
      %v723 = vmul.f32 %v716, %v480
      %v724 = vmul.f32 %v716, %v494
      %v725 = vmul.f32 %v716, %v508
      %v726 = vmul.f32 %v716, %v522
      %v727 = vmul.f32 %v720, %v468
      %v728 = vmul.f32 %v720, %v482
      %v729 = vmul.f32 %v720, %v496
      %v730 = vmul.f32 %v720, %v510
      %v731 = vmul.f32 %v720, %v524
      %742 = vrot.lane.b32.xlu0 %v722, 104
      %v743 = vpop.permute.xlu0 %742
      %744 = vrot.lane.b32.xlu0 %v723, 104
      %v745 = vpop.permute.xlu0 %744
      %746 = vrot.lane.b32.xlu0 %v724, 104
      %v747 = vpop.permute.xlu0 %746
      %748 = vrot.lane.b32.xlu0 %v725, 104
      %v749 = vpop.permute.xlu0 %748
      %750 = vrot.lane.b32.xlu0 %v726, 104
      %v751 = vpop.permute.xlu0 %750
      %752 = vrot.lane.b32.xlu0 %v727, 104
      %v753 = vpop.permute.xlu0 %752
      %754 = vrot.lane.b32.xlu0 %v728, 104
      %v755 = vpop.permute.xlu0 %754
      %756 = vrot.lane.b32.xlu0 %v729, 104
      %v757 = vpop.permute.xlu0 %756
      %758 = vrot.lane.b32.xlu0 %v730, 104
      %v759 = vpop.permute.xlu0 %758
      %760 = vrot.lane.b32.xlu0 %v731, 104
      %v761 = vpop.permute.xlu0 %760
      %vm762 = vcmask 850944
      %v763 = vsel %vm762, %v743, %v745
      %v764 = vsel %vm762, %v745, %v747
      %v765 = vsel %vm762, %v747, %v749
      %v766 = vsel %vm762, %v749, %v751
      %v767 = vsel %vm762, %v753, %v755
      %v768 = vsel %vm762, %v755, %v757
      %v769 = vsel %vm762, %v757, %v759
      %v770 = vsel %vm762, %v759, %v761
      %v779 = vadd.f32 %v706, %v763
      %v780 = vadd.f32 %v707, %v764
      %v781 = vadd.f32 %v708, %v765
      %v782 = vadd.f32 %v709, %v766
      %v783 = vadd.f32 %v710, %v767
      %v784 = vadd.f32 %v711, %v768
      %v785 = vadd.f32 %v712, %v769
      %v786 = vadd.f32 %v713, %v770
      %787 = vset.pattern.permute.xlu0 4
      %788 = vperm.xlu0 %787, %v540
      %v789 = vpop.permute.xlu0 %788
      %791 = vset.pattern.permute.xlu0 4
      %792 = vperm.xlu0 %791, %v541
      %v793 = vpop.permute.xlu0 %792
      %v795 = vmul.f32 %v789, %v466
      %v796 = vmul.f32 %v789, %v480
      %v797 = vmul.f32 %v789, %v494
      %v798 = vmul.f32 %v789, %v508
      %v799 = vmul.f32 %v789, %v522
      %v800 = vmul.f32 %v793, %v468
      %v801 = vmul.f32 %v793, %v482
      %v802 = vmul.f32 %v793, %v496
      %v803 = vmul.f32 %v793, %v510
      %v804 = vmul.f32 %v793, %v524
      %815 = vrot.lane.b32.xlu0 %v795, 96
      %v816 = vpop.permute.xlu0 %815
      %817 = vrot.lane.b32.xlu0 %v796, 96
      %v818 = vpop.permute.xlu0 %817
      %819 = vrot.lane.b32.xlu0 %v797, 96
      %v820 = vpop.permute.xlu0 %819
      %821 = vrot.lane.b32.xlu0 %v798, 96
      %v822 = vpop.permute.xlu0 %821
      %823 = vrot.lane.b32.xlu0 %v799, 96
      %v824 = vpop.permute.xlu0 %823
      %825 = vrot.lane.b32.xlu0 %v800, 96
      %v826 = vpop.permute.xlu0 %825
      %827 = vrot.lane.b32.xlu0 %v801, 96
      %v828 = vpop.permute.xlu0 %827
      %829 = vrot.lane.b32.xlu0 %v802, 96
      %v830 = vpop.permute.xlu0 %829
      %831 = vrot.lane.b32.xlu0 %v803, 96
      %v832 = vpop.permute.xlu0 %831
      %833 = vrot.lane.b32.xlu0 %v804, 96
      %v834 = vpop.permute.xlu0 %833
      %vm835 = vcmask 785408
      %v836 = vsel %vm835, %v816, %v818
      %v837 = vsel %vm835, %v818, %v820
      %v838 = vsel %vm835, %v820, %v822
      %v839 = vsel %vm835, %v822, %v824
      %v840 = vsel %vm835, %v826, %v828
      %v841 = vsel %vm835, %v828, %v830
      %v842 = vsel %vm835, %v830, %v832
      %v843 = vsel %vm835, %v832, %v834
      %v852 = vadd.f32 %v779, %v836
      %v853 = vadd.f32 %v780, %v837
      %v854 = vadd.f32 %v781, %v838
      %v855 = vadd.f32 %v782, %v839
      %v856 = vadd.f32 %v783, %v840
      %v857 = vadd.f32 %v784, %v841
      %v858 = vadd.f32 %v785, %v842
      %v859 = vadd.f32 %v786, %v843
      %860 = vset.pattern.permute.xlu0 5
      %861 = vperm.xlu0 %860, %v540
      %v862 = vpop.permute.xlu0 %861
      %864 = vset.pattern.permute.xlu0 5
      %865 = vperm.xlu0 %864, %v541
      %v866 = vpop.permute.xlu0 %865
      %v868 = vmul.f32 %v862, %v466
      %v869 = vmul.f32 %v862, %v480
      %v870 = vmul.f32 %v862, %v494
      %v871 = vmul.f32 %v862, %v508
      %v872 = vmul.f32 %v862, %v522
      %v873 = vmul.f32 %v866, %v468
      %v874 = vmul.f32 %v866, %v482
      %v875 = vmul.f32 %v866, %v496
      %v876 = vmul.f32 %v866, %v510
      %v877 = vmul.f32 %v866, %v524
      %888 = vrot.lane.b32.xlu0 %v868, 88
      %v889 = vpop.permute.xlu0 %888
      %890 = vrot.lane.b32.xlu0 %v869, 88
      %v891 = vpop.permute.xlu0 %890
      %892 = vrot.lane.b32.xlu0 %v870, 88
      %v893 = vpop.permute.xlu0 %892
      %894 = vrot.lane.b32.xlu0 %v871, 88
      %v895 = vpop.permute.xlu0 %894
      %896 = vrot.lane.b32.xlu0 %v872, 88
      %v897 = vpop.permute.xlu0 %896
      %898 = vrot.lane.b32.xlu0 %v873, 88
      %v899 = vpop.permute.xlu0 %898
      %900 = vrot.lane.b32.xlu0 %v874, 88
      %v901 = vpop.permute.xlu0 %900
      %902 = vrot.lane.b32.xlu0 %v875, 88
      %v903 = vpop.permute.xlu0 %902
      %904 = vrot.lane.b32.xlu0 %v876, 88
      %v905 = vpop.permute.xlu0 %904
      %906 = vrot.lane.b32.xlu0 %v877, 88
      %v907 = vpop.permute.xlu0 %906
      %vm908 = vcmask 719872
      %v909 = vsel %vm908, %v889, %v891
      %v910 = vsel %vm908, %v891, %v893
      %v911 = vsel %vm908, %v893, %v895
      %v912 = vsel %vm908, %v895, %v897
      %v913 = vsel %vm908, %v899, %v901
      %v914 = vsel %vm908, %v901, %v903
      %v915 = vsel %vm908, %v903, %v905
      %v916 = vsel %vm908, %v905, %v907
      %v925 = vadd.f32 %v852, %v909
      %v926 = vadd.f32 %v853, %v910
      %v927 = vadd.f32 %v854, %v911
      %v928 = vadd.f32 %v855, %v912
      %v929 = vadd.f32 %v856, %v913
      %v930 = vadd.f32 %v857, %v914
      %v931 = vadd.f32 %v858, %v915
      %v932 = vadd.f32 %v859, %v916
      %933 = vset.pattern.permute.xlu0 6
      %934 = vperm.xlu0 %933, %v540
      %v935 = vpop.permute.xlu0 %934
      %937 = vset.pattern.permute.xlu0 6
      %938 = vperm.xlu0 %937, %v541
      %v939 = vpop.permute.xlu0 %938
      %v941 = vmul.f32 %v935, %v466
      %v942 = vmul.f32 %v935, %v480
      %v943 = vmul.f32 %v935, %v494
      %v944 = vmul.f32 %v935, %v508
      %v945 = vmul.f32 %v935, %v522
      %v946 = vmul.f32 %v939, %v468
      %v947 = vmul.f32 %v939, %v482
      %v948 = vmul.f32 %v939, %v496
      %v949 = vmul.f32 %v939, %v510
      %v950 = vmul.f32 %v939, %v524
      %961 = vrot.lane.b32.xlu0 %v941, 80
      %v962 = vpop.permute.xlu0 %961
      %963 = vrot.lane.b32.xlu0 %v942, 80
      %v964 = vpop.permute.xlu0 %963
      %965 = vrot.lane.b32.xlu0 %v943, 80
      %v966 = vpop.permute.xlu0 %965
      %967 = vrot.lane.b32.xlu0 %v944, 80
      %v968 = vpop.permute.xlu0 %967
      %969 = vrot.lane.b32.xlu0 %v945, 80
      %v970 = vpop.permute.xlu0 %969
      %971 = vrot.lane.b32.xlu0 %v946, 80
      %v972 = vpop.permute.xlu0 %971
      %973 = vrot.lane.b32.xlu0 %v947, 80
      %v974 = vpop.permute.xlu0 %973
      %975 = vrot.lane.b32.xlu0 %v948, 80
      %v976 = vpop.permute.xlu0 %975
      %977 = vrot.lane.b32.xlu0 %v949, 80
      %v978 = vpop.permute.xlu0 %977
      %979 = vrot.lane.b32.xlu0 %v950, 80
      %v980 = vpop.permute.xlu0 %979
      %vm981 = vcmask 654336
      %v982 = vsel %vm981, %v962, %v964
      %v983 = vsel %vm981, %v964, %v966
      %v984 = vsel %vm981, %v966, %v968
      %v985 = vsel %vm981, %v968, %v970
      %v986 = vsel %vm981, %v972, %v974
      %v987 = vsel %vm981, %v974, %v976
      %v988 = vsel %vm981, %v976, %v978
      %v989 = vsel %vm981, %v978, %v980
      %v998 = vadd.f32 %v925, %v982
      %v999 = vadd.f32 %v926, %v983
      %v1000 = vadd.f32 %v927, %v984
      %v1001 = vadd.f32 %v928, %v985
      %v1002 = vadd.f32 %v929, %v986
      %v1003 = vadd.f32 %v930, %v987
      %v1004 = vadd.f32 %v931, %v988
      %v1005 = vadd.f32 %v932, %v989
      %1006 = vset.pattern.permute.xlu0 7
      %1007 = vperm.xlu0 %1006, %v540
      %v1008 = vpop.permute.xlu0 %1007
      %1010 = vset.pattern.permute.xlu0 7
      %1011 = vperm.xlu0 %1010, %v541
      %v1012 = vpop.permute.xlu0 %1011
      %v1014 = vmul.f32 %v1008, %v466
      %v1015 = vmul.f32 %v1008, %v480
      %v1016 = vmul.f32 %v1008, %v494
      %v1017 = vmul.f32 %v1008, %v508
      %v1018 = vmul.f32 %v1008, %v522
      %v1019 = vmul.f32 %v1012, %v468
      %v1020 = vmul.f32 %v1012, %v482
      %v1021 = vmul.f32 %v1012, %v496
      %v1022 = vmul.f32 %v1012, %v510
      %v1023 = vmul.f32 %v1012, %v524
      %1034 = vrot.lane.b32.xlu0 %v1014, 72
      %v1035 = vpop.permute.xlu0 %1034
      %1036 = vrot.lane.b32.xlu0 %v1015, 72
      %v1037 = vpop.permute.xlu0 %1036
      %1038 = vrot.lane.b32.xlu0 %v1016, 72
      %v1039 = vpop.permute.xlu0 %1038
      %1040 = vrot.lane.b32.xlu0 %v1017, 72
      %v1041 = vpop.permute.xlu0 %1040
      %1042 = vrot.lane.b32.xlu0 %v1018, 72
      %v1043 = vpop.permute.xlu0 %1042
      %1044 = vrot.lane.b32.xlu0 %v1019, 72
      %v1045 = vpop.permute.xlu0 %1044
      %1046 = vrot.lane.b32.xlu0 %v1020, 72
      %v1047 = vpop.permute.xlu0 %1046
      %1048 = vrot.lane.b32.xlu0 %v1021, 72
      %v1049 = vpop.permute.xlu0 %1048
      %1050 = vrot.lane.b32.xlu0 %v1022, 72
      %v1051 = vpop.permute.xlu0 %1050
      %1052 = vrot.lane.b32.xlu0 %v1023, 72
      %v1053 = vpop.permute.xlu0 %1052
      %vm1054 = vcmask 588800
      %v1055 = vsel %vm1054, %v1035, %v1037
      %v1056 = vsel %vm1054, %v1037, %v1039
      %v1057 = vsel %vm1054, %v1039, %v1041
      %v1058 = vsel %vm1054, %v1041, %v1043
      %v1059 = vsel %vm1054, %v1045, %v1047
      %v1060 = vsel %vm1054, %v1047, %v1049
      %v1061 = vsel %vm1054, %v1049, %v1051
      %v1062 = vsel %vm1054, %v1051, %v1053
      %v1071 = vadd.f32 %v998, %v1055
      %v1072 = vadd.f32 %v999, %v1056
      %v1073 = vadd.f32 %v1000, %v1057
      %v1074 = vadd.f32 %v1001, %v1058
      %v1075 = vadd.f32 %v1002, %v1059
      %v1076 = vadd.f32 %v1003, %v1060
      %v1077 = vadd.f32 %v1004, %v1061
      %v1078 = vadd.f32 %v1005, %v1062
      %1079 = vset.pattern.permute.xlu0 8
      %1080 = vperm.xlu0 %1079, %v540
      %v1081 = vpop.permute.xlu0 %1080
      %1083 = vset.pattern.permute.xlu0 8
      %1084 = vperm.xlu0 %1083, %v541
      %v1085 = vpop.permute.xlu0 %1084
      %v1087 = vmul.f32 %v1081, %v466
      %v1088 = vmul.f32 %v1081, %v480
      %v1089 = vmul.f32 %v1081, %v494
      %v1090 = vmul.f32 %v1081, %v508
      %v1091 = vmul.f32 %v1081, %v522
      %v1092 = vmul.f32 %v1085, %v468
      %v1093 = vmul.f32 %v1085, %v482
      %v1094 = vmul.f32 %v1085, %v496
      %v1095 = vmul.f32 %v1085, %v510
      %v1096 = vmul.f32 %v1085, %v524
      %1107 = vrot.lane.b32.xlu0 %v1087, 64
      %v1108 = vpop.permute.xlu0 %1107
      %1109 = vrot.lane.b32.xlu0 %v1088, 64
      %v1110 = vpop.permute.xlu0 %1109
      %1111 = vrot.lane.b32.xlu0 %v1089, 64
      %v1112 = vpop.permute.xlu0 %1111
      %1113 = vrot.lane.b32.xlu0 %v1090, 64
      %v1114 = vpop.permute.xlu0 %1113
      %1115 = vrot.lane.b32.xlu0 %v1091, 64
      %v1116 = vpop.permute.xlu0 %1115
      %1117 = vrot.lane.b32.xlu0 %v1092, 64
      %v1118 = vpop.permute.xlu0 %1117
      %1119 = vrot.lane.b32.xlu0 %v1093, 64
      %v1120 = vpop.permute.xlu0 %1119
      %1121 = vrot.lane.b32.xlu0 %v1094, 64
      %v1122 = vpop.permute.xlu0 %1121
      %1123 = vrot.lane.b32.xlu0 %v1095, 64
      %v1124 = vpop.permute.xlu0 %1123
      %1125 = vrot.lane.b32.xlu0 %v1096, 64
      %v1126 = vpop.permute.xlu0 %1125
      %vm1127 = vcmask 523264
      %v1128 = vsel %vm1127, %v1108, %v1110
      %v1129 = vsel %vm1127, %v1110, %v1112
      %v1130 = vsel %vm1127, %v1112, %v1114
      %v1131 = vsel %vm1127, %v1114, %v1116
      %v1132 = vsel %vm1127, %v1118, %v1120
      %v1133 = vsel %vm1127, %v1120, %v1122
      %v1134 = vsel %vm1127, %v1122, %v1124
      %v1135 = vsel %vm1127, %v1124, %v1126
      %v1144 = vadd.f32 %v1071, %v1128
      %v1145 = vadd.f32 %v1072, %v1129
      %v1146 = vadd.f32 %v1073, %v1130
      %v1147 = vadd.f32 %v1074, %v1131
      %v1148 = vadd.f32 %v1075, %v1132
      %v1149 = vadd.f32 %v1076, %v1133
      %v1150 = vadd.f32 %v1077, %v1134
      %v1151 = vadd.f32 %v1078, %v1135
      %1152 = vset.pattern.permute.xlu0 9
      %1153 = vperm.xlu0 %1152, %v540
      %v1154 = vpop.permute.xlu0 %1153
      %1156 = vset.pattern.permute.xlu0 9
      %1157 = vperm.xlu0 %1156, %v541
      %v1158 = vpop.permute.xlu0 %1157
      %v1160 = vmul.f32 %v1154, %v466
      %v1161 = vmul.f32 %v1154, %v480
      %v1162 = vmul.f32 %v1154, %v494
      %v1163 = vmul.f32 %v1154, %v508
      %v1164 = vmul.f32 %v1154, %v522
      %v1165 = vmul.f32 %v1158, %v468
      %v1166 = vmul.f32 %v1158, %v482
      %v1167 = vmul.f32 %v1158, %v496
      %v1168 = vmul.f32 %v1158, %v510
      %v1169 = vmul.f32 %v1158, %v524
      %1180 = vrot.lane.b32.xlu0 %v1160, 56
      %v1181 = vpop.permute.xlu0 %1180
      %1182 = vrot.lane.b32.xlu0 %v1161, 56
      %v1183 = vpop.permute.xlu0 %1182
      %1184 = vrot.lane.b32.xlu0 %v1162, 56
      %v1185 = vpop.permute.xlu0 %1184
      %1186 = vrot.lane.b32.xlu0 %v1163, 56
      %v1187 = vpop.permute.xlu0 %1186
      %1188 = vrot.lane.b32.xlu0 %v1164, 56
      %v1189 = vpop.permute.xlu0 %1188
      %1190 = vrot.lane.b32.xlu0 %v1165, 56
      %v1191 = vpop.permute.xlu0 %1190
      %1192 = vrot.lane.b32.xlu0 %v1166, 56
      %v1193 = vpop.permute.xlu0 %1192
      %1194 = vrot.lane.b32.xlu0 %v1167, 56
      %v1195 = vpop.permute.xlu0 %1194
      %1196 = vrot.lane.b32.xlu0 %v1168, 56
      %v1197 = vpop.permute.xlu0 %1196
      %1198 = vrot.lane.b32.xlu0 %v1169, 56
      %v1199 = vpop.permute.xlu0 %1198
      %vm1200 = vcmask 457728
      %v1201 = vsel %vm1200, %v1181, %v1183
      %v1202 = vsel %vm1200, %v1183, %v1185
      %v1203 = vsel %vm1200, %v1185, %v1187
      %v1204 = vsel %vm1200, %v1187, %v1189
      %v1205 = vsel %vm1200, %v1191, %v1193
      %v1206 = vsel %vm1200, %v1193, %v1195
      %v1207 = vsel %vm1200, %v1195, %v1197
      %v1208 = vsel %vm1200, %v1197, %v1199
      %v1217 = vadd.f32 %v1144, %v1201
      %v1218 = vadd.f32 %v1145, %v1202
      %v1219 = vadd.f32 %v1146, %v1203
      %v1220 = vadd.f32 %v1147, %v1204
      %v1221 = vadd.f32 %v1148, %v1205
      %v1222 = vadd.f32 %v1149, %v1206
      %v1223 = vadd.f32 %v1150, %v1207
      %v1224 = vadd.f32 %v1151, %v1208
      %1225 = vset.pattern.permute.xlu0 10
      %1226 = vperm.xlu0 %1225, %v540
      %v1227 = vpop.permute.xlu0 %1226
      %1229 = vset.pattern.permute.xlu0 10
      %1230 = vperm.xlu0 %1229, %v541
      %v1231 = vpop.permute.xlu0 %1230
      %v1233 = vmul.f32 %v1227, %v466
      %v1234 = vmul.f32 %v1227, %v480
      %v1235 = vmul.f32 %v1227, %v494
      %v1236 = vmul.f32 %v1227, %v508
      %v1237 = vmul.f32 %v1227, %v522
      %v1238 = vmul.f32 %v1231, %v468
      %v1239 = vmul.f32 %v1231, %v482
      %v1240 = vmul.f32 %v1231, %v496
      %v1241 = vmul.f32 %v1231, %v510
      %v1242 = vmul.f32 %v1231, %v524
      %1253 = vrot.lane.b32.xlu0 %v1233, 48
      %v1254 = vpop.permute.xlu0 %1253
      %1255 = vrot.lane.b32.xlu0 %v1234, 48
      %v1256 = vpop.permute.xlu0 %1255
      %1257 = vrot.lane.b32.xlu0 %v1235, 48
      %v1258 = vpop.permute.xlu0 %1257
      %1259 = vrot.lane.b32.xlu0 %v1236, 48
      %v1260 = vpop.permute.xlu0 %1259
      %1261 = vrot.lane.b32.xlu0 %v1237, 48
      %v1262 = vpop.permute.xlu0 %1261
      %1263 = vrot.lane.b32.xlu0 %v1238, 48
      %v1264 = vpop.permute.xlu0 %1263
      %1265 = vrot.lane.b32.xlu0 %v1239, 48
      %v1266 = vpop.permute.xlu0 %1265
      %1267 = vrot.lane.b32.xlu0 %v1240, 48
      %v1268 = vpop.permute.xlu0 %1267
      %1269 = vrot.lane.b32.xlu0 %v1241, 48
      %v1270 = vpop.permute.xlu0 %1269
      %1271 = vrot.lane.b32.xlu0 %v1242, 48
      %v1272 = vpop.permute.xlu0 %1271
      %vm1273 = vcmask 392192
      %v1274 = vsel %vm1273, %v1254, %v1256
      %v1275 = vsel %vm1273, %v1256, %v1258
      %v1276 = vsel %vm1273, %v1258, %v1260
      %v1277 = vsel %vm1273, %v1260, %v1262
      %v1278 = vsel %vm1273, %v1264, %v1266
      %v1279 = vsel %vm1273, %v1266, %v1268
      %v1280 = vsel %vm1273, %v1268, %v1270
      %v1281 = vsel %vm1273, %v1270, %v1272
      %v1290 = vadd.f32 %v1217, %v1274
      %v1291 = vadd.f32 %v1218, %v1275
      %v1292 = vadd.f32 %v1219, %v1276
      %v1293 = vadd.f32 %v1220, %v1277
      %v1294 = vadd.f32 %v1221, %v1278
      %v1295 = vadd.f32 %v1222, %v1279
      %v1296 = vadd.f32 %v1223, %v1280
      %v1297 = vadd.f32 %v1224, %v1281
      %1298 = vset.pattern.permute.xlu0 11
      %1299 = vperm.xlu0 %1298, %v540
      %v1300 = vpop.permute.xlu0 %1299
      %1302 = vset.pattern.permute.xlu0 11
      %1303 = vperm.xlu0 %1302, %v541
      %v1304 = vpop.permute.xlu0 %1303
      %v1306 = vmul.f32 %v1300, %v466
      %v1307 = vmul.f32 %v1300, %v480
      %v1308 = vmul.f32 %v1300, %v494
      %v1309 = vmul.f32 %v1300, %v508
      %v1310 = vmul.f32 %v1300, %v522
      %v1311 = vmul.f32 %v1304, %v468
      %v1312 = vmul.f32 %v1304, %v482
      %v1313 = vmul.f32 %v1304, %v496
      %v1314 = vmul.f32 %v1304, %v510
      %v1315 = vmul.f32 %v1304, %v524
      %1326 = vrot.lane.b32.xlu0 %v1306, 40
      %v1327 = vpop.permute.xlu0 %1326
      %1328 = vrot.lane.b32.xlu0 %v1307, 40
      %v1329 = vpop.permute.xlu0 %1328
      %1330 = vrot.lane.b32.xlu0 %v1308, 40
      %v1331 = vpop.permute.xlu0 %1330
      %1332 = vrot.lane.b32.xlu0 %v1309, 40
      %v1333 = vpop.permute.xlu0 %1332
      %1334 = vrot.lane.b32.xlu0 %v1310, 40
      %v1335 = vpop.permute.xlu0 %1334
      %1336 = vrot.lane.b32.xlu0 %v1311, 40
      %v1337 = vpop.permute.xlu0 %1336
      %1338 = vrot.lane.b32.xlu0 %v1312, 40
      %v1339 = vpop.permute.xlu0 %1338
      %1340 = vrot.lane.b32.xlu0 %v1313, 40
      %v1341 = vpop.permute.xlu0 %1340
      %1342 = vrot.lane.b32.xlu0 %v1314, 40
      %v1343 = vpop.permute.xlu0 %1342
      %1344 = vrot.lane.b32.xlu0 %v1315, 40
      %v1345 = vpop.permute.xlu0 %1344
      %vm1346 = vcmask 326656
      %v1347 = vsel %vm1346, %v1327, %v1329
      %v1348 = vsel %vm1346, %v1329, %v1331
      %v1349 = vsel %vm1346, %v1331, %v1333
      %v1350 = vsel %vm1346, %v1333, %v1335
      %v1351 = vsel %vm1346, %v1337, %v1339
      %v1352 = vsel %vm1346, %v1339, %v1341
      %v1353 = vsel %vm1346, %v1341, %v1343
      %v1354 = vsel %vm1346, %v1343, %v1345
      %v1363 = vadd.f32 %v1290, %v1347
      %v1364 = vadd.f32 %v1291, %v1348
      %v1365 = vadd.f32 %v1292, %v1349
      %v1366 = vadd.f32 %v1293, %v1350
      %v1367 = vadd.f32 %v1294, %v1351
      %v1368 = vadd.f32 %v1295, %v1352
      %v1369 = vadd.f32 %v1296, %v1353
      %v1370 = vadd.f32 %v1297, %v1354
      %1371 = vset.pattern.permute.xlu0 12
      %1372 = vperm.xlu0 %1371, %v540
      %v1373 = vpop.permute.xlu0 %1372
      %1375 = vset.pattern.permute.xlu0 12
      %1376 = vperm.xlu0 %1375, %v541
      %v1377 = vpop.permute.xlu0 %1376
      %v1379 = vmul.f32 %v1373, %v466
      %v1380 = vmul.f32 %v1373, %v480
      %v1381 = vmul.f32 %v1373, %v494
      %v1382 = vmul.f32 %v1373, %v508
      %v1383 = vmul.f32 %v1373, %v522
      %v1384 = vmul.f32 %v1377, %v468
      %v1385 = vmul.f32 %v1377, %v482
      %v1386 = vmul.f32 %v1377, %v496
      %v1387 = vmul.f32 %v1377, %v510
      %v1388 = vmul.f32 %v1377, %v524
      %1399 = vrot.lane.b32.xlu0 %v1379, 32
      %v1400 = vpop.permute.xlu0 %1399
      %1401 = vrot.lane.b32.xlu0 %v1380, 32
      %v1402 = vpop.permute.xlu0 %1401
      %1403 = vrot.lane.b32.xlu0 %v1381, 32
      %v1404 = vpop.permute.xlu0 %1403
      %1405 = vrot.lane.b32.xlu0 %v1382, 32
      %v1406 = vpop.permute.xlu0 %1405
      %1407 = vrot.lane.b32.xlu0 %v1383, 32
      %v1408 = vpop.permute.xlu0 %1407
      %1409 = vrot.lane.b32.xlu0 %v1384, 32
      %v1410 = vpop.permute.xlu0 %1409
      %1411 = vrot.lane.b32.xlu0 %v1385, 32
      %v1412 = vpop.permute.xlu0 %1411
      %1413 = vrot.lane.b32.xlu0 %v1386, 32
      %v1414 = vpop.permute.xlu0 %1413
      %1415 = vrot.lane.b32.xlu0 %v1387, 32
      %v1416 = vpop.permute.xlu0 %1415
      %1417 = vrot.lane.b32.xlu0 %v1388, 32
      %v1418 = vpop.permute.xlu0 %1417
      %vm1419 = vcmask 261120
      %v1420 = vsel %vm1419, %v1400, %v1402
      %v1421 = vsel %vm1419, %v1402, %v1404
      %v1422 = vsel %vm1419, %v1404, %v1406
      %v1423 = vsel %vm1419, %v1406, %v1408
      %v1424 = vsel %vm1419, %v1410, %v1412
      %v1425 = vsel %vm1419, %v1412, %v1414
      %v1426 = vsel %vm1419, %v1414, %v1416
      %v1427 = vsel %vm1419, %v1416, %v1418
      %v1436 = vadd.f32 %v1363, %v1420
      %v1437 = vadd.f32 %v1364, %v1421
      %v1438 = vadd.f32 %v1365, %v1422
      %v1439 = vadd.f32 %v1366, %v1423
      %v1440 = vadd.f32 %v1367, %v1424
      %v1441 = vadd.f32 %v1368, %v1425
      %v1442 = vadd.f32 %v1369, %v1426
      %v1443 = vadd.f32 %v1370, %v1427
      %1444 = vset.pattern.permute.xlu0 13
      %1445 = vperm.xlu0 %1444, %v540
      %v1446 = vpop.permute.xlu0 %1445
      %1448 = vset.pattern.permute.xlu0 13
      %1449 = vperm.xlu0 %1448, %v541
      %v1450 = vpop.permute.xlu0 %1449
      %v1452 = vmul.f32 %v1446, %v466
      %v1453 = vmul.f32 %v1446, %v480
      %v1454 = vmul.f32 %v1446, %v494
      %v1455 = vmul.f32 %v1446, %v508
      %v1456 = vmul.f32 %v1446, %v522
      %v1457 = vmul.f32 %v1450, %v468
      %v1458 = vmul.f32 %v1450, %v482
      %v1459 = vmul.f32 %v1450, %v496
      %v1460 = vmul.f32 %v1450, %v510
      %v1461 = vmul.f32 %v1450, %v524
      %1472 = vrot.lane.b32.xlu0 %v1452, 24
      %v1473 = vpop.permute.xlu0 %1472
      %1474 = vrot.lane.b32.xlu0 %v1453, 24
      %v1475 = vpop.permute.xlu0 %1474
      %1476 = vrot.lane.b32.xlu0 %v1454, 24
      %v1477 = vpop.permute.xlu0 %1476
      %1478 = vrot.lane.b32.xlu0 %v1455, 24
      %v1479 = vpop.permute.xlu0 %1478
      %1480 = vrot.lane.b32.xlu0 %v1456, 24
      %v1481 = vpop.permute.xlu0 %1480
      %1482 = vrot.lane.b32.xlu0 %v1457, 24
      %v1483 = vpop.permute.xlu0 %1482
      %1484 = vrot.lane.b32.xlu0 %v1458, 24
      %v1485 = vpop.permute.xlu0 %1484
      %1486 = vrot.lane.b32.xlu0 %v1459, 24
      %v1487 = vpop.permute.xlu0 %1486
      %1488 = vrot.lane.b32.xlu0 %v1460, 24
      %v1489 = vpop.permute.xlu0 %1488
      %1490 = vrot.lane.b32.xlu0 %v1461, 24
      %v1491 = vpop.permute.xlu0 %1490
      %v1492 = vsel %vm433, %v1473, %v1475
      %v1493 = vsel %vm433, %v1475, %v1477
      %v1494 = vsel %vm433, %v1477, %v1479
      %v1495 = vsel %vm433, %v1479, %v1481
      %v1496 = vsel %vm433, %v1483, %v1485
      %v1497 = vsel %vm433, %v1485, %v1487
      %v1498 = vsel %vm433, %v1487, %v1489
      %v1499 = vsel %vm433, %v1489, %v1491
      %v1508 = vadd.f32 %v1436, %v1492
      %v1509 = vadd.f32 %v1437, %v1493
      %v1510 = vadd.f32 %v1438, %v1494
      %v1511 = vadd.f32 %v1439, %v1495
      %v1512 = vadd.f32 %v1440, %v1496
      %v1513 = vadd.f32 %v1441, %v1497
      %v1514 = vadd.f32 %v1442, %v1498
      %v1515 = vadd.f32 %v1443, %v1499
      %1516 = vset.pattern.permute.xlu0 14
      %1517 = vperm.xlu0 %1516, %v540
      %v1518 = vpop.permute.xlu0 %1517
      %1520 = vset.pattern.permute.xlu0 14
      %1521 = vperm.xlu0 %1520, %v541
      %v1522 = vpop.permute.xlu0 %1521
      %v1524 = vmul.f32 %v1518, %v466
      %v1525 = vmul.f32 %v1518, %v480
      %v1526 = vmul.f32 %v1518, %v494
      %v1527 = vmul.f32 %v1518, %v508
      %v1528 = vmul.f32 %v1518, %v522
      %v1529 = vmul.f32 %v1522, %v468
      %v1530 = vmul.f32 %v1522, %v482
      %v1531 = vmul.f32 %v1522, %v496
      %v1532 = vmul.f32 %v1522, %v510
      %v1533 = vmul.f32 %v1522, %v524
      %1544 = vrot.lane.b32.xlu0 %v1524, 16
      %v1545 = vpop.permute.xlu0 %1544
      %1546 = vrot.lane.b32.xlu0 %v1525, 16
      %v1547 = vpop.permute.xlu0 %1546
      %1548 = vrot.lane.b32.xlu0 %v1526, 16
      %v1549 = vpop.permute.xlu0 %1548
      %1550 = vrot.lane.b32.xlu0 %v1527, 16
      %v1551 = vpop.permute.xlu0 %1550
      %1552 = vrot.lane.b32.xlu0 %v1528, 16
      %v1553 = vpop.permute.xlu0 %1552
      %1554 = vrot.lane.b32.xlu0 %v1529, 16
      %v1555 = vpop.permute.xlu0 %1554
      %1556 = vrot.lane.b32.xlu0 %v1530, 16
      %v1557 = vpop.permute.xlu0 %1556
      %1558 = vrot.lane.b32.xlu0 %v1531, 16
      %v1559 = vpop.permute.xlu0 %1558
      %1560 = vrot.lane.b32.xlu0 %v1532, 16
      %v1561 = vpop.permute.xlu0 %1560
      %1562 = vrot.lane.b32.xlu0 %v1533, 16
      %v1563 = vpop.permute.xlu0 %1562
      %vm1564 = vcmask 130048
      %v1565 = vsel %vm1564, %v1545, %v1547
      %v1566 = vsel %vm1564, %v1547, %v1549
      %v1567 = vsel %vm1564, %v1549, %v1551
      %v1568 = vsel %vm1564, %v1551, %v1553
      %v1569 = vsel %vm1564, %v1555, %v1557
      %v1570 = vsel %vm1564, %v1557, %v1559
      %v1571 = vsel %vm1564, %v1559, %v1561
      %v1572 = vsel %vm1564, %v1561, %v1563
      %v1581 = vadd.f32 %v1508, %v1565
      %v1582 = vadd.f32 %v1509, %v1566
      %v1583 = vadd.f32 %v1510, %v1567
      %v1584 = vadd.f32 %v1511, %v1568
      %v1585 = vadd.f32 %v1512, %v1569
      %v1586 = vadd.f32 %v1513, %v1570
      %v1587 = vadd.f32 %v1514, %v1571
      %v1588 = vadd.f32 %v1515, %v1572
      %1589 = vset.pattern.permute.xlu0 15
      %1590 = vperm.xlu0 %1589, %v540
      %v1591 = vpop.permute.xlu0 %1590
      %1593 = vset.pattern.permute.xlu0 15
      %1594 = vperm.xlu0 %1593, %v541
      %v1595 = vpop.permute.xlu0 %1594
      %v1597 = vmul.f32 %v1591, %v466
      %v1598 = vmul.f32 %v1591, %v480
      %v1599 = vmul.f32 %v1591, %v494
      %v1600 = vmul.f32 %v1591, %v508
      %v1601 = vmul.f32 %v1591, %v522
      %v1602 = vmul.f32 %v1595, %v468
      %v1603 = vmul.f32 %v1595, %v482
      %v1604 = vmul.f32 %v1595, %v496
      %v1605 = vmul.f32 %v1595, %v510
      %v1606 = vmul.f32 %v1595, %v524
      %1617 = vrot.lane.b32.xlu0 %v1597, 8
      %v1618 = vpop.permute.xlu0 %1617
      %1619 = vrot.lane.b32.xlu0 %v1598, 8
      %v1620 = vpop.permute.xlu0 %1619
      %1621 = vrot.lane.b32.xlu0 %v1599, 8
      %v1622 = vpop.permute.xlu0 %1621
      %1623 = vrot.lane.b32.xlu0 %v1600, 8
      %v1624 = vpop.permute.xlu0 %1623
      %1625 = vrot.lane.b32.xlu0 %v1601, 8
      %v1626 = vpop.permute.xlu0 %1625
      %1627 = vrot.lane.b32.xlu0 %v1602, 8
      %v1628 = vpop.permute.xlu0 %1627
      %1629 = vrot.lane.b32.xlu0 %v1603, 8
      %v1630 = vpop.permute.xlu0 %1629
      %1631 = vrot.lane.b32.xlu0 %v1604, 8
      %v1632 = vpop.permute.xlu0 %1631
      %1633 = vrot.lane.b32.xlu0 %v1605, 8
      %v1634 = vpop.permute.xlu0 %1633
      %1635 = vrot.lane.b32.xlu0 %v1606, 8
      %v1636 = vpop.permute.xlu0 %1635
      %vm1637 = vcmask 64512
      %v1638 = vsel %vm1637, %v1618, %v1620
      %v1639 = vsel %vm1637, %v1620, %v1622
      %v1640 = vsel %vm1637, %v1622, %v1624
      %v1641 = vsel %vm1637, %v1624, %v1626
      %v1642 = vsel %vm1637, %v1628, %v1630
      %v1643 = vsel %vm1637, %v1630, %v1632
      %v1644 = vsel %vm1637, %v1632, %v1634
      %v1645 = vsel %vm1637, %v1634, %v1636
      %v1654 = vadd.f32 %v1581, %v1638
      %v1655 = vadd.f32 %v1582, %v1639
      %v1656 = vadd.f32 %v1583, %v1640
      %v1657 = vadd.f32 %v1584, %v1641
      %v1658 = vadd.f32 %v1585, %v1642
      %v1659 = vadd.f32 %v1586, %v1643
      %v1660 = vadd.f32 %v1587, %v1644
      %v1661 = vadd.f32 %v1588, %v1645
      %1662 = vset.pattern.permute.xlu0 16
      %1663 = vperm.xlu0 %1662, %v540
      %v1664 = vpop.permute.xlu0 %1663
      %1666 = vset.pattern.permute.xlu0 16
      %1667 = vperm.xlu0 %1666, %v541
      %v1668 = vpop.permute.xlu0 %1667
      %v1670 = vmul.f32 %v1664, %v480
      %v1671 = vmul.f32 %v1664, %v494
      %v1672 = vmul.f32 %v1664, %v508
      %v1673 = vmul.f32 %v1664, %v522
      %v1674 = vmul.f32 %v1668, %v482
      %v1675 = vmul.f32 %v1668, %v496
      %v1676 = vmul.f32 %v1668, %v510
      %v1677 = vmul.f32 %v1668, %v524
      %v1678 = vadd.f32 %v1654, %v1670
      %v1679 = vadd.f32 %v1655, %v1671
      %v1680 = vadd.f32 %v1656, %v1672
      %v1681 = vadd.f32 %v1657, %v1673
      %v1682 = vadd.f32 %v1658, %v1674
      %v1683 = vadd.f32 %v1659, %v1675
      %v1684 = vadd.f32 %v1660, %v1676
      %v1685 = vadd.f32 %v1661, %v1677
      %1686 = vset.pattern.permute.xlu0 17
      %1687 = vperm.xlu0 %1686, %v540
      %v1688 = vpop.permute.xlu0 %1687
      %1690 = vset.pattern.permute.xlu0 17
      %1691 = vperm.xlu0 %1690, %v541
      %v1692 = vpop.permute.xlu0 %1691
      %v1694 = vmul.f32 %v1688, %v480
      %v1695 = vmul.f32 %v1688, %v494
      %v1696 = vmul.f32 %v1688, %v508
      %v1697 = vmul.f32 %v1688, %v522
      %v1698 = vmul.f32 %v1688, %v536
      %v1699 = vmul.f32 %v1692, %v482
      %v1700 = vmul.f32 %v1692, %v496
      %v1701 = vmul.f32 %v1692, %v510
      %v1702 = vmul.f32 %v1692, %v524
      %v1703 = vmul.f32 %v1692, %v538
      %1714 = vrot.lane.b32.xlu0 %v1694, 120
      %v1715 = vpop.permute.xlu0 %1714
      %1716 = vrot.lane.b32.xlu0 %v1695, 120
      %v1717 = vpop.permute.xlu0 %1716
      %1718 = vrot.lane.b32.xlu0 %v1696, 120
      %v1719 = vpop.permute.xlu0 %1718
      %1720 = vrot.lane.b32.xlu0 %v1697, 120
      %v1721 = vpop.permute.xlu0 %1720
      %1722 = vrot.lane.b32.xlu0 %v1698, 120
      %v1723 = vpop.permute.xlu0 %1722
      %1724 = vrot.lane.b32.xlu0 %v1699, 120
      %v1725 = vpop.permute.xlu0 %1724
      %1726 = vrot.lane.b32.xlu0 %v1700, 120
      %v1727 = vpop.permute.xlu0 %1726
      %1728 = vrot.lane.b32.xlu0 %v1701, 120
      %v1729 = vpop.permute.xlu0 %1728
      %1730 = vrot.lane.b32.xlu0 %v1702, 120
      %v1731 = vpop.permute.xlu0 %1730
      %1732 = vrot.lane.b32.xlu0 %v1703, 120
      %v1733 = vpop.permute.xlu0 %1732
      %v1734 = vsel %vm616, %v1715, %v1717
      %v1735 = vsel %vm616, %v1717, %v1719
      %v1736 = vsel %vm616, %v1719, %v1721
      %v1737 = vsel %vm616, %v1721, %v1723
      %v1738 = vsel %vm616, %v1725, %v1727
      %v1739 = vsel %vm616, %v1727, %v1729
      %v1740 = vsel %vm616, %v1729, %v1731
      %v1741 = vsel %vm616, %v1731, %v1733
      %v1750 = vadd.f32 %v1678, %v1734
      %v1751 = vadd.f32 %v1679, %v1735
      %v1752 = vadd.f32 %v1680, %v1736
      %v1753 = vadd.f32 %v1681, %v1737
      %v1754 = vadd.f32 %v1682, %v1738
      %v1755 = vadd.f32 %v1683, %v1739
      %v1756 = vadd.f32 %v1684, %v1740
      %v1757 = vadd.f32 %v1685, %v1741
      %1758 = vset.pattern.permute.xlu0 18
      %1759 = vperm.xlu0 %1758, %v540
      %v1760 = vpop.permute.xlu0 %1759
      %1762 = vset.pattern.permute.xlu0 18
      %1763 = vperm.xlu0 %1762, %v541
      %v1764 = vpop.permute.xlu0 %1763
      %v1766 = vmul.f32 %v1760, %v480
      %v1767 = vmul.f32 %v1760, %v494
      %v1768 = vmul.f32 %v1760, %v508
      %v1769 = vmul.f32 %v1760, %v522
      %v1770 = vmul.f32 %v1760, %v536
      %v1771 = vmul.f32 %v1764, %v482
      %v1772 = vmul.f32 %v1764, %v496
      %v1773 = vmul.f32 %v1764, %v510
      %v1774 = vmul.f32 %v1764, %v524
      %v1775 = vmul.f32 %v1764, %v538
      %1786 = vrot.lane.b32.xlu0 %v1766, 112
      %v1787 = vpop.permute.xlu0 %1786
      %1788 = vrot.lane.b32.xlu0 %v1767, 112
      %v1789 = vpop.permute.xlu0 %1788
      %1790 = vrot.lane.b32.xlu0 %v1768, 112
      %v1791 = vpop.permute.xlu0 %1790
      %1792 = vrot.lane.b32.xlu0 %v1769, 112
      %v1793 = vpop.permute.xlu0 %1792
      %1794 = vrot.lane.b32.xlu0 %v1770, 112
      %v1795 = vpop.permute.xlu0 %1794
      %1796 = vrot.lane.b32.xlu0 %v1771, 112
      %v1797 = vpop.permute.xlu0 %1796
      %1798 = vrot.lane.b32.xlu0 %v1772, 112
      %v1799 = vpop.permute.xlu0 %1798
      %1800 = vrot.lane.b32.xlu0 %v1773, 112
      %v1801 = vpop.permute.xlu0 %1800
      %1802 = vrot.lane.b32.xlu0 %v1774, 112
      %v1803 = vpop.permute.xlu0 %1802
      %1804 = vrot.lane.b32.xlu0 %v1775, 112
      %v1805 = vpop.permute.xlu0 %1804
      %v1806 = vsel %vm689, %v1787, %v1789
      %v1807 = vsel %vm689, %v1789, %v1791
      %v1808 = vsel %vm689, %v1791, %v1793
      %v1809 = vsel %vm689, %v1793, %v1795
      %v1810 = vsel %vm689, %v1797, %v1799
      %v1811 = vsel %vm689, %v1799, %v1801
      %v1812 = vsel %vm689, %v1801, %v1803
      %v1813 = vsel %vm689, %v1803, %v1805
      %v1822 = vadd.f32 %v1750, %v1806
      %v1823 = vadd.f32 %v1751, %v1807
      %v1824 = vadd.f32 %v1752, %v1808
      %v1825 = vadd.f32 %v1753, %v1809
      %v1826 = vadd.f32 %v1754, %v1810
      %v1827 = vadd.f32 %v1755, %v1811
      %v1828 = vadd.f32 %v1756, %v1812
      %v1829 = vadd.f32 %v1757, %v1813
      %1830 = vset.pattern.permute.xlu0 19
      %1831 = vperm.xlu0 %1830, %v540
      %v1832 = vpop.permute.xlu0 %1831
      %1834 = vset.pattern.permute.xlu0 19
      %1835 = vperm.xlu0 %1834, %v541
      %v1836 = vpop.permute.xlu0 %1835
      %v1838 = vmul.f32 %v1832, %v480
      %v1839 = vmul.f32 %v1832, %v494
      %v1840 = vmul.f32 %v1832, %v508
      %v1841 = vmul.f32 %v1832, %v522
      %v1842 = vmul.f32 %v1832, %v536
      %v1843 = vmul.f32 %v1836, %v482
      %v1844 = vmul.f32 %v1836, %v496
      %v1845 = vmul.f32 %v1836, %v510
      %v1846 = vmul.f32 %v1836, %v524
      %v1847 = vmul.f32 %v1836, %v538
      %1858 = vrot.lane.b32.xlu0 %v1838, 104
      %v1859 = vpop.permute.xlu0 %1858
      %1860 = vrot.lane.b32.xlu0 %v1839, 104
      %v1861 = vpop.permute.xlu0 %1860
      %1862 = vrot.lane.b32.xlu0 %v1840, 104
      %v1863 = vpop.permute.xlu0 %1862
      %1864 = vrot.lane.b32.xlu0 %v1841, 104
      %v1865 = vpop.permute.xlu0 %1864
      %1866 = vrot.lane.b32.xlu0 %v1842, 104
      %v1867 = vpop.permute.xlu0 %1866
      %1868 = vrot.lane.b32.xlu0 %v1843, 104
      %v1869 = vpop.permute.xlu0 %1868
      %1870 = vrot.lane.b32.xlu0 %v1844, 104
      %v1871 = vpop.permute.xlu0 %1870
      %1872 = vrot.lane.b32.xlu0 %v1845, 104
      %v1873 = vpop.permute.xlu0 %1872
      %1874 = vrot.lane.b32.xlu0 %v1846, 104
      %v1875 = vpop.permute.xlu0 %1874
      %1876 = vrot.lane.b32.xlu0 %v1847, 104
      %v1877 = vpop.permute.xlu0 %1876
      %v1878 = vsel %vm762, %v1859, %v1861
      %v1879 = vsel %vm762, %v1861, %v1863
      %v1880 = vsel %vm762, %v1863, %v1865
      %v1881 = vsel %vm762, %v1865, %v1867
      %v1882 = vsel %vm762, %v1869, %v1871
      %v1883 = vsel %vm762, %v1871, %v1873
      %v1884 = vsel %vm762, %v1873, %v1875
      %v1885 = vsel %vm762, %v1875, %v1877
      %v1894 = vadd.f32 %v1822, %v1878
      %v1895 = vadd.f32 %v1823, %v1879
      %v1896 = vadd.f32 %v1824, %v1880
      %v1897 = vadd.f32 %v1825, %v1881
      %v1898 = vadd.f32 %v1826, %v1882
      %v1899 = vadd.f32 %v1827, %v1883
      %v1900 = vadd.f32 %v1828, %v1884
      %v1901 = vadd.f32 %v1829, %v1885
      %1902 = vset.pattern.permute.xlu0 20
      %1903 = vperm.xlu0 %1902, %v540
      %v1904 = vpop.permute.xlu0 %1903
      %1906 = vset.pattern.permute.xlu0 20
      %1907 = vperm.xlu0 %1906, %v541
      %v1908 = vpop.permute.xlu0 %1907
      %v1910 = vmul.f32 %v1904, %v480
      %v1911 = vmul.f32 %v1904, %v494
      %v1912 = vmul.f32 %v1904, %v508
      %v1913 = vmul.f32 %v1904, %v522
      %v1914 = vmul.f32 %v1904, %v536
      %v1915 = vmul.f32 %v1908, %v482
      %v1916 = vmul.f32 %v1908, %v496
      %v1917 = vmul.f32 %v1908, %v510
      %v1918 = vmul.f32 %v1908, %v524
      %v1919 = vmul.f32 %v1908, %v538
      %1930 = vrot.lane.b32.xlu0 %v1910, 96
      %v1931 = vpop.permute.xlu0 %1930
      %1932 = vrot.lane.b32.xlu0 %v1911, 96
      %v1933 = vpop.permute.xlu0 %1932
      %1934 = vrot.lane.b32.xlu0 %v1912, 96
      %v1935 = vpop.permute.xlu0 %1934
      %1936 = vrot.lane.b32.xlu0 %v1913, 96
      %v1937 = vpop.permute.xlu0 %1936
      %1938 = vrot.lane.b32.xlu0 %v1914, 96
      %v1939 = vpop.permute.xlu0 %1938
      %1940 = vrot.lane.b32.xlu0 %v1915, 96
      %v1941 = vpop.permute.xlu0 %1940
      %1942 = vrot.lane.b32.xlu0 %v1916, 96
      %v1943 = vpop.permute.xlu0 %1942
      %1944 = vrot.lane.b32.xlu0 %v1917, 96
      %v1945 = vpop.permute.xlu0 %1944
      %1946 = vrot.lane.b32.xlu0 %v1918, 96
      %v1947 = vpop.permute.xlu0 %1946
      %1948 = vrot.lane.b32.xlu0 %v1919, 96
      %v1949 = vpop.permute.xlu0 %1948
      %v1950 = vsel %vm835, %v1931, %v1933
      %v1951 = vsel %vm835, %v1933, %v1935
      %v1952 = vsel %vm835, %v1935, %v1937
      %v1953 = vsel %vm835, %v1937, %v1939
      %v1954 = vsel %vm835, %v1941, %v1943
      %v1955 = vsel %vm835, %v1943, %v1945
      %v1956 = vsel %vm835, %v1945, %v1947
      %v1957 = vsel %vm835, %v1947, %v1949
      %v1966 = vadd.f32 %v1894, %v1950
      %v1967 = vadd.f32 %v1895, %v1951
      %v1968 = vadd.f32 %v1896, %v1952
      %v1969 = vadd.f32 %v1897, %v1953
      %v1970 = vadd.f32 %v1898, %v1954
      %v1971 = vadd.f32 %v1899, %v1955
      %v1972 = vadd.f32 %v1900, %v1956
      %v1973 = vadd.f32 %v1901, %v1957
      %1974 = vset.pattern.permute.xlu0 21
      %1975 = vperm.xlu0 %1974, %v540
      %v1976 = vpop.permute.xlu0 %1975
      %1978 = vset.pattern.permute.xlu0 21
      %1979 = vperm.xlu0 %1978, %v541
      %v1980 = vpop.permute.xlu0 %1979
      %v1982 = vmul.f32 %v1976, %v480
      %v1983 = vmul.f32 %v1976, %v494
      %v1984 = vmul.f32 %v1976, %v508
      %v1985 = vmul.f32 %v1976, %v522
      %v1986 = vmul.f32 %v1976, %v536
      %v1987 = vmul.f32 %v1980, %v482
      %v1988 = vmul.f32 %v1980, %v496
      %v1989 = vmul.f32 %v1980, %v510
      %v1990 = vmul.f32 %v1980, %v524
      %v1991 = vmul.f32 %v1980, %v538
      %2002 = vrot.lane.b32.xlu0 %v1982, 88
      %v2003 = vpop.permute.xlu0 %2002
      %2004 = vrot.lane.b32.xlu0 %v1983, 88
      %v2005 = vpop.permute.xlu0 %2004
      %2006 = vrot.lane.b32.xlu0 %v1984, 88
      %v2007 = vpop.permute.xlu0 %2006
      %2008 = vrot.lane.b32.xlu0 %v1985, 88
      %v2009 = vpop.permute.xlu0 %2008
      %2010 = vrot.lane.b32.xlu0 %v1986, 88
      %v2011 = vpop.permute.xlu0 %2010
      %2012 = vrot.lane.b32.xlu0 %v1987, 88
      %v2013 = vpop.permute.xlu0 %2012
      %2014 = vrot.lane.b32.xlu0 %v1988, 88
      %v2015 = vpop.permute.xlu0 %2014
      %2016 = vrot.lane.b32.xlu0 %v1989, 88
      %v2017 = vpop.permute.xlu0 %2016
      %2018 = vrot.lane.b32.xlu0 %v1990, 88
      %v2019 = vpop.permute.xlu0 %2018
      %2020 = vrot.lane.b32.xlu0 %v1991, 88
      %v2021 = vpop.permute.xlu0 %2020
      %v2022 = vsel %vm908, %v2003, %v2005
      %v2023 = vsel %vm908, %v2005, %v2007
      %v2024 = vsel %vm908, %v2007, %v2009
      %v2025 = vsel %vm908, %v2009, %v2011
      %v2026 = vsel %vm908, %v2013, %v2015
      %v2027 = vsel %vm908, %v2015, %v2017
      %v2028 = vsel %vm908, %v2017, %v2019
      %v2029 = vsel %vm908, %v2019, %v2021
      %v2038 = vadd.f32 %v1966, %v2022
      %v2039 = vadd.f32 %v1967, %v2023
      %v2040 = vadd.f32 %v1968, %v2024
      %v2041 = vadd.f32 %v1969, %v2025
      %v2042 = vadd.f32 %v1970, %v2026
      %v2043 = vadd.f32 %v1971, %v2027
      %v2044 = vadd.f32 %v1972, %v2028
      %v2045 = vadd.f32 %v1973, %v2029
      %2046 = vset.pattern.permute.xlu0 22
      %2047 = vperm.xlu0 %2046, %v540
      %v2048 = vpop.permute.xlu0 %2047
      %2050 = vset.pattern.permute.xlu0 22
      %2051 = vperm.xlu0 %2050, %v541
      %v2052 = vpop.permute.xlu0 %2051
      %v2054 = vmul.f32 %v2048, %v480
      %v2055 = vmul.f32 %v2048, %v494
      %v2056 = vmul.f32 %v2048, %v508
      %v2057 = vmul.f32 %v2048, %v522
      %v2058 = vmul.f32 %v2048, %v536
      %v2059 = vmul.f32 %v2052, %v482
      %v2060 = vmul.f32 %v2052, %v496
      %v2061 = vmul.f32 %v2052, %v510
      %v2062 = vmul.f32 %v2052, %v524
      %v2063 = vmul.f32 %v2052, %v538
      %2074 = vrot.lane.b32.xlu0 %v2054, 80
      %v2075 = vpop.permute.xlu0 %2074
      %2076 = vrot.lane.b32.xlu0 %v2055, 80
      %v2077 = vpop.permute.xlu0 %2076
      %2078 = vrot.lane.b32.xlu0 %v2056, 80
      %v2079 = vpop.permute.xlu0 %2078
      %2080 = vrot.lane.b32.xlu0 %v2057, 80
      %v2081 = vpop.permute.xlu0 %2080
      %2082 = vrot.lane.b32.xlu0 %v2058, 80
      %v2083 = vpop.permute.xlu0 %2082
      %2084 = vrot.lane.b32.xlu0 %v2059, 80
      %v2085 = vpop.permute.xlu0 %2084
      %2086 = vrot.lane.b32.xlu0 %v2060, 80
      %v2087 = vpop.permute.xlu0 %2086
      %2088 = vrot.lane.b32.xlu0 %v2061, 80
      %v2089 = vpop.permute.xlu0 %2088
      %2090 = vrot.lane.b32.xlu0 %v2062, 80
      %v2091 = vpop.permute.xlu0 %2090
      %2092 = vrot.lane.b32.xlu0 %v2063, 80
      %v2093 = vpop.permute.xlu0 %2092
      %v2094 = vsel %vm981, %v2075, %v2077
      %v2095 = vsel %vm981, %v2077, %v2079
      %v2096 = vsel %vm981, %v2079, %v2081
      %v2097 = vsel %vm981, %v2081, %v2083
      %v2098 = vsel %vm981, %v2085, %v2087
      %v2099 = vsel %vm981, %v2087, %v2089
      %v2100 = vsel %vm981, %v2089, %v2091
      %v2101 = vsel %vm981, %v2091, %v2093
      %v2110 = vadd.f32 %v2038, %v2094
      %v2111 = vadd.f32 %v2039, %v2095
      %v2112 = vadd.f32 %v2040, %v2096
      %v2113 = vadd.f32 %v2041, %v2097
      %v2114 = vadd.f32 %v2042, %v2098
      %v2115 = vadd.f32 %v2043, %v2099
      %v2116 = vadd.f32 %v2044, %v2100
      %v2117 = vadd.f32 %v2045, %v2101
      %2118 = vset.pattern.permute.xlu0 23
      %2119 = vperm.xlu0 %2118, %v540
      %v2120 = vpop.permute.xlu0 %2119
      %2122 = vset.pattern.permute.xlu0 23
      %2123 = vperm.xlu0 %2122, %v541
      %v2124 = vpop.permute.xlu0 %2123
      %v2126 = vmul.f32 %v2120, %v480
      %v2127 = vmul.f32 %v2120, %v494
      %v2128 = vmul.f32 %v2120, %v508
      %v2129 = vmul.f32 %v2120, %v522
      %v2130 = vmul.f32 %v2120, %v536
      %v2131 = vmul.f32 %v2124, %v482
      %v2132 = vmul.f32 %v2124, %v496
      %v2133 = vmul.f32 %v2124, %v510
      %v2134 = vmul.f32 %v2124, %v524
      %v2135 = vmul.f32 %v2124, %v538
      %2146 = vrot.lane.b32.xlu0 %v2126, 72
      %v2147 = vpop.permute.xlu0 %2146
      %2148 = vrot.lane.b32.xlu0 %v2127, 72
      %v2149 = vpop.permute.xlu0 %2148
      %2150 = vrot.lane.b32.xlu0 %v2128, 72
      %v2151 = vpop.permute.xlu0 %2150
      %2152 = vrot.lane.b32.xlu0 %v2129, 72
      %v2153 = vpop.permute.xlu0 %2152
      %2154 = vrot.lane.b32.xlu0 %v2130, 72
      %v2155 = vpop.permute.xlu0 %2154
      %2156 = vrot.lane.b32.xlu0 %v2131, 72
      %v2157 = vpop.permute.xlu0 %2156
      %2158 = vrot.lane.b32.xlu0 %v2132, 72
      %v2159 = vpop.permute.xlu0 %2158
      %2160 = vrot.lane.b32.xlu0 %v2133, 72
      %v2161 = vpop.permute.xlu0 %2160
      %2162 = vrot.lane.b32.xlu0 %v2134, 72
      %v2163 = vpop.permute.xlu0 %2162
      %2164 = vrot.lane.b32.xlu0 %v2135, 72
      %v2165 = vpop.permute.xlu0 %2164
      %v2166 = vsel %vm1054, %v2147, %v2149
      %v2167 = vsel %vm1054, %v2149, %v2151
      %v2168 = vsel %vm1054, %v2151, %v2153
      %v2169 = vsel %vm1054, %v2153, %v2155
      %v2170 = vsel %vm1054, %v2157, %v2159
      %v2171 = vsel %vm1054, %v2159, %v2161
      %v2172 = vsel %vm1054, %v2161, %v2163
      %v2173 = vsel %vm1054, %v2163, %v2165
      %v2182 = vadd.f32 %v2110, %v2166
      %v2183 = vadd.f32 %v2111, %v2167
      %v2184 = vadd.f32 %v2112, %v2168
      %v2185 = vadd.f32 %v2113, %v2169
      %v2186 = vadd.f32 %v2114, %v2170
      %v2187 = vadd.f32 %v2115, %v2171
      %v2188 = vadd.f32 %v2116, %v2172
      %v2189 = vadd.f32 %v2117, %v2173
      %2190 = vset.pattern.permute.xlu0 24
      %2191 = vperm.xlu0 %2190, %v540
      %v2192 = vpop.permute.xlu0 %2191
      %2194 = vset.pattern.permute.xlu0 24
      %2195 = vperm.xlu0 %2194, %v541
      %v2196 = vpop.permute.xlu0 %2195
      %v2198 = vmul.f32 %v2192, %v480
      %v2199 = vmul.f32 %v2192, %v494
      %v2200 = vmul.f32 %v2192, %v508
      %v2201 = vmul.f32 %v2192, %v522
      %v2202 = vmul.f32 %v2192, %v536
      %v2203 = vmul.f32 %v2196, %v482
      %v2204 = vmul.f32 %v2196, %v496
      %v2205 = vmul.f32 %v2196, %v510
      %v2206 = vmul.f32 %v2196, %v524
      %v2207 = vmul.f32 %v2196, %v538
      %2218 = vrot.lane.b32.xlu0 %v2198, 64
      %v2219 = vpop.permute.xlu0 %2218
      %2220 = vrot.lane.b32.xlu0 %v2199, 64
      %v2221 = vpop.permute.xlu0 %2220
      %2222 = vrot.lane.b32.xlu0 %v2200, 64
      %v2223 = vpop.permute.xlu0 %2222
      %2224 = vrot.lane.b32.xlu0 %v2201, 64
      %v2225 = vpop.permute.xlu0 %2224
      %2226 = vrot.lane.b32.xlu0 %v2202, 64
      %v2227 = vpop.permute.xlu0 %2226
      %2228 = vrot.lane.b32.xlu0 %v2203, 64
      %v2229 = vpop.permute.xlu0 %2228
      %2230 = vrot.lane.b32.xlu0 %v2204, 64
      %v2231 = vpop.permute.xlu0 %2230
      %2232 = vrot.lane.b32.xlu0 %v2205, 64
      %v2233 = vpop.permute.xlu0 %2232
      %2234 = vrot.lane.b32.xlu0 %v2206, 64
      %v2235 = vpop.permute.xlu0 %2234
      %2236 = vrot.lane.b32.xlu0 %v2207, 64
      %v2237 = vpop.permute.xlu0 %2236
      %v2238 = vsel %vm1127, %v2219, %v2221
      %v2239 = vsel %vm1127, %v2221, %v2223
      %v2240 = vsel %vm1127, %v2223, %v2225
      %v2241 = vsel %vm1127, %v2225, %v2227
      %v2242 = vsel %vm1127, %v2229, %v2231
      %v2243 = vsel %vm1127, %v2231, %v2233
      %v2244 = vsel %vm1127, %v2233, %v2235
      %v2245 = vsel %vm1127, %v2235, %v2237
      %v2254 = vadd.f32 %v2182, %v2238
      %v2255 = vadd.f32 %v2183, %v2239
      %v2256 = vadd.f32 %v2184, %v2240
      %v2257 = vadd.f32 %v2185, %v2241
      %v2258 = vadd.f32 %v2186, %v2242
      %v2259 = vadd.f32 %v2187, %v2243
      %v2260 = vadd.f32 %v2188, %v2244
      %v2261 = vadd.f32 %v2189, %v2245
      %2262 = vset.pattern.permute.xlu0 25
      %2263 = vperm.xlu0 %2262, %v540
      %v2264 = vpop.permute.xlu0 %2263
      %2266 = vset.pattern.permute.xlu0 25
      %2267 = vperm.xlu0 %2266, %v541
      %v2268 = vpop.permute.xlu0 %2267
      %v2270 = vmul.f32 %v2264, %v480
      %v2271 = vmul.f32 %v2264, %v494
      %v2272 = vmul.f32 %v2264, %v508
      %v2273 = vmul.f32 %v2264, %v522
      %v2274 = vmul.f32 %v2264, %v536
      %v2275 = vmul.f32 %v2268, %v482
      %v2276 = vmul.f32 %v2268, %v496
      %v2277 = vmul.f32 %v2268, %v510
      %v2278 = vmul.f32 %v2268, %v524
      %v2279 = vmul.f32 %v2268, %v538
      %2290 = vrot.lane.b32.xlu0 %v2270, 56
      %v2291 = vpop.permute.xlu0 %2290
      %2292 = vrot.lane.b32.xlu0 %v2271, 56
      %v2293 = vpop.permute.xlu0 %2292
      %2294 = vrot.lane.b32.xlu0 %v2272, 56
      %v2295 = vpop.permute.xlu0 %2294
      %2296 = vrot.lane.b32.xlu0 %v2273, 56
      %v2297 = vpop.permute.xlu0 %2296
      %2298 = vrot.lane.b32.xlu0 %v2274, 56
      %v2299 = vpop.permute.xlu0 %2298
      %2300 = vrot.lane.b32.xlu0 %v2275, 56
      %v2301 = vpop.permute.xlu0 %2300
      %2302 = vrot.lane.b32.xlu0 %v2276, 56
      %v2303 = vpop.permute.xlu0 %2302
      %2304 = vrot.lane.b32.xlu0 %v2277, 56
      %v2305 = vpop.permute.xlu0 %2304
      %2306 = vrot.lane.b32.xlu0 %v2278, 56
      %v2307 = vpop.permute.xlu0 %2306
      %2308 = vrot.lane.b32.xlu0 %v2279, 56
      %v2309 = vpop.permute.xlu0 %2308
      %v2310 = vsel %vm1200, %v2291, %v2293
      %v2311 = vsel %vm1200, %v2293, %v2295
      %v2312 = vsel %vm1200, %v2295, %v2297
      %v2313 = vsel %vm1200, %v2297, %v2299
      %v2314 = vsel %vm1200, %v2301, %v2303
      %v2315 = vsel %vm1200, %v2303, %v2305
      %v2316 = vsel %vm1200, %v2305, %v2307
      %v2317 = vsel %vm1200, %v2307, %v2309
      %v2326 = vadd.f32 %v2254, %v2310
      %v2327 = vadd.f32 %v2255, %v2311
      %v2328 = vadd.f32 %v2256, %v2312
      %v2329 = vadd.f32 %v2257, %v2313
      %v2330 = vadd.f32 %v2258, %v2314
      %v2331 = vadd.f32 %v2259, %v2315
      %v2332 = vadd.f32 %v2260, %v2316
      %v2333 = vadd.f32 %v2261, %v2317
      %2334 = vset.pattern.permute.xlu0 26
      %2335 = vperm.xlu0 %2334, %v540
      %v2336 = vpop.permute.xlu0 %2335
      %2338 = vset.pattern.permute.xlu0 26
      %2339 = vperm.xlu0 %2338, %v541
      %v2340 = vpop.permute.xlu0 %2339
      %v2342 = vmul.f32 %v2336, %v480
      %v2343 = vmul.f32 %v2336, %v494
      %v2344 = vmul.f32 %v2336, %v508
      %v2345 = vmul.f32 %v2336, %v522
      %v2346 = vmul.f32 %v2336, %v536
      %v2347 = vmul.f32 %v2340, %v482
      %v2348 = vmul.f32 %v2340, %v496
      %v2349 = vmul.f32 %v2340, %v510
      %v2350 = vmul.f32 %v2340, %v524
      %v2351 = vmul.f32 %v2340, %v538
      %2362 = vrot.lane.b32.xlu0 %v2342, 48
      %v2363 = vpop.permute.xlu0 %2362
      %2364 = vrot.lane.b32.xlu0 %v2343, 48
      %v2365 = vpop.permute.xlu0 %2364
      %2366 = vrot.lane.b32.xlu0 %v2344, 48
      %v2367 = vpop.permute.xlu0 %2366
      %2368 = vrot.lane.b32.xlu0 %v2345, 48
      %v2369 = vpop.permute.xlu0 %2368
      %2370 = vrot.lane.b32.xlu0 %v2346, 48
      %v2371 = vpop.permute.xlu0 %2370
      %2372 = vrot.lane.b32.xlu0 %v2347, 48
      %v2373 = vpop.permute.xlu0 %2372
      %2374 = vrot.lane.b32.xlu0 %v2348, 48
      %v2375 = vpop.permute.xlu0 %2374
      %2376 = vrot.lane.b32.xlu0 %v2349, 48
      %v2377 = vpop.permute.xlu0 %2376
      %2378 = vrot.lane.b32.xlu0 %v2350, 48
      %v2379 = vpop.permute.xlu0 %2378
      %2380 = vrot.lane.b32.xlu0 %v2351, 48
      %v2381 = vpop.permute.xlu0 %2380
      %v2382 = vsel %vm1273, %v2363, %v2365
      %v2383 = vsel %vm1273, %v2365, %v2367
      %v2384 = vsel %vm1273, %v2367, %v2369
      %v2385 = vsel %vm1273, %v2369, %v2371
      %v2386 = vsel %vm1273, %v2373, %v2375
      %v2387 = vsel %vm1273, %v2375, %v2377
      %v2388 = vsel %vm1273, %v2377, %v2379
      %v2389 = vsel %vm1273, %v2379, %v2381
      %v2398 = vadd.f32 %v2326, %v2382
      %v2399 = vadd.f32 %v2327, %v2383
      %v2400 = vadd.f32 %v2328, %v2384
      %v2401 = vadd.f32 %v2329, %v2385
      %v2402 = vadd.f32 %v2330, %v2386
      %v2403 = vadd.f32 %v2331, %v2387
      %v2404 = vadd.f32 %v2332, %v2388
      %v2405 = vadd.f32 %v2333, %v2389
      %2406 = vset.pattern.permute.xlu0 27
      %2407 = vperm.xlu0 %2406, %v540
      %v2408 = vpop.permute.xlu0 %2407
      %2410 = vset.pattern.permute.xlu0 27
      %2411 = vperm.xlu0 %2410, %v541
      %v2412 = vpop.permute.xlu0 %2411
      %v2414 = vmul.f32 %v2408, %v480
      %v2415 = vmul.f32 %v2408, %v494
      %v2416 = vmul.f32 %v2408, %v508
      %v2417 = vmul.f32 %v2408, %v522
      %v2418 = vmul.f32 %v2408, %v536
      %v2419 = vmul.f32 %v2412, %v482
      %v2420 = vmul.f32 %v2412, %v496
      %v2421 = vmul.f32 %v2412, %v510
      %v2422 = vmul.f32 %v2412, %v524
      %v2423 = vmul.f32 %v2412, %v538
      %2434 = vrot.lane.b32.xlu0 %v2414, 40
      %v2435 = vpop.permute.xlu0 %2434
      %2436 = vrot.lane.b32.xlu0 %v2415, 40
      %v2437 = vpop.permute.xlu0 %2436
      %2438 = vrot.lane.b32.xlu0 %v2416, 40
      %v2439 = vpop.permute.xlu0 %2438
      %2440 = vrot.lane.b32.xlu0 %v2417, 40
      %v2441 = vpop.permute.xlu0 %2440
      %2442 = vrot.lane.b32.xlu0 %v2418, 40
      %v2443 = vpop.permute.xlu0 %2442
      %2444 = vrot.lane.b32.xlu0 %v2419, 40
      %v2445 = vpop.permute.xlu0 %2444
      %2446 = vrot.lane.b32.xlu0 %v2420, 40
      %v2447 = vpop.permute.xlu0 %2446
      %2448 = vrot.lane.b32.xlu0 %v2421, 40
      %v2449 = vpop.permute.xlu0 %2448
      %2450 = vrot.lane.b32.xlu0 %v2422, 40
      %v2451 = vpop.permute.xlu0 %2450
      %2452 = vrot.lane.b32.xlu0 %v2423, 40
      %v2453 = vpop.permute.xlu0 %2452
      %v2454 = vsel %vm1346, %v2435, %v2437
      %v2455 = vsel %vm1346, %v2437, %v2439
      %v2456 = vsel %vm1346, %v2439, %v2441
      %v2457 = vsel %vm1346, %v2441, %v2443
      %v2458 = vsel %vm1346, %v2445, %v2447
      %v2459 = vsel %vm1346, %v2447, %v2449
      %v2460 = vsel %vm1346, %v2449, %v2451
      %v2461 = vsel %vm1346, %v2451, %v2453
      %v2470 = vadd.f32 %v2398, %v2454
      %v2471 = vadd.f32 %v2399, %v2455
      %v2472 = vadd.f32 %v2400, %v2456
      %v2473 = vadd.f32 %v2401, %v2457
      %v2474 = vadd.f32 %v2402, %v2458
      %v2475 = vadd.f32 %v2403, %v2459
      %v2476 = vadd.f32 %v2404, %v2460
      %v2477 = vadd.f32 %v2405, %v2461
      %2478 = vset.pattern.permute.xlu0 28
      %2479 = vperm.xlu0 %2478, %v540
      %v2480 = vpop.permute.xlu0 %2479
      %2482 = vset.pattern.permute.xlu0 28
      %2483 = vperm.xlu0 %2482, %v541
      %v2484 = vpop.permute.xlu0 %2483
      %v2486 = vmul.f32 %v2480, %v480
      %v2487 = vmul.f32 %v2480, %v494
      %v2488 = vmul.f32 %v2480, %v508
      %v2489 = vmul.f32 %v2480, %v522
      %v2490 = vmul.f32 %v2480, %v536
      %v2491 = vmul.f32 %v2484, %v482
      %v2492 = vmul.f32 %v2484, %v496
      %v2493 = vmul.f32 %v2484, %v510
      %v2494 = vmul.f32 %v2484, %v524
      %v2495 = vmul.f32 %v2484, %v538
      %2506 = vrot.lane.b32.xlu0 %v2486, 32
      %v2507 = vpop.permute.xlu0 %2506
      %2508 = vrot.lane.b32.xlu0 %v2487, 32
      %v2509 = vpop.permute.xlu0 %2508
      %2510 = vrot.lane.b32.xlu0 %v2488, 32
      %v2511 = vpop.permute.xlu0 %2510
      %2512 = vrot.lane.b32.xlu0 %v2489, 32
      %v2513 = vpop.permute.xlu0 %2512
      %2514 = vrot.lane.b32.xlu0 %v2490, 32
      %v2515 = vpop.permute.xlu0 %2514
      %2516 = vrot.lane.b32.xlu0 %v2491, 32
      %v2517 = vpop.permute.xlu0 %2516
      %2518 = vrot.lane.b32.xlu0 %v2492, 32
      %v2519 = vpop.permute.xlu0 %2518
      %2520 = vrot.lane.b32.xlu0 %v2493, 32
      %v2521 = vpop.permute.xlu0 %2520
      %2522 = vrot.lane.b32.xlu0 %v2494, 32
      %v2523 = vpop.permute.xlu0 %2522
      %2524 = vrot.lane.b32.xlu0 %v2495, 32
      %v2525 = vpop.permute.xlu0 %2524
      %v2526 = vsel %vm1419, %v2507, %v2509
      %v2527 = vsel %vm1419, %v2509, %v2511
      %v2528 = vsel %vm1419, %v2511, %v2513
      %v2529 = vsel %vm1419, %v2513, %v2515
      %v2530 = vsel %vm1419, %v2517, %v2519
      %v2531 = vsel %vm1419, %v2519, %v2521
      %v2532 = vsel %vm1419, %v2521, %v2523
      %v2533 = vsel %vm1419, %v2523, %v2525
      %v2542 = vadd.f32 %v2470, %v2526
      %v2543 = vadd.f32 %v2471, %v2527
      %v2544 = vadd.f32 %v2472, %v2528
      %v2545 = vadd.f32 %v2473, %v2529
      %v2546 = vadd.f32 %v2474, %v2530
      %v2547 = vadd.f32 %v2475, %v2531
      %v2548 = vadd.f32 %v2476, %v2532
      %v2549 = vadd.f32 %v2477, %v2533
      %2550 = vset.pattern.permute.xlu0 29
      %2551 = vperm.xlu0 %2550, %v540
      %v2552 = vpop.permute.xlu0 %2551
      %2554 = vset.pattern.permute.xlu0 29
      %2555 = vperm.xlu0 %2554, %v541
      %v2556 = vpop.permute.xlu0 %2555
      %v2558 = vmul.f32 %v2552, %v480
      %v2559 = vmul.f32 %v2552, %v494
      %v2560 = vmul.f32 %v2552, %v508
      %v2561 = vmul.f32 %v2552, %v522
      %v2562 = vmul.f32 %v2552, %v536
      %v2563 = vmul.f32 %v2556, %v482
      %v2564 = vmul.f32 %v2556, %v496
      %v2565 = vmul.f32 %v2556, %v510
      %v2566 = vmul.f32 %v2556, %v524
      %v2567 = vmul.f32 %v2556, %v538
      %2578 = vrot.lane.b32.xlu0 %v2558, 24
      %v2579 = vpop.permute.xlu0 %2578
      %2580 = vrot.lane.b32.xlu0 %v2559, 24
      %v2581 = vpop.permute.xlu0 %2580
      %2582 = vrot.lane.b32.xlu0 %v2560, 24
      %v2583 = vpop.permute.xlu0 %2582
      %2584 = vrot.lane.b32.xlu0 %v2561, 24
      %v2585 = vpop.permute.xlu0 %2584
      %2586 = vrot.lane.b32.xlu0 %v2562, 24
      %v2587 = vpop.permute.xlu0 %2586
      %2588 = vrot.lane.b32.xlu0 %v2563, 24
      %v2589 = vpop.permute.xlu0 %2588
      %2590 = vrot.lane.b32.xlu0 %v2564, 24
      %v2591 = vpop.permute.xlu0 %2590
      %2592 = vrot.lane.b32.xlu0 %v2565, 24
      %v2593 = vpop.permute.xlu0 %2592
      %2594 = vrot.lane.b32.xlu0 %v2566, 24
      %v2595 = vpop.permute.xlu0 %2594
      %2596 = vrot.lane.b32.xlu0 %v2567, 24
      %v2597 = vpop.permute.xlu0 %2596
      %v2598 = vsel %vm433, %v2579, %v2581
      %v2599 = vsel %vm433, %v2581, %v2583
      %v2600 = vsel %vm433, %v2583, %v2585
      %v2601 = vsel %vm433, %v2585, %v2587
      %v2602 = vsel %vm433, %v2589, %v2591
      %v2603 = vsel %vm433, %v2591, %v2593
      %v2604 = vsel %vm433, %v2593, %v2595
      %v2605 = vsel %vm433, %v2595, %v2597
      %v2614 = vadd.f32 %v2542, %v2598
      %v2615 = vadd.f32 %v2543, %v2599
      %v2616 = vadd.f32 %v2544, %v2600
      %v2617 = vadd.f32 %v2545, %v2601
      %v2618 = vadd.f32 %v2546, %v2602
      %v2619 = vadd.f32 %v2547, %v2603
      %v2620 = vadd.f32 %v2548, %v2604
      %v2621 = vadd.f32 %v2549, %v2605
      %2622 = vset.pattern.permute.xlu0 30
      %2623 = vperm.xlu0 %2622, %v540
      %v2624 = vpop.permute.xlu0 %2623
      %2626 = vset.pattern.permute.xlu0 30
      %2627 = vperm.xlu0 %2626, %v541
      %v2628 = vpop.permute.xlu0 %2627
      %v2630 = vmul.f32 %v2624, %v480
      %v2631 = vmul.f32 %v2624, %v494
      %v2632 = vmul.f32 %v2624, %v508
      %v2633 = vmul.f32 %v2624, %v522
      %v2634 = vmul.f32 %v2624, %v536
      %v2635 = vmul.f32 %v2628, %v482
      %v2636 = vmul.f32 %v2628, %v496
      %v2637 = vmul.f32 %v2628, %v510
      %v2638 = vmul.f32 %v2628, %v524
      %v2639 = vmul.f32 %v2628, %v538
      %2650 = vrot.lane.b32.xlu0 %v2630, 16
      %v2651 = vpop.permute.xlu0 %2650
      %2652 = vrot.lane.b32.xlu0 %v2631, 16
      %v2653 = vpop.permute.xlu0 %2652
      %2654 = vrot.lane.b32.xlu0 %v2632, 16
      %v2655 = vpop.permute.xlu0 %2654
      %2656 = vrot.lane.b32.xlu0 %v2633, 16
      %v2657 = vpop.permute.xlu0 %2656
      %2658 = vrot.lane.b32.xlu0 %v2634, 16
      %v2659 = vpop.permute.xlu0 %2658
      %2660 = vrot.lane.b32.xlu0 %v2635, 16
      %v2661 = vpop.permute.xlu0 %2660
      %2662 = vrot.lane.b32.xlu0 %v2636, 16
      %v2663 = vpop.permute.xlu0 %2662
      %2664 = vrot.lane.b32.xlu0 %v2637, 16
      %v2665 = vpop.permute.xlu0 %2664
      %2666 = vrot.lane.b32.xlu0 %v2638, 16
      %v2667 = vpop.permute.xlu0 %2666
      %2668 = vrot.lane.b32.xlu0 %v2639, 16
      %v2669 = vpop.permute.xlu0 %2668
      %v2670 = vsel %vm1564, %v2651, %v2653
      %v2671 = vsel %vm1564, %v2653, %v2655
      %v2672 = vsel %vm1564, %v2655, %v2657
      %v2673 = vsel %vm1564, %v2657, %v2659
      %v2674 = vsel %vm1564, %v2661, %v2663
      %v2675 = vsel %vm1564, %v2663, %v2665
      %v2676 = vsel %vm1564, %v2665, %v2667
      %v2677 = vsel %vm1564, %v2667, %v2669
      %v2686 = vadd.f32 %v2614, %v2670
      %v2687 = vadd.f32 %v2615, %v2671
      %v2688 = vadd.f32 %v2616, %v2672
      %v2689 = vadd.f32 %v2617, %v2673
      %v2690 = vadd.f32 %v2618, %v2674
      %v2691 = vadd.f32 %v2619, %v2675
      %v2692 = vadd.f32 %v2620, %v2676
      %v2693 = vadd.f32 %v2621, %v2677
      %vm2694 = vcmp.gt.f32.partialorder %v2686, 0.0
      %vm2695 = vcmp.gt.f32.partialorder %v2687, 0.0
      %vm2696 = vcmp.gt.f32.partialorder %v2688, 0.0
      %vm2697 = vcmp.gt.f32.partialorder %v2689, 0.0
      %vm2698 = vcmp.gt.f32.partialorder %v2690, 0.0
      %vm2699 = vcmp.gt.f32.partialorder %v2691, 0.0
      %vm2700 = vcmp.gt.f32.partialorder %v2692, 0.0
      %vm2701 = vcmp.gt.f32.partialorder %v2693, 0.0
      %v2702 = vmin.f32 %v2686, 0.0
      %v2703 = vmin.f32 %v2687, 0.0
      %v2704 = vmin.f32 %v2688, 0.0
      %v2705 = vmin.f32 %v2689, 0.0
      %v2706 = vmin.f32 %v2690, 0.0
      %v2707 = vmin.f32 %v2691, 0.0
      %v2708 = vmin.f32 %v2692, 0.0
      %v2709 = vmin.f32 %v2693, 0.0
      %v2710 = vmul.f32 %v2702, 1.442695
      %v2711 = vpow.pop %v2710
      %v2712 = vmul.f32 %v2703, 1.442695
      %v2713 = vpow.pop %v2712
      %v2714 = vmul.f32 %v2704, 1.442695
      %v2715 = vpow.pop %v2714
      %v2716 = vmul.f32 %v2705, 1.442695
      %v2717 = vpow.pop %v2716
      %v2718 = vmul.f32 %v2706, 1.442695
      %v2719 = vpow.pop %v2718
      %v2720 = vmul.f32 %v2707, 1.442695
      %v2721 = vpow.pop %v2720
      %v2722 = vmul.f32 %v2708, 1.442695
      %v2723 = vpow.pop %v2722
      %v2724 = vmul.f32 %v2709, 1.442695
      %v2725 = vpow.pop %v2724
      %v2726 = vsub.f32 %v2711, 1.0
      %v2727 = vsub.f32 %v2713, 1.0
      %v2728 = vsub.f32 %v2715, 1.0
      %v2729 = vsub.f32 %v2717, 1.0
      %v2730 = vsub.f32 %v2719, 1.0
      %v2731 = vsub.f32 %v2721, 1.0
      %v2732 = vsub.f32 %v2723, 1.0
      %v2733 = vsub.f32 %v2725, 1.0
      %v2734 = vsel %vm2694, %v2686, %v2726
      %v2735 = vsel %vm2695, %v2687, %v2727
      %v2736 = vsel %vm2696, %v2688, %v2728
      %v2737 = vsel %vm2697, %v2689, %v2729
      %v2738 = vsel %vm2698, %v2690, %v2730
      %v2739 = vsel %vm2699, %v2691, %v2731
      %v2740 = vsel %vm2700, %v2692, %v2732
      %v2741 = vsel %vm2701, %v2693, %v2733
      %v2742 = vpack.c.bf16 %v2738, %v2734
      %v2743 = vpack.c.bf16 %v2739, %v2735
      %v2744 = vpack.c.bf16 %v2740, %v2736
      %v2745 = vpack.c.bf16 %v2741, %v2737
      %v2746 = vld [vmem:[%s3] sm:$0xf]
      %v2747 = vld [vmem:[%s3 + $0x4] sm:$0xf]
      %v2748 = vld [vmem:[%s3 + $0x8] sm:$0xf]
      %v2749 = vld [vmem:[%s3 + $0xc] sm:$0xf]
      %v2750 = vld [vmem:[%s3 + $0x10] sm:$0xf]
      %v2751 = vld [vmem:[%s3 + $0x14] sm:$0xf]
      %v2752 = vld [vmem:[%s3 + $0x18] sm:$0xf]
      %v2753 = vld [vmem:[%s3 + $0x1c] sm:$0xf]
      %v2754 = vld [vmem:[%s3 + $0x20] sm:$0xf]
      %v2755 = vld [vmem:[%s3 + $0x24] sm:$0xf]
      %v2756 = vld [vmem:[%s3 + $0x28] sm:$0xf]
      %v2757 = vld [vmem:[%s3 + $0x2c] sm:$0xf]
      %v2758 = vld [vmem:[%s3 + $0x30] sm:$0xf]
      %v2759 = vld [vmem:[%s3 + $0x34] sm:$0xf]
      %v2760 = vld [vmem:[%s3 + $0x38] sm:$0xf]
      %v2761 = vld [vmem:[%s3 + $0x3c] sm:$0xf]
      %v2762 = vld [vmem:[%s3 + $0x40] sm:$0xf]
      %v2763 = vld [vmem:[%s3 + $0x44] sm:$0xf]
      %v2764 = vld [vmem:[%s3 + $0x48] sm:$0xf]
      %v2765 = vld [vmem:[%s3 + $0x4c] sm:$0xf]
      %v2766 = vld [vmem:[%s3 + $0x50] sm:$0xf]
      %v2767 = vld [vmem:[%s3 + $0x54] sm:$0xf]
      %v2768 = vld [vmem:[%s3 + $0x58] sm:$0xf]
      %v2769 = vld [vmem:[%s3 + $0x5c] sm:$0xf]
      %v2770 = vld [vmem:[%s3 + $0x60] sm:$0xf]
      %v2771 = vld [vmem:[%s3 + $0x64] sm:$0xf]
      %v2772 = vld [vmem:[%s3 + $0x68] sm:$0xf]
      %v2773 = vld [vmem:[%s3 + $0x6c] sm:$0xf]
      %v2774 = vld [vmem:[%s3 + $0x70] sm:$0xf]
      %v2775 = vld [vmem:[%s3 + $0x74] sm:$0xf]
      %v2776 = vld [vmem:[%s3 + $0x78] sm:$0xf]
      %v2777 = vld [vmem:[%s3 + $0x7c] sm:$0xf]
      %v2778 = vld [vmem:[%s3 + $0x80] sm:$0xf]
      %v2779 = vld [vmem:[%s3 + $0x84] sm:$0xf]
      %v2780 = vld [vmem:[%s3 + $0x88] sm:$0xf]
      %v2781 = vld [vmem:[%s3 + $0x8c] sm:$0xf]
      %v2782 = vld [vmem:[%s3 + $0x90] sm:$0xf]
      %v2783 = vld [vmem:[%s3 + $0x94] sm:$0xf]
      %v2784 = vld [vmem:[%s3 + $0x98] sm:$0xf]
      %v2785 = vld [vmem:[%s3 + $0x9c] sm:$0xf]
      %v2786 = vld [vmem:[%s3 + $0xa0] sm:$0xf]
      %v2787 = vld [vmem:[%s3 + $0xa4] sm:$0xf]
      %v2788 = vld [vmem:[%s3 + $0xa8] sm:$0xf]
      %v2789 = vld [vmem:[%s3 + $0xac] sm:$0xf]
      %v2790 = vld [vmem:[%s3 + $0xb0] sm:$0xf]
      %v2791 = vld [vmem:[%s3 + $0xb4] sm:$0xf]
      %v2792 = vld [vmem:[%s3 + $0xb8] sm:$0xf]
      %v2793 = vld [vmem:[%s3 + $0xbc] sm:$0xf]
      %v2794 = vld [vmem:[%s3 + $0xc0] sm:$0xf]
      %v2795 = vld [vmem:[%s3 + $0xc4] sm:$0xf]
      %v2796 = vld [vmem:[%s3 + $0xc8] sm:$0xf]
      %v2797 = vld [vmem:[%s3 + $0xcc] sm:$0xf]
      %v2798 = vld [vmem:[%s3 + $0xd0] sm:$0xf]
      %v2799 = vld [vmem:[%s3 + $0xd4] sm:$0xf]
      %v2800 = vld [vmem:[%s3 + $0xd8] sm:$0xf]
      %v2801 = vld [vmem:[%s3 + $0xdc] sm:$0xf]
      %v2802 = vld [vmem:[%s3 + $0xe0] sm:$0xf]
      %v2803 = vld [vmem:[%s3 + $0xe4] sm:$0xf]
      %v2804 = vld [vmem:[%s3 + $0xe8] sm:$0xf]
      %v2805 = vld [vmem:[%s3 + $0xec] sm:$0xf]
      %v2806 = vld [vmem:[%s3 + $0xf0] sm:$0xf]
      %v2807 = vld [vmem:[%s3 + $0xf4] sm:$0xf]
      %v2808 = vld [vmem:[%s3 + $0xf8] sm:$0xf]
      %v2809 = vld [vmem:[%s3 + $0xfc] sm:$0xf]
      %v2874 = vunpack.c.l.b16 %v2746
      %v2875 = vunpack.c.l.b16 %v2747
      %v2876 = vunpack.c.l.b16 %v2748
      %v2877 = vunpack.c.l.b16 %v2749
      %v2878 = vunpack.c.l.b16 %v2750
      %v2879 = vunpack.c.l.b16 %v2751
      %v2880 = vunpack.c.l.b16 %v2752
      %v2881 = vunpack.c.l.b16 %v2753
      %v2882 = vunpack.c.l.b16 %v2754
      %v2883 = vunpack.c.l.b16 %v2755
      %v2884 = vunpack.c.l.b16 %v2756
      %v2885 = vunpack.c.l.b16 %v2757
      %v2886 = vunpack.c.l.b16 %v2758
      %v2887 = vunpack.c.l.b16 %v2759
      %v2888 = vunpack.c.l.b16 %v2760
      %v2889 = vunpack.c.l.b16 %v2761
      %v2890 = vunpack.c.l.b16 %v2762
      %v2891 = vunpack.c.l.b16 %v2763
      %v2892 = vunpack.c.l.b16 %v2764
      %v2893 = vunpack.c.l.b16 %v2765
      %v2894 = vunpack.c.l.b16 %v2766
      %v2895 = vunpack.c.l.b16 %v2767
      %v2896 = vunpack.c.l.b16 %v2768
      %v2897 = vunpack.c.l.b16 %v2769
      %v2898 = vunpack.c.l.b16 %v2770
      %v2899 = vunpack.c.l.b16 %v2771
      %v2900 = vunpack.c.l.b16 %v2772
      %v2901 = vunpack.c.l.b16 %v2773
      %v2902 = vunpack.c.l.b16 %v2774
      %v2903 = vunpack.c.l.b16 %v2775
      %v2904 = vunpack.c.l.b16 %v2776
      %v2905 = vunpack.c.l.b16 %v2777
      %v2906 = vunpack.c.l.b16 %v2778
      %v2907 = vunpack.c.l.b16 %v2779
      %v2908 = vunpack.c.l.b16 %v2780
      %v2909 = vunpack.c.l.b16 %v2781
      %v2910 = vunpack.c.l.b16 %v2782
      %v2911 = vunpack.c.l.b16 %v2783
      %v2912 = vunpack.c.l.b16 %v2784
      %v2913 = vunpack.c.l.b16 %v2785
      %v2914 = vunpack.c.l.b16 %v2786
      %v2915 = vunpack.c.l.b16 %v2787
      %v2916 = vunpack.c.l.b16 %v2788
      %v2917 = vunpack.c.l.b16 %v2789
      %v2918 = vunpack.c.l.b16 %v2790
      %v2919 = vunpack.c.l.b16 %v2791
      %v2920 = vunpack.c.l.b16 %v2792
      %v2921 = vunpack.c.l.b16 %v2793
      %v2922 = vunpack.c.l.b16 %v2794
      %v2923 = vunpack.c.l.b16 %v2795
      %v2924 = vunpack.c.l.b16 %v2796
      %v2925 = vunpack.c.l.b16 %v2797
      %v2926 = vunpack.c.l.b16 %v2798
      %v2927 = vunpack.c.l.b16 %v2799
      %v2928 = vunpack.c.l.b16 %v2800
      %v2929 = vunpack.c.l.b16 %v2801
      %v2930 = vunpack.c.l.b16 %v2802
      %v2931 = vunpack.c.l.b16 %v2803
      %v2932 = vunpack.c.l.b16 %v2804
      %v2933 = vunpack.c.l.b16 %v2805
      %v2934 = vunpack.c.l.b16 %v2806
      %v2935 = vunpack.c.l.b16 %v2807
      %v2936 = vunpack.c.l.b16 %v2808
      %v2937 = vunpack.c.l.b16 %v2809
      %v2938 = vpack.c.b16 %v2875, %v2874
      %v2939 = vpack.c.b16 %v2877, %v2876
      %v2940 = vpack.c.b16 %v2879, %v2878
      %v2941 = vpack.c.b16 %v2881, %v2880
      %v2942 = vpack.c.b16 %v2883, %v2882
      %v2943 = vpack.c.b16 %v2885, %v2884
      %v2944 = vpack.c.b16 %v2887, %v2886
      %v2945 = vpack.c.b16 %v2889, %v2888
      %v2946 = vpack.c.b16 %v2891, %v2890
      %v2947 = vpack.c.b16 %v2893, %v2892
      %v2948 = vpack.c.b16 %v2895, %v2894
      %v2949 = vpack.c.b16 %v2897, %v2896
      %v2950 = vpack.c.b16 %v2899, %v2898
      %v2951 = vpack.c.b16 %v2901, %v2900
      %v2952 = vpack.c.b16 %v2903, %v2902
      %v2953 = vpack.c.b16 %v2905, %v2904
      %v2954 = vpack.c.b16 %v2907, %v2906
      %v2955 = vpack.c.b16 %v2909, %v2908
      %v2956 = vpack.c.b16 %v2911, %v2910
      %v2957 = vpack.c.b16 %v2913, %v2912
      %v2958 = vpack.c.b16 %v2915, %v2914
      %v2959 = vpack.c.b16 %v2917, %v2916
      %v2960 = vpack.c.b16 %v2919, %v2918
      %v2961 = vpack.c.b16 %v2921, %v2920
      %v2962 = vpack.c.b16 %v2923, %v2922
      %v2963 = vpack.c.b16 %v2925, %v2924
      %v2964 = vpack.c.b16 %v2927, %v2926
      %v2965 = vpack.c.b16 %v2929, %v2928
      %v2966 = vpack.c.b16 %v2931, %v2930
      %v2967 = vpack.c.b16 %v2933, %v2932
      %v2968 = vpack.c.b16 %v2935, %v2934
      %v2969 = vpack.c.b16 %v2937, %v2936
      %3002 = vmatpush.bf16.msra.mxu0 %v2945
      %3003 = vmatpush.bf16.msra.mxu0 %v2944
      %3004 = vmatpush.bf16.msra.mxu0 %v2943
      %3005 = vmatpush.bf16.msra.mxu0 %v2942
      %3006 = vmatpush.bf16.msra.mxu0 %v2941
      %3007 = vmatpush.bf16.msra.mxu0 %v2940
      %3008 = vmatpush.bf16.msra.mxu0 %v2939
      %3009 = vmatpush.bf16.msra.mxu0 %v2938
      %3010 = vmatmul.bf16.gmra.mxu0 %v2742
      %v3011 = vpop.f32.mrf.mxu0
      %v3012 = vadd.f32 0.0, %v3011
      %v3013 = vpop.f32.mrf.mxu0
      %v3014 = vadd.f32 0.0, %v3013
      %3015 = vdwg.mxu0
      %3016 = vmatpush.bf16.msra.mxu0 %v2953
      %3017 = vmatpush.bf16.msra.mxu0 %v2952
      %3018 = vmatpush.bf16.msra.mxu0 %v2951
      %3019 = vmatpush.bf16.msra.mxu0 %v2950
      %3020 = vmatpush.bf16.msra.mxu0 %v2949
      %3021 = vmatpush.bf16.msra.mxu0 %v2948
      %3022 = vmatpush.bf16.msra.mxu0 %v2947
      %3023 = vmatpush.bf16.msra.mxu0 %v2946
      %3024 = vmatmul.bf16.gmra.mxu0 %v2743
      %v3025 = vpop.f32.mrf.mxu0
      %v3026 = vadd.f32 %v3012, %v3025
      %v3027 = vpop.f32.mrf.mxu0
      %v3028 = vadd.f32 %v3014, %v3027
      %3029 = vdwg.mxu0
      %3030 = vmatpush.bf16.msra.mxu0 %v2961
      %3031 = vmatpush.bf16.msra.mxu0 %v2960
      %3032 = vmatpush.bf16.msra.mxu0 %v2959
      %3033 = vmatpush.bf16.msra.mxu0 %v2958
      %3034 = vmatpush.bf16.msra.mxu0 %v2957
      %3035 = vmatpush.bf16.msra.mxu0 %v2956
      %3036 = vmatpush.bf16.msra.mxu0 %v2955
      %3037 = vmatpush.bf16.msra.mxu0 %v2954
      %3038 = vmatmul.bf16.gmra.mxu0 %v2744
      %v3039 = vpop.f32.mrf.mxu0
      %v3040 = vadd.f32 %v3026, %v3039
      %v3041 = vpop.f32.mrf.mxu0
      %v3042 = vadd.f32 %v3028, %v3041
      %3043 = vdwg.mxu0
      %3044 = vmatpush.bf16.msra.mxu0 %v2969
      %3045 = vmatpush.bf16.msra.mxu0 %v2968
      %3046 = vmatpush.bf16.msra.mxu0 %v2967
      %3047 = vmatpush.bf16.msra.mxu0 %v2966
      %3048 = vmatpush.bf16.msra.mxu0 %v2965
      %3049 = vmatpush.bf16.msra.mxu0 %v2964
      %3050 = vmatpush.bf16.msra.mxu0 %v2963
      %3051 = vmatpush.bf16.msra.mxu0 %v2962
      %3052 = vmatmul.bf16.gmra.mxu0 %v2745
      %v3053 = vpop.f32.mrf.mxu0
      %v3054 = vadd.f32 %v3040, %v3053
      %v3055 = vpop.f32.mrf.mxu0
      %v3056 = vadd.f32 %v3042, %v3055
      %3057 = vdwg.mxu0
      %3060 = vrot.lane.b32.xlu0 %v3054, 56
      %v3061 = vpop.permute.xlu0 %3060
      %3062 = vrot.lane.b32.xlu0 %v3056, 56
      %v3063 = vpop.permute.xlu0 %3062
      %v3066 = vsel %vm1200, 0.0, %v3061
      %v3067 = vsel %vm1200, 0.0, %v3063
      %v3068 = vsel %vm1200, %v3061, 0.0
      %v3069 = vsel %vm1200, %v3063, 0.0
      %v3070 = vld [vmem:[%s4] sm:$0xff]
      %v3071 = vld [vmem:[%s4 + $0x8] sm:$0xff]
      %3073 = vset.pattern.permute.xlu0 0
      %3074 = vperm.xlu0 %3073, %v3070
      %v3075 = vpop.permute.xlu0 %3074
      %3078 = vset.pattern.permute.xlu0 0
      %3079 = vperm.xlu0 %3078, %v3071
      %v3080 = vpop.permute.xlu0 %3079
      %v3082 = vmul.f32 %v3075, %v3066
      %v3083 = vmul.f32 %v3080, %v3067
      %v3084 = vadd.f32 %v3082, 0.0
      %v3085 = vadd.f32 %v3083, 0.0
      %3086 = vset.pattern.permute.xlu0 1
      %3087 = vperm.xlu0 %3086, %v3070
      %v3088 = vpop.permute.xlu0 %3087
      %3090 = vset.pattern.permute.xlu0 1
      %3091 = vperm.xlu0 %3090, %v3071
      %v3092 = vpop.permute.xlu0 %3091
      %v3094 = vmul.f32 %v3088, %v3066
      %v3095 = vmul.f32 %v3088, %v3068
      %v3096 = vmul.f32 %v3092, %v3067
      %v3097 = vmul.f32 %v3092, %v3069
      %3102 = vrot.lane.b32.xlu0 %v3094, 120
      %v3103 = vpop.permute.xlu0 %3102
      %3104 = vrot.lane.b32.xlu0 %v3095, 120
      %v3105 = vpop.permute.xlu0 %3104
      %3106 = vrot.lane.b32.xlu0 %v3096, 120
      %v3107 = vpop.permute.xlu0 %3106
      %3108 = vrot.lane.b32.xlu0 %v3097, 120
      %v3109 = vpop.permute.xlu0 %3108
      %v3110 = vsel %vm616, %v3103, %v3105
      %v3111 = vsel %vm616, %v3107, %v3109
      %v3114 = vadd.f32 %v3084, %v3110
      %v3115 = vadd.f32 %v3085, %v3111
      %3116 = vset.pattern.permute.xlu0 2
      %3117 = vperm.xlu0 %3116, %v3070
      %v3118 = vpop.permute.xlu0 %3117
      %3120 = vset.pattern.permute.xlu0 2
      %3121 = vperm.xlu0 %3120, %v3071
      %v3122 = vpop.permute.xlu0 %3121
      %v3124 = vmul.f32 %v3118, %v3066
      %v3125 = vmul.f32 %v3118, %v3068
      %v3126 = vmul.f32 %v3122, %v3067
      %v3127 = vmul.f32 %v3122, %v3069
      %3132 = vrot.lane.b32.xlu0 %v3124, 112
      %v3133 = vpop.permute.xlu0 %3132
      %3134 = vrot.lane.b32.xlu0 %v3125, 112
      %v3135 = vpop.permute.xlu0 %3134
      %3136 = vrot.lane.b32.xlu0 %v3126, 112
      %v3137 = vpop.permute.xlu0 %3136
      %3138 = vrot.lane.b32.xlu0 %v3127, 112
      %v3139 = vpop.permute.xlu0 %3138
      %v3140 = vsel %vm689, %v3133, %v3135
      %v3141 = vsel %vm689, %v3137, %v3139
      %v3144 = vadd.f32 %v3114, %v3140
      %v3145 = vadd.f32 %v3115, %v3141
      %3146 = vset.pattern.permute.xlu0 3
      %3147 = vperm.xlu0 %3146, %v3070
      %v3148 = vpop.permute.xlu0 %3147
      %3150 = vset.pattern.permute.xlu0 3
      %3151 = vperm.xlu0 %3150, %v3071
      %v3152 = vpop.permute.xlu0 %3151
      %v3154 = vmul.f32 %v3148, %v3066
      %v3155 = vmul.f32 %v3148, %v3068
      %v3156 = vmul.f32 %v3152, %v3067
      %v3157 = vmul.f32 %v3152, %v3069
      %3162 = vrot.lane.b32.xlu0 %v3154, 104
      %v3163 = vpop.permute.xlu0 %3162
      %3164 = vrot.lane.b32.xlu0 %v3155, 104
      %v3165 = vpop.permute.xlu0 %3164
      %3166 = vrot.lane.b32.xlu0 %v3156, 104
      %v3167 = vpop.permute.xlu0 %3166
      %3168 = vrot.lane.b32.xlu0 %v3157, 104
      %v3169 = vpop.permute.xlu0 %3168
      %v3170 = vsel %vm762, %v3163, %v3165
      %v3171 = vsel %vm762, %v3167, %v3169
      %v3174 = vadd.f32 %v3144, %v3170
      %v3175 = vadd.f32 %v3145, %v3171
      %3176 = vset.pattern.permute.xlu0 4
      %3177 = vperm.xlu0 %3176, %v3070
      %v3178 = vpop.permute.xlu0 %3177
      %3180 = vset.pattern.permute.xlu0 4
      %3181 = vperm.xlu0 %3180, %v3071
      %v3182 = vpop.permute.xlu0 %3181
      %v3184 = vmul.f32 %v3178, %v3066
      %v3185 = vmul.f32 %v3178, %v3068
      %v3186 = vmul.f32 %v3182, %v3067
      %v3187 = vmul.f32 %v3182, %v3069
      %3192 = vrot.lane.b32.xlu0 %v3184, 96
      %v3193 = vpop.permute.xlu0 %3192
      %3194 = vrot.lane.b32.xlu0 %v3185, 96
      %v3195 = vpop.permute.xlu0 %3194
      %3196 = vrot.lane.b32.xlu0 %v3186, 96
      %v3197 = vpop.permute.xlu0 %3196
      %3198 = vrot.lane.b32.xlu0 %v3187, 96
      %v3199 = vpop.permute.xlu0 %3198
      %v3200 = vsel %vm835, %v3193, %v3195
      %v3201 = vsel %vm835, %v3197, %v3199
      %v3204 = vadd.f32 %v3174, %v3200
      %v3205 = vadd.f32 %v3175, %v3201
      %3206 = vset.pattern.permute.xlu0 5
      %3207 = vperm.xlu0 %3206, %v3070
      %v3208 = vpop.permute.xlu0 %3207
      %3210 = vset.pattern.permute.xlu0 5
      %3211 = vperm.xlu0 %3210, %v3071
      %v3212 = vpop.permute.xlu0 %3211
      %v3214 = vmul.f32 %v3208, %v3066
      %v3215 = vmul.f32 %v3208, %v3068
      %v3216 = vmul.f32 %v3212, %v3067
      %v3217 = vmul.f32 %v3212, %v3069
      %3222 = vrot.lane.b32.xlu0 %v3214, 88
      %v3223 = vpop.permute.xlu0 %3222
      %3224 = vrot.lane.b32.xlu0 %v3215, 88
      %v3225 = vpop.permute.xlu0 %3224
      %3226 = vrot.lane.b32.xlu0 %v3216, 88
      %v3227 = vpop.permute.xlu0 %3226
      %3228 = vrot.lane.b32.xlu0 %v3217, 88
      %v3229 = vpop.permute.xlu0 %3228
      %v3230 = vsel %vm908, %v3223, %v3225
      %v3231 = vsel %vm908, %v3227, %v3229
      %v3234 = vadd.f32 %v3204, %v3230
      %v3235 = vadd.f32 %v3205, %v3231
      %3236 = vset.pattern.permute.xlu0 6
      %3237 = vperm.xlu0 %3236, %v3070
      %v3238 = vpop.permute.xlu0 %3237
      %3240 = vset.pattern.permute.xlu0 6
      %3241 = vperm.xlu0 %3240, %v3071
      %v3242 = vpop.permute.xlu0 %3241
      %v3244 = vmul.f32 %v3238, %v3066
      %v3245 = vmul.f32 %v3238, %v3068
      %v3246 = vmul.f32 %v3242, %v3067
      %v3247 = vmul.f32 %v3242, %v3069
      %3252 = vrot.lane.b32.xlu0 %v3244, 80
      %v3253 = vpop.permute.xlu0 %3252
      %3254 = vrot.lane.b32.xlu0 %v3245, 80
      %v3255 = vpop.permute.xlu0 %3254
      %3256 = vrot.lane.b32.xlu0 %v3246, 80
      %v3257 = vpop.permute.xlu0 %3256
      %3258 = vrot.lane.b32.xlu0 %v3247, 80
      %v3259 = vpop.permute.xlu0 %3258
      %v3260 = vsel %vm981, %v3253, %v3255
      %v3261 = vsel %vm981, %v3257, %v3259
      %v3264 = vadd.f32 %v3234, %v3260
      %v3265 = vadd.f32 %v3235, %v3261
      %3266 = vset.pattern.permute.xlu0 7
      %3267 = vperm.xlu0 %3266, %v3070
      %v3268 = vpop.permute.xlu0 %3267
      %3270 = vset.pattern.permute.xlu0 7
      %3271 = vperm.xlu0 %3270, %v3071
      %v3272 = vpop.permute.xlu0 %3271
      %v3274 = vmul.f32 %v3268, %v3066
      %v3275 = vmul.f32 %v3268, %v3068
      %v3276 = vmul.f32 %v3272, %v3067
      %v3277 = vmul.f32 %v3272, %v3069
      %3282 = vrot.lane.b32.xlu0 %v3274, 72
      %v3283 = vpop.permute.xlu0 %3282
      %3284 = vrot.lane.b32.xlu0 %v3275, 72
      %v3285 = vpop.permute.xlu0 %3284
      %3286 = vrot.lane.b32.xlu0 %v3276, 72
      %v3287 = vpop.permute.xlu0 %3286
      %3288 = vrot.lane.b32.xlu0 %v3277, 72
      %v3289 = vpop.permute.xlu0 %3288
      %v3290 = vsel %vm1054, %v3283, %v3285
      %v3291 = vsel %vm1054, %v3287, %v3289
      %v3294 = vadd.f32 %v3264, %v3290
      %v3295 = vadd.f32 %v3265, %v3291
      %3296 = vset.pattern.permute.xlu0 8
      %3297 = vperm.xlu0 %3296, %v3070
      %v3298 = vpop.permute.xlu0 %3297
      %3300 = vset.pattern.permute.xlu0 8
      %3301 = vperm.xlu0 %3300, %v3071
      %v3302 = vpop.permute.xlu0 %3301
      %v3304 = vmul.f32 %v3298, %v3066
      %v3305 = vmul.f32 %v3298, %v3068
      %v3306 = vmul.f32 %v3302, %v3067
      %v3307 = vmul.f32 %v3302, %v3069
      %3312 = vrot.lane.b32.xlu0 %v3304, 64
      %v3313 = vpop.permute.xlu0 %3312
      %3314 = vrot.lane.b32.xlu0 %v3305, 64
      %v3315 = vpop.permute.xlu0 %3314
      %3316 = vrot.lane.b32.xlu0 %v3306, 64
      %v3317 = vpop.permute.xlu0 %3316
      %3318 = vrot.lane.b32.xlu0 %v3307, 64
      %v3319 = vpop.permute.xlu0 %3318
      %v3320 = vsel %vm1127, %v3313, %v3315
      %v3321 = vsel %vm1127, %v3317, %v3319
      %v3324 = vadd.f32 %v3294, %v3320
      %v3325 = vadd.f32 %v3295, %v3321
      %3326 = vset.pattern.permute.xlu0 9
      %3327 = vperm.xlu0 %3326, %v3070
      %v3328 = vpop.permute.xlu0 %3327
      %3330 = vset.pattern.permute.xlu0 9
      %3331 = vperm.xlu0 %3330, %v3071
      %v3332 = vpop.permute.xlu0 %3331
      %v3334 = vmul.f32 %v3328, %v3066
      %v3335 = vmul.f32 %v3328, %v3068
      %v3336 = vmul.f32 %v3332, %v3067
      %v3337 = vmul.f32 %v3332, %v3069
      %3342 = vrot.lane.b32.xlu0 %v3334, 56
      %v3343 = vpop.permute.xlu0 %3342
      %3344 = vrot.lane.b32.xlu0 %v3335, 56
      %v3345 = vpop.permute.xlu0 %3344
      %3346 = vrot.lane.b32.xlu0 %v3336, 56
      %v3347 = vpop.permute.xlu0 %3346
      %3348 = vrot.lane.b32.xlu0 %v3337, 56
      %v3349 = vpop.permute.xlu0 %3348
      %v3350 = vsel %vm1200, %v3343, %v3345
      %v3351 = vsel %vm1200, %v3347, %v3349
      %v3354 = vadd.f32 %v3324, %v3350
      %v3355 = vadd.f32 %v3325, %v3351
      %3356 = vset.pattern.permute.xlu0 10
      %3357 = vperm.xlu0 %3356, %v3070
      %v3358 = vpop.permute.xlu0 %3357
      %3360 = vset.pattern.permute.xlu0 10
      %3361 = vperm.xlu0 %3360, %v3071
      %v3362 = vpop.permute.xlu0 %3361
      %v3364 = vmul.f32 %v3358, %v3066
      %v3365 = vmul.f32 %v3358, %v3068
      %v3366 = vmul.f32 %v3362, %v3067
      %v3367 = vmul.f32 %v3362, %v3069
      %3372 = vrot.lane.b32.xlu0 %v3364, 48
      %v3373 = vpop.permute.xlu0 %3372
      %3374 = vrot.lane.b32.xlu0 %v3365, 48
      %v3375 = vpop.permute.xlu0 %3374
      %3376 = vrot.lane.b32.xlu0 %v3366, 48
      %v3377 = vpop.permute.xlu0 %3376
      %3378 = vrot.lane.b32.xlu0 %v3367, 48
      %v3379 = vpop.permute.xlu0 %3378
      %v3380 = vsel %vm1273, %v3373, %v3375
      %v3381 = vsel %vm1273, %v3377, %v3379
      %v3384 = vadd.f32 %v3354, %v3380
      %v3385 = vadd.f32 %v3355, %v3381
      %3386 = vset.pattern.permute.xlu0 11
      %3387 = vperm.xlu0 %3386, %v3070
      %v3388 = vpop.permute.xlu0 %3387
      %3390 = vset.pattern.permute.xlu0 11
      %3391 = vperm.xlu0 %3390, %v3071
      %v3392 = vpop.permute.xlu0 %3391
      %v3394 = vmul.f32 %v3388, %v3066
      %v3395 = vmul.f32 %v3388, %v3068
      %v3396 = vmul.f32 %v3392, %v3067
      %v3397 = vmul.f32 %v3392, %v3069
      %3402 = vrot.lane.b32.xlu0 %v3394, 40
      %v3403 = vpop.permute.xlu0 %3402
      %3404 = vrot.lane.b32.xlu0 %v3395, 40
      %v3405 = vpop.permute.xlu0 %3404
      %3406 = vrot.lane.b32.xlu0 %v3396, 40
      %v3407 = vpop.permute.xlu0 %3406
      %3408 = vrot.lane.b32.xlu0 %v3397, 40
      %v3409 = vpop.permute.xlu0 %3408
      %v3410 = vsel %vm1346, %v3403, %v3405
      %v3411 = vsel %vm1346, %v3407, %v3409
      %v3414 = vadd.f32 %v3384, %v3410
      %v3415 = vadd.f32 %v3385, %v3411
      %3416 = vset.pattern.permute.xlu0 12
      %3417 = vperm.xlu0 %3416, %v3070
      %v3418 = vpop.permute.xlu0 %3417
      %3420 = vset.pattern.permute.xlu0 12
      %3421 = vperm.xlu0 %3420, %v3071
      %v3422 = vpop.permute.xlu0 %3421
      %v3424 = vmul.f32 %v3418, %v3066
      %v3425 = vmul.f32 %v3418, %v3068
      %v3426 = vmul.f32 %v3422, %v3067
      %v3427 = vmul.f32 %v3422, %v3069
      %3432 = vrot.lane.b32.xlu0 %v3424, 32
      %v3433 = vpop.permute.xlu0 %3432
      %3434 = vrot.lane.b32.xlu0 %v3425, 32
      %v3435 = vpop.permute.xlu0 %3434
      %3436 = vrot.lane.b32.xlu0 %v3426, 32
      %v3437 = vpop.permute.xlu0 %3436
      %3438 = vrot.lane.b32.xlu0 %v3427, 32
      %v3439 = vpop.permute.xlu0 %3438
      %v3440 = vsel %vm1419, %v3433, %v3435
      %v3441 = vsel %vm1419, %v3437, %v3439
      %v3444 = vadd.f32 %v3414, %v3440
      %v3445 = vadd.f32 %v3415, %v3441
      %3446 = vset.pattern.permute.xlu0 13
      %3447 = vperm.xlu0 %3446, %v3070
      %v3448 = vpop.permute.xlu0 %3447
      %3450 = vset.pattern.permute.xlu0 13
      %3451 = vperm.xlu0 %3450, %v3071
      %v3452 = vpop.permute.xlu0 %3451
      %v3454 = vmul.f32 %v3448, %v3066
      %v3455 = vmul.f32 %v3448, %v3068
      %v3456 = vmul.f32 %v3452, %v3067
      %v3457 = vmul.f32 %v3452, %v3069
      %3462 = vrot.lane.b32.xlu0 %v3454, 24
      %v3463 = vpop.permute.xlu0 %3462
      %3464 = vrot.lane.b32.xlu0 %v3455, 24
      %v3465 = vpop.permute.xlu0 %3464
      %3466 = vrot.lane.b32.xlu0 %v3456, 24
      %v3467 = vpop.permute.xlu0 %3466
      %3468 = vrot.lane.b32.xlu0 %v3457, 24
      %v3469 = vpop.permute.xlu0 %3468
      %v3470 = vsel %vm433, %v3463, %v3465
      %v3471 = vsel %vm433, %v3467, %v3469
      %v3474 = vadd.f32 %v3444, %v3470
      %v3475 = vadd.f32 %v3445, %v3471
      %3476 = vset.pattern.permute.xlu0 14
      %3477 = vperm.xlu0 %3476, %v3070
      %v3478 = vpop.permute.xlu0 %3477
      %3480 = vset.pattern.permute.xlu0 14
      %3481 = vperm.xlu0 %3480, %v3071
      %v3482 = vpop.permute.xlu0 %3481
      %v3484 = vmul.f32 %v3478, %v3066
      %v3485 = vmul.f32 %v3478, %v3068
      %v3486 = vmul.f32 %v3482, %v3067
      %v3487 = vmul.f32 %v3482, %v3069
      %3492 = vrot.lane.b32.xlu0 %v3484, 16
      %v3493 = vpop.permute.xlu0 %3492
      %3494 = vrot.lane.b32.xlu0 %v3485, 16
      %v3495 = vpop.permute.xlu0 %3494
      %3496 = vrot.lane.b32.xlu0 %v3486, 16
      %v3497 = vpop.permute.xlu0 %3496
      %3498 = vrot.lane.b32.xlu0 %v3487, 16
      %v3499 = vpop.permute.xlu0 %3498
      %v3500 = vsel %vm1564, %v3493, %v3495
      %v3501 = vsel %vm1564, %v3497, %v3499
      %v3504 = vadd.f32 %v3474, %v3500
      %v3505 = vadd.f32 %v3475, %v3501
      %v3506 = vld [vmem:[%s5] sm:$0xf]
      %v3507 = vld [vmem:[%s5 + $0x4] sm:$0xf]
      %v3508 = vpack.c.bf16 %v3505, %v3504
      %v3511 = vunpack.c.l.b16 %v3506
      %v3512 = vunpack.c.l.b16 %v3507
      %v3513 = vpack.c.b16 %v3512, %v3511
      %v3515 = vsel %vm1564, %v3513, 0
      %3517 = vmatpush.bf16.msra.mxu0 0
      %3518 = vmatpush.bf16.msra.mxu0 0
      %3519 = vmatpush.bf16.msra.mxu0 0
      %3520 = vmatpush.bf16.msra.mxu0 0
      %3521 = vmatpush.bf16.msra.mxu0 0
      %3522 = vmatpush.bf16.msra.mxu0 0
      %3523 = vmatpush.bf16.msra.mxu0 0
      %3524 = vmatpush.bf16.msra.mxu0 %v3508
      %3525 = vmatmul.bf16.gmra.mxu0 %v3515
      %v3526 = vpop.f32.mrf.mxu0
      %v3527 = vadd.f32 0.0, %v3526
      %v3528 = vpop.f32.mrf.mxu0
      %v3529 = vadd.f32 0.0, %v3528
      %3530 = vdwg.mxu0
      %vm3531 = vcmp.gt.f32.partialorder %v3527, 0.0
      %vm3532 = vcmp.gt.f32.partialorder %v3529, 0.0
      %v3533 = vmin.f32 %v3527, 0.0
      %v3534 = vmin.f32 %v3529, 0.0
      %v3535 = vmul.f32 %v3533, 1.442695
      %v3536 = vpow.pop %v3535
      %v3537 = vmul.f32 %v3534, 1.442695
      %v3538 = vpow.pop %v3537
      %v3539 = vsub.f32 %v3536, 1.0
      %v3540 = vsub.f32 %v3538, 1.0
      %v3541 = vsel %vm3531, %v3527, %v3539
      %v3542 = vsel %vm3532, %v3529, %v3540
      %v3543 = vpack.c.bf16 %v3542, %v3541
      %v3544 = vld [vmem:[%s6] sm:$0xf]
      %v3545 = vld [vmem:[%s6 + $0x4] sm:$0xf]
      %v3546 = vld [vmem:[%s6 + $0x8] sm:$0xf]
      %v3547 = vld [vmem:[%s6 + $0xc] sm:$0xf]
      %v3548 = vld [vmem:[%s6 + $0x10] sm:$0xf]
      %v3549 = vld [vmem:[%s6 + $0x14] sm:$0xf]
      %v3550 = vld [vmem:[%s6 + $0x18] sm:$0xf]
      %v3551 = vld [vmem:[%s6 + $0x1c] sm:$0xf]
      %v3552 = vld [vmem:[%s6 + $0x20] sm:$0xf]
      %v3553 = vld [vmem:[%s6 + $0x24] sm:$0xf]
      %v3554 = vld [vmem:[%s6 + $0x28] sm:$0xf]
      %v3555 = vld [vmem:[%s6 + $0x2c] sm:$0xf]
      %v3556 = vld [vmem:[%s6 + $0x30] sm:$0xf]
      %v3557 = vld [vmem:[%s6 + $0x34] sm:$0xf]
      %v3558 = vld [vmem:[%s6 + $0x38] sm:$0xf]
      %v3559 = vld [vmem:[%s6 + $0x3c] sm:$0xf]
      %v3576 = vunpack.c.l.b16 %v3544
      %v3577 = vunpack.c.l.b16 %v3545
      %v3578 = vunpack.c.l.b16 %v3546
      %v3579 = vunpack.c.l.b16 %v3547
      %v3580 = vunpack.c.l.b16 %v3548
      %v3581 = vunpack.c.l.b16 %v3549
      %v3582 = vunpack.c.l.b16 %v3550
      %v3583 = vunpack.c.l.b16 %v3551
      %v3584 = vunpack.c.l.b16 %v3552
      %v3585 = vunpack.c.l.b16 %v3553
      %v3586 = vunpack.c.l.b16 %v3554
      %v3587 = vunpack.c.l.b16 %v3555
      %v3588 = vunpack.c.l.b16 %v3556
      %v3589 = vunpack.c.l.b16 %v3557
      %v3590 = vunpack.c.l.b16 %v3558
      %v3591 = vunpack.c.l.b16 %v3559
      %v3592 = vpack.c.b16 %v3577, %v3576
      %v3593 = vpack.c.b16 %v3579, %v3578
      %v3594 = vpack.c.b16 %v3581, %v3580
      %v3595 = vpack.c.b16 %v3583, %v3582
      %v3596 = vpack.c.b16 %v3585, %v3584
      %v3597 = vpack.c.b16 %v3587, %v3586
      %v3598 = vpack.c.b16 %v3589, %v3588
      %v3599 = vpack.c.b16 %v3591, %v3590
      %3608 = vmatpush.bf16.msra.mxu0 %v3599
      %3609 = vmatpush.bf16.msra.mxu0 %v3598
      %3610 = vmatpush.bf16.msra.mxu0 %v3597
      %3611 = vmatpush.bf16.msra.mxu0 %v3596
      %3612 = vmatpush.bf16.msra.mxu0 %v3595
      %3613 = vmatpush.bf16.msra.mxu0 %v3594
      %3614 = vmatpush.bf16.msra.mxu0 %v3593
      %3615 = vmatpush.bf16.msra.mxu0 %v3592
      %3616 = vmatmul.bf16.gmra.mxu0 %v3543
      %v3617 = vpop.f32.mrf.mxu0
      %v3618 = vadd.f32 0.0, %v3617
      %v3619 = vpop.f32.mrf.mxu0
      %v3620 = vadd.f32 0.0, %v3619
      %3621 = vdwg.mxu0
      %3624 = vrot.lane.b32.xlu0 %v3618, 120
      %v3625 = vpop.permute.xlu0 %3624
      %3626 = vrot.lane.b32.xlu0 %v3620, 120
      %v3627 = vpop.permute.xlu0 %3626
      %3630 = vst.msk [vmem:[%s366] sm:$0xff] %vm1637, %v3618
      %3631 = vst.msk [vmem:[%s366 + $0x8] sm:$0xff] %vm1637, %v3620
      %3632 = vst.msk [vmem:[%s366 + $0x10] sm:$0xff] %vm1637, %v3625
      %3633 = vst.msk [vmem:[%s366 + $0x18] sm:$0xff] %vm1637, %v3627
      %v3634 = vld [vmem:[%s7] sm:$0x7]
      %v3635 = vld [vmem:[%s8] sm:$0x7]
      %3637 = vset.pattern.permute.xlu0 0
      %3638 = vperm.xlu0 %3637, %v3635
      %v3639 = vpop.permute.xlu0 %3638
      %v3642 = vsel %vm1419, %v3634, 0
      %3644 = vmatpush.msra.mxu0 0.0
      %3645 = vmatpush.msra.mxu0 0.0
      %3646 = vmatpush.msra.mxu0 0.0
      %3647 = vmatpush.msra.mxu0 0.0
      %3648 = vmatpush.msra.mxu0 0.0
      %3649 = vmatpush.msra.mxu0 0.0
      %3650 = vmatpush.msra.mxu0 0.0
      %3651 = vmatpush.msra.mxu0 0.0
      %3652 = vmatpush.msra.mxu0 0.0
      %3653 = vmatpush.msra.mxu0 0.0
      %3654 = vmatpush.msra.mxu0 0.0
      %3655 = vmatpush.msra.mxu0 0.0
      %3656 = vmatpush.msra.mxu0 %v3627
      %3657 = vmatpush.msra.mxu0 %v3625
      %3658 = vmatpush.msra.mxu0 %v3620
      %3659 = vmatpush.msra.mxu0 %v3618
      %3660 = vmatmul.f32.gmra.mxu0 %v3642
      %v3661 = vpop.f32.mrf.mxu0
      %v3662 = vadd.f32 %v3639, %v3661
      %3663 = vdwg.mxu0
      %vm3664 = vcmask 59392
      %3665 = vst.msk [vmem:[%s370] sm:$0x7] %vm3664, %v3662
      %p3666 = scmp.lt.s32.totalorder %s22, 1
      %s3667 = scalar_select %p3666, %s22, 1
      %s3668 = smul.addr %s3667, 4
      %s3669 = smul.addr %s3668, 8
      %s3670 = scalar_lea.vmem %s9, %s3669
      %p3671 = scmp.lt.s32.totalorder %s22, 1
      %s3672 = scalar_select %p3671, %s22, 1
      %s3673 = smul.addr %s3672, 4
      %s3674 = scalar_lea.vmem %s10, %s3673
      // Predicated region
      $region57: #{dsan_forward.2} parent=55 // pred_check
        %p3675 = pneg %p234
      $region58: #{dsan_forward.2} parent=55 // pred_check_branch
        %3677 = sbr.rel (%p3675) target = $region60
      $region59: #{dsan_forward.2} parent=55 // pred_region
        _
      $region60: #{dsan_forward.2} parent=55 // pred_fallthru
        _
      // Predicated region
      $region61: #{dsan_forward.2} parent=55 // pred_check
        %p3678 = pneg %p260
      $region62: #{dsan_forward.2} parent=55 // pred_check_branch
        %3680 = sbr.rel (%p3678) target = $region64
      $region63: #{dsan_forward.2} parent=55 // pred_region
        _
      $region64: #{dsan_forward.2} parent=55 // pred_fallthru
        _
    $region56: #{dsan_forward.2} parent=5 // pred_fallthru
      _
    %p3681 = scmp.le.s32.totalorder 2, %s17
    // Predicated region
    $region65: #{dsan_forward.2} parent=5 // pred_check
      %p3682 = pneg %p3681
    $region66: #{dsan_forward.2} parent=5 // pred_check_branch
      %3684 = sbr.rel (%p3682) target = $region68
    $region67: #{dsan_forward.2} parent=5 // pred_region
      %s3685 = ssub.s32 %s17, 2
      // Predicated region
      $region69: #{dsan_forward.2} parent=67 // pred_check
        %p3686 = pneg %p240
      $region70: #{dsan_forward.2} parent=67 // pred_check_branch
        %3688 = sbr.rel (%p3686) target = $region72
      $region71: #{dsan_forward.2} parent=67 // pred_region
        %p3689 = scmp.lt.s32.totalorder %s23, 1
        %s3690 = scalar_select %p3689, %s23, 1
        %s3691 = smul.addr %s3690, 4
        %s3692 = smul.addr %s3691, 8
        %s3693 = scalar_lea.vmem %s9, %s3692
      $region72: #{dsan_forward.2} parent=67 // pred_fallthru
        _
      // Predicated region
      $region73: #{dsan_forward.2} parent=67 // pred_check
        %p3694 = pneg %p266
      $region74: #{dsan_forward.2} parent=67 // pred_check_branch
        %3696 = sbr.rel (%p3694) target = $region76
      $region75: #{dsan_forward.2} parent=67 // pred_region
        %p3697 = scmp.lt.s32.totalorder %s23, 1
        %s3698 = scalar_select %p3697, %s23, 1
        %s3699 = smul.addr %s3698, 4
        %s3700 = scalar_lea.vmem %s10, %s3699
      $region76: #{dsan_forward.2} parent=67 // pred_fallthru
        _
    $region68: #{dsan_forward.2} parent=5 // pred_fallthru
      _
  $region6: #{dsan_forward.2} parent=0 // loop_footer
    %s21 = sadd.s32 1, %s17
  $region7: #{dsan_forward.2} parent=0 // loop_footer_branch
    %16 = sbr.rel target = $region3
  $region8: #{dsan_forward.2} parent=0 // loop_exit
    _

</llo_original>
